<compile_context>
chip_gen: v7x
topology: tpu7x:2x2x1
jax: 0.10.0
libtpu: 0.0.40
codegen_flags: <defaults>
</compile_context>

<pallas_src>
import functools

import jax
import jax.numpy as jnp
from jax.experimental import pallas as pl
from jax.experimental.pallas import tpu as pltpu


NUM_FEATURES = 1000   # base_model output dim expected by NIMA.fc
NUM_CLASSES = 10


def _round_up(x, m):
    return (x + m - 1) // m * m


def _pick_tk(Fp, NFp, budget_bytes=6 << 20):
    """Largest multiple-of-128 divisor of Fp whose (tk, NFp) bf16 slab fits budget."""
    max_tk = max(128, (budget_bytes // (2 * NFp)) // 128 * 128)
    tk = min(Fp, max_tk)
    while Fp % tk:          # Fp is a multiple of 128, so tk=128 always terminates
        tk -= 128
    return tk


def nima_kernel(x_ref, wb_ref, bb_ref, wfc_ref, bfc_ref, o_ref, feat_acc):
    # Grid: (batch tiles [parallel], feature/K tiles [arbitrary]).
    # x_ref:    (tm, tk)   flattened image tile (bf16, or f32 -> cast in-kernel)
    # wb_ref:   (tk, NFp)  bf16 synthetic base_model weight slab (1000 padded -> 1024)
    # bb_ref:   (1, NFp)   f32 base_model bias (zero-padded)
    # wfc_ref:  (NFp, 10)  f32 NIMA.fc weight (zero-padded rows, transposed vs torch)
    # bfc_ref:  (1, 10)    f32 NIMA.fc bias
    # o_ref:    (tm, 10)   softmax(fc(base_model(x)), dim=1)
    # feat_acc: (tm, NFp)  f32 accumulator across the K axis
    k = pl.program_id(1)

    @pl.when(k == 0)
    def _():
        feat_acc[...] = jnp.zeros_like(feat_acc)

    xv = x_ref[...].astype(jnp.bfloat16)          # no-op if already bf16
    feat_acc[...] += jnp.dot(xv, wb_ref[...],
                             preferred_element_type=jnp.float32)

    @pl.when(k == pl.num_programs(1) - 1)
    def _():
        feat = feat_acc[...] + bb_ref[...]
        logits = jnp.dot(feat, wfc_ref[...],
                         preferred_element_type=jnp.float32) + bfc_ref[...]
        # numerically-stable softmax over the class axis
        m = jnp.max(logits, axis=1, keepdims=True)
        e = jnp.exp(logits - m)
        denom = jnp.sum(e, axis=1, keepdims=True)
        # exact reciprocal: keeps f32-level accuracy, moves the divide off the VPU.
        o_ref[...] = (e * pl.reciprocal(denom, approx=False)).astype(o_ref.dtype)


def prepare_nima_params(w_base, b_base, w_fc, b_fc, *, weight_dtype=jnp.bfloat16):
    """One-time parameter prep: lane-pad 1000 -> 1024, cast the big weight to bf16.

    Padding is numerically exact (padded features multiply zero rows of w_fc).
    """
    F, NF = w_base.shape
    Fp = _round_up(F, 128)
    NFp = _round_up(NF, 128)
    w_base_p = jnp.zeros((Fp, NFp), weight_dtype).at[:F, :NF].set(
        w_base.astype(weight_dtype))
    b_base_p = jnp.zeros((1, NFp), jnp.float32).at[:, :NF].set(
        b_base.astype(jnp.float32))
    w_fc_p = jnp.zeros((NFp, NUM_CLASSES), jnp.float32).at[:NF, :].set(
        w_fc.astype(jnp.float32))
    b_fc_p = b_fc.astype(jnp.float32).reshape(1, NUM_CLASSES)
    return w_base_p, b_base_p, w_fc_p, b_fc_p


@functools.partial(jax.jit, static_argnames=("block_b",))
def nima_forward(x_nchw, w_base_p, b_base_p, w_fc_p, b_fc_p, *, block_b=256):
    # block_b: batch tile rows. 256 feeds v6e/v7x's 256-wide MXU; capped at the
    # (sublane-padded) batch for small inputs.
    B = x_nchw.shape[0]
    F = x_nchw.shape[1] * x_nchw.shape[2] * x_nchw.shape[3]
    Fp, NFp = w_base_p.shape

    tm = min(block_b, _round_up(B, 8))
    Bp = _round_up(B, tm)
    tk = _pick_tk(Fp, NFp)

    x2d = x_nchw.reshape(B, F)
    if (Bp != B) or (Fp != F):
        # pad + cast in one pass so every tile is (8,128)-aligned / lane dense.
        x_in = jnp.zeros((Bp, Fp), jnp.bfloat16).at[:B, :F].set(
            x2d.astype(jnp.bfloat16))
    else:
        # already aligned: skip the extra XLA pass, stream f32 and cast in-kernel.
        x_in = x2d

    out = pl.pallas_call(
        nima_kernel,
        out_shape=jax.ShapeDtypeStruct((Bp, NUM_CLASSES), jnp.float32),
        grid=(Bp // tm, Fp // tk),
        in_specs=[
            pl.BlockSpec((tm, tk), lambda i, k: (i, k)),          # x tiles streamed
            pl.BlockSpec((tk, NFp), lambda i, k: (k, 0)),          # weight slab (resident when K==1)
            pl.BlockSpec((1, NFp), lambda i, k: (0, 0)),
            pl.BlockSpec((NFp, NUM_CLASSES), lambda i, k: (0, 0)),
            pl.BlockSpec((1, NUM_CLASSES), lambda i, k: (0, 0)),
        ],
        out_specs=pl.BlockSpec((tm, NUM_CLASSES), lambda i, k: (i, 0)),
        scratch_shapes=[pltpu.VMEM((tm, NFp), jnp.float32)],
        compiler_params=pltpu.CompilerParams(
            # batch tiles are independent -> shard across v7x's 2 TCs
            # (no-op on v5e/v6e); K axis carries the accumulator.
            dimension_semantics=("parallel", "arbitrary"),
            # working set ~8 MiB; leave headroom, don't claim all of v7x's 64 MiB
            vmem_limit_bytes=32 << 20,
        ),
    )(x_in, w_base_p, b_base_p, w_fc_p, b_fc_p)
    return out[:B]


if __name__ == "__main__":
    # Small shapes consistent with the module's forward
    B, C, H, W = 2, 4, 16, 16
    F = C * H * W            # 1024

    key = jax.random.PRNGKey(0)
    k_x, k_wb, k_bb, k_wf, k_bf = jax.random.split(key, 5)

    x = jax.random.normal(k_x, (B, C, H, W), dtype=jnp.float32)

    # Deterministic synthetic parameters (no checkpoint loading):
    # base_model modeled as Linear(F -> 1000), plus NIMA.fc (1000 -> 10).
    w_base = 0.02 * jax.random.normal(k_wb, (F, NUM_FEATURES), dtype=jnp.float32)
    b_base = 0.01 * jax.random.normal(k_bb, (1, NUM_FEATURES), dtype=jnp.float32)
    w_fc = 0.05 * jax.random.normal(k_wf, (NUM_FEATURES, NUM_CLASSES), dtype=jnp.float32)
    b_fc = 0.01 * jax.random.normal(k_bf, (1, NUM_CLASSES), dtype=jnp.float32)

    params = prepare_nima_params(w_base, b_base, w_fc, b_fc)
    out = nima_forward(x, *params)
    out = jax.block_until_ready(out)

    # Reference in plain JAX using the same mixed precision as the kernel
    # (bf16 inputs to the base matmul, f32 accumulation, f32 fc + softmax).
    x2d_bf16 = x.reshape(B, F).astype(jnp.bfloat16)
    feat_ref = jnp.dot(x2d_bf16, w_base.astype(jnp.bfloat16),
                       preferred_element_type=jnp.float32) + b_base
    logits_ref = jnp.dot(feat_ref, w_fc,
                         preferred_element_type=jnp.float32) + b_fc
    ref = jax.nn.softmax(logits_ref, axis=1)

    assert out.shape == (B, NUM_CLASSES)
    assert jnp.allclose(out, ref, atol=5e-5, rtol=1e-4), \
        float(jnp.max(jnp.abs(out - ref)))
    assert jnp.allclose(jnp.sum(out, axis=1), jnp.ones((B,)), atol=1e-5)

    print("KERNEL_OK")
</pallas_src>

<mosaic_0001>
module attributes {stable_mosaic.version = 11 : i64} {
  func.func @nima_kernel(%arg0: i32, %arg1: i32, %arg2: memref<8x1024xbf16, #tpu.memory_space<vmem>>, %arg3: memref<1024x1024xbf16, #tpu.memory_space<vmem>>, %arg4: memref<1x1024xf32, #tpu.memory_space<vmem>>, %arg5: memref<1024x10xf32, #tpu.memory_space<vmem>>, %arg6: memref<1x10xf32, #tpu.memory_space<vmem>>, %arg7: memref<8x10xf32, #tpu.memory_space<vmem>>, %arg8: memref<8x1024xf32, #tpu.memory_space<vmem>>) attributes {dimension_semantics = [#tpu.dimension_semantics<parallel>, #tpu.dimension_semantics<arbitrary>], iteration_bounds = array<i64: 1, 1>, scalar_prefetch = 0 : i64, scratch_operands = 1 : i64, tpu.core_type = #tpu.core_type<tc>, window_params = [{transform_indices = @transform_0, window_bounds = array<i64: 8, 1024>}, {transform_indices = @transform_1, window_bounds = array<i64: 1024, 1024>}, {pipeline_mode = #tpu.pipeline_mode<synchronous>, transform_indices = @transform_2, window_bounds = array<i64: 1, 1024>}, {pipeline_mode = #tpu.pipeline_mode<synchronous>, transform_indices = @transform_3, window_bounds = array<i64: 1024, 10>}, {pipeline_mode = #tpu.pipeline_mode<synchronous>, transform_indices = @transform_4, window_bounds = array<i64: 1, 10>}, {transform_indices = @transform_5, window_bounds = array<i64: 8, 10>}]} {
    %c0_i32 = arith.constant 0 : i32
    %0 = arith.cmpi eq, %arg1, %c0_i32 : i32
    %1 = arith.extui %0 : i1 to i32
    %c0_i32_0 = arith.constant 0 : i32
    %2 = arith.cmpi ne, %1, %c0_i32_0 : i32
    scf.if %2 {
      %cst_10 = arith.constant 0.000000e+00 : f32
      %12 = vector.broadcast %cst_10 : f32 to vector<8x1024xf32>
      %c0_11 = arith.constant 0 : index
      %c0_12 = arith.constant 0 : index
      %13 = vector.load %arg8[%c0_11, %c0_12] : memref<8x1024xf32, #tpu.memory_space<vmem>>, vector<8x1024xf32>
      tpu.vector_store %arg8[%c0_11, %c0_12], %12 {strides = array<i32>} : memref<8x1024xf32, #tpu.memory_space<vmem>>, vector<8x1024xf32>,
    } else {
    }
    %c0 = arith.constant 0 : index
    %c0_1 = arith.constant 0 : index
    %3 = vector.load %arg2[%c0, %c0_1] : memref<8x1024xbf16, #tpu.memory_space<vmem>>, vector<8x1024xbf16>
    %c0_2 = arith.constant 0 : index
    %c0_3 = arith.constant 0 : index
    %4 = vector.load %arg8[%c0_2, %c0_3] : memref<8x1024xf32, #tpu.memory_space<vmem>>, vector<8x1024xf32>
    %c0_4 = arith.constant 0 : index
    %c0_5 = arith.constant 0 : index
    %5 = vector.load %arg3[%c0_4, %c0_5] : memref<1024x1024xbf16, #tpu.memory_space<vmem>>, vector<1024x1024xbf16>
    %cst = arith.constant dense<0.000000e+00> : vector<8x1024xf32>
    %6 = tpu.matmul %3, %5, %cst {dimension_numbers = #tpu.dot_dimension_numbers<[1], [0], [0], [1], [0, 0, 1, 1], [], []>} : vector<8x1024xbf16>, vector<1024x1024xbf16>, vector<8x1024xf32> -> vector<8x1024xf32>
    %7 = arith.addf %4, %6 : vector<8x1024xf32>
    %c0_6 = arith.constant 0 : index
    %c0_7 = arith.constant 0 : index
    %8 = vector.load %arg8[%c0_6, %c0_7] : memref<8x1024xf32, #tpu.memory_space<vmem>>, vector<8x1024xf32>
    tpu.vector_store %arg8[%c0_6, %c0_7], %7 {strides = array<i32>} : memref<8x1024xf32, #tpu.memory_space<vmem>>, vector<8x1024xf32>,
    %c0_i32_8 = arith.constant 0 : i32
    %9 = arith.cmpi eq, %arg1, %c0_i32_8 : i32
    %10 = arith.extui %9 : i1 to i32
    %c0_i32_9 = arith.constant 0 : i32
    %11 = arith.cmpi ne, %10, %c0_i32_9 : i32
    scf.if %11 {
      %c0_10 = arith.constant 0 : index
      %c0_11 = arith.constant 0 : index
      %12 = vector.load %arg8[%c0_10, %c0_11] : memref<8x1024xf32, #tpu.memory_space<vmem>>, vector<8x1024xf32>
      %c0_12 = arith.constant 0 : index
      %c0_13 = arith.constant 0 : index
      %13 = vector.load %arg4[%c0_12, %c0_13] : memref<1x1024xf32, #tpu.memory_space<vmem>>, vector<1x1024xf32>
      %14 = vector.broadcast %13 : vector<1x1024xf32> to vector<8x1024xf32>
      %15 = arith.addf %12, %14 : vector<8x1024xf32>
      %c0_14 = arith.constant 0 : index
      %c0_15 = arith.constant 0 : index
      %16 = vector.load %arg5[%c0_14, %c0_15] : memref<1024x10xf32, #tpu.memory_space<vmem>>, vector<1024x10xf32>
      %cst_16 = arith.constant dense<0.000000e+00> : vector<8x10xf32>
      %17 = tpu.matmul %15, %16, %cst_16 {dimension_numbers = #tpu.dot_dimension_numbers<[1], [0], [0], [1], [0, 0, 1, 1], [], []>} : vector<8x1024xf32>, vector<1024x10xf32>, vector<8x10xf32> -> vector<8x10xf32>
      %c0_17 = arith.constant 0 : index
      %c0_18 = arith.constant 0 : index
      %18 = vector.load %arg6[%c0_17, %c0_18] : memref<1x10xf32, #tpu.memory_space<vmem>>, vector<1x10xf32>
      %19 = vector.broadcast %18 : vector<1x10xf32> to vector<8x10xf32>
      %20 = arith.addf %17, %19 : vector<8x10xf32>
      %cst_19 = arith.constant dense<0xFF800000> : vector<8xf32>
      %21 = vector.multi_reduction <maximumf>, %20, %cst_19 [1] : vector<8x10xf32> to vector<8xf32>
      %22 = vector.shape_cast %21 : vector<8xf32> to vector<8x1xf32>
      %23 = vector.broadcast %22 : vector<8x1xf32> to vector<8x10xf32>
      %24 = arith.subf %20, %23 : vector<8x10xf32>
      %25 = math.exp %24 : vector<8x10xf32>
      %cst_20 = arith.constant dense<0.000000e+00> : vector<8xf32>
      %26 = vector.multi_reduction <add>, %25, %cst_20 [1] : vector<8x10xf32> to vector<8xf32>
      %27 = vector.shape_cast %26 : vector<8xf32> to vector<8x1xf32>
      %28 = tpu.reciprocal %27 : vector<8x1xf32> -> vector<8x1xf32>
      %29 = vector.broadcast %28 : vector<8x1xf32> to vector<8x10xf32>
      %30 = arith.mulf %25, %29 : vector<8x10xf32>
      %c0_21 = arith.constant 0 : index
      %c0_22 = arith.constant 0 : index
      %31 = vector.load %arg7[%c0_21, %c0_22] : memref<8x10xf32, #tpu.memory_space<vmem>>, vector<8x10xf32>
      tpu.vector_store %arg7[%c0_21, %c0_22], %30 {strides = array<i32>} : memref<8x10xf32, #tpu.memory_space<vmem>>, vector<8x10xf32>,
    } else {
    }
    return
  }
  func.func @transform_0(%arg0: i32, %arg1: i32) -> (i32, i32) {
    %c0_i32 = arith.constant 0 : i32
    return %arg0, %arg1 : i32, i32
  }
  func.func @transform_1(%arg0: i32, %arg1: i32) -> (i32, i32) {
    %c0_i32 = arith.constant 0 : i32
    %c0_i32_0 = arith.constant 0 : i32
    return %arg1, %c0_i32 : i32, i32
  }
  func.func @transform_2(%arg0: i32, %arg1: i32) -> (i32, i32) {
    %c0_i32 = arith.constant 0 : i32
    %c0_i32_0 = arith.constant 0 : i32
    %c0_i32_1 = arith.constant 0 : i32
    return %c0_i32, %c0_i32_0 : i32, i32
  }
  func.func @transform_3(%arg0: i32, %arg1: i32) -> (i32, i32) {
    %c0_i32 = arith.constant 0 : i32
    %c0_i32_0 = arith.constant 0 : i32
    %c0_i32_1 = arith.constant 0 : i32
    return %c0_i32, %c0_i32_0 : i32, i32
  }
  func.func @transform_4(%arg0: i32, %arg1: i32) -> (i32, i32) {
    %c0_i32 = arith.constant 0 : i32
    %c0_i32_0 = arith.constant 0 : i32
    %c0_i32_1 = arith.constant 0 : i32
    return %c0_i32, %c0_i32_0 : i32, i32
  }
  func.func @transform_5(%arg0: i32, %arg1: i32) -> (i32, i32) {
    %c0_i32 = arith.constant 0 : i32
    %c0_i32_0 = arith.constant 0 : i32
    return %arg0, %c0_i32 : i32, i32
  }
}

</mosaic_0001>

<llo_original>
// kernel: nima_forward.1
$region0: #{nima_forward.1}
  #allocation0 [shape = 'u32[]', space=smem, size = 0x4, offset = 0x4, fixed_abs, tag = 'smem constant byte address 0x4 - core index']
  #allocation1 [shape = 'u32[144,128]{1,0:T(1,128)}', space=vmem, size = 0x12000, scoped, tag = 'internal scratch']
  #allocation2 [shape = 'f32[8,1024]{1,0:T(8,128)}', space=vmem, size = 0x8000, scoped, tag = 'scratch operand']
  %s0 = inlined_call_operand.vmem [shape: bf16[8,1024], index: 0, kind: input, shape index: {}]
  %s1 = inlined_call_operand.hbm [shape: bf16[1024,1024], index: 1, kind: input, shape index: {}]
  %s2 = inlined_call_operand.hbm [shape: f32[1,1024], index: 2, kind: input, shape index: {}]
  %s3 = inlined_call_operand.vmem [shape: f32[1024,10], index: 3, kind: input, shape index: {}]
  %s4 = inlined_call_operand.hbm [shape: f32[1,10], index: 4, kind: input, shape index: {}]
  %s5 = inlined_call_operand.vmem [shape: f32[8,10], index: 5, kind: output, shape index: {}]
  %s6 = sld [smem:[#allocation0]]
  $region50: #{nima_forward.1} parent=0
    _
  %s8 = ssub.s32 1, %s6
  %s9 = scalar_select 0, %s8, %s6
  $region1: #{nima_forward.1} parent=0
    #allocation3 [shape = 'u8[2097152]{0}', space=vmem, size = 0x200000, scoped, tag = 'input window, operand 1, single buffered']
    #allocation4 [shape = 's32[1]{0}', space=sflag, size = 0x4, scoped, tag = 'scoped memory for nima_forward.1']
    #allocation5 [shape = 'u8[4096]{0}', space=vmem, size = 0x1000, scoped, tag = 'input window, operand 2, single buffered']
    #allocation6 [shape = 's32[1]{0}', space=sflag, size = 0x4, scoped, tag = 'scoped memory for nima_forward.1']
    #allocation7 [shape = 'u8[512]{0}', space=vmem, size = 0x400, scoped, tag = 'input window, operand 4, single buffered']
    %10 = vsyncpa [#allocation4], 0
    %11 = vsyncpa [#allocation6], 0
    // Predicated region
    $region2: #{nima_forward.1} parent=1 // pred_check
      _
    $region3: #{nima_forward.1} parent=1 // pred_check_branch
      %13 = sbr.rel (0) target = $region5
    $region4: #{nima_forward.1} parent=1 // pred_region
      _
    $region5: #{nima_forward.1} parent=1 // pred_fallthru
      _
    // Predicated region
    $region6: #{nima_forward.1} parent=1 // pred_check
      _
    $region7: #{nima_forward.1} parent=1 // pred_check_branch
      %15 = sbr.rel (0) target = $region9
    $region8: #{nima_forward.1} parent=1 // pred_region
      %s17 = ssub.s32 65536, 65536
      %18 = vsyncadd [#allocation4], %s17
      %s19 = sshll.u32 [#allocation3], 4
      %s20 = int_to_ptr.vmem [resolvable:$true] %s19
      %25 = dma.hbm_to_vmem [thread:$0]  %s1, 65536, %s20, [#allocation4], 512, 512, 32
    $region9: #{nima_forward.1} parent=1 // pred_fallthru
      _
    // Predicated region
    $region10: #{nima_forward.1} parent=1 // pred_check
      _
    $region11: #{nima_forward.1} parent=1 // pred_check_branch
      %27 = sbr.rel (0) target = $region13
    $region12: #{nima_forward.1} parent=1 // pred_region
      %s29 = ssub.s32 128, 128
      %30 = vsyncadd [#allocation6], %s29
      %s32 = sshll.u32 [#allocation5], 4
      %s33 = int_to_ptr.vmem [resolvable:$true] %s32
      %35 = dma.hbm_to_vmem [thread:$0]  %s2, 128, %s33, [#allocation6]
    $region13: #{nima_forward.1} parent=1 // pred_fallthru
      _
    // Predicated region
    $region14: #{nima_forward.1} parent=1 // pred_check
      _
    $region15: #{nima_forward.1} parent=1 // pred_check_branch
      %37 = sbr.rel (0) target = $region17
    $region16: #{nima_forward.1} parent=1 // pred_region
      _
    $region17: #{nima_forward.1} parent=1 // pred_fallthru
      _
    // Predicated region
    $region18: #{nima_forward.1} parent=1 // pred_check
      _
    $region19: #{nima_forward.1} parent=1 // pred_check_branch
      %39 = sbr.rel (0) target = $region21
    $region20: #{nima_forward.1} parent=1 // pred_region
      %s41 = ssub.s32 16, 16
      %42 = vsyncadd [#allocation6], %s41
      %s44 = sshll.u32 [#allocation7], 4
      %s45 = int_to_ptr.vmem [resolvable:$true] %s44
      %47 = dma.hbm_to_vmem [thread:$0]  %s4, 16, %s45, [#allocation6]
    $region21: #{nima_forward.1} parent=1 // pred_fallthru
      _
    // Predicated region
    $region22: #{nima_forward.1} parent=1 // pred_check
      _
    $region23: #{nima_forward.1} parent=1 // pred_check_branch
      %49 = sbr.rel (0) target = $region25
    $region24: #{nima_forward.1} parent=1 // pred_region
      %50 = dma.done [#allocation4], 65536
    $region25: #{nima_forward.1} parent=1 // pred_fallthru
      _
    // Predicated region
    $region26: #{nima_forward.1} parent=1 // pred_check
      _
    $region27: #{nima_forward.1} parent=1 // pred_check_branch
      %52 = sbr.rel (0) target = $region29
    $region28: #{nima_forward.1} parent=1 // pred_region
      %53 = dma.done [#allocation6], 128
    $region29: #{nima_forward.1} parent=1 // pred_fallthru
      _
    // Predicated region
    $region30: #{nima_forward.1} parent=1 // pred_check
      _
    $region31: #{nima_forward.1} parent=1 // pred_check_branch
      %55 = sbr.rel (0) target = $region33
    $region32: #{nima_forward.1} parent=1 // pred_region
      %56 = dma.done [#allocation6], 16
    $region33: #{nima_forward.1} parent=1 // pred_fallthru
      _
    %p57 = scmp.eq.s32.totalorder 0, 0
    // Predicated region
    $region34: #{nima_forward.1} parent=1 // pred_check
      %p58 = pneg %p57
    $region35: #{nima_forward.1} parent=1 // pred_check_branch
      %60 = sbr.rel (%p58) target = $region37
    $region36: #{nima_forward.1} parent=1 // pred_region
      %61 = vst [vmem:[#allocation2] sm:$0xff] 0.0
      %62 = vst [vmem:[#allocation2 + $0x8] sm:$0xff] 0.0
      %63 = vst [vmem:[#allocation2 + $0x10] sm:$0xff] 0.0
      %64 = vst [vmem:[#allocation2 + $0x18] sm:$0xff] 0.0
      %65 = vst [vmem:[#allocation2 + $0x20] sm:$0xff] 0.0
      %66 = vst [vmem:[#allocation2 + $0x28] sm:$0xff] 0.0
      %67 = vst [vmem:[#allocation2 + $0x30] sm:$0xff] 0.0
      %68 = vst [vmem:[#allocation2 + $0x38] sm:$0xff] 0.0
    $region37: #{nima_forward.1} parent=1 // pred_fallthru
      _
    %v69 = vld [vmem:[%s0] sm:$0xff]
    %v70 = vld [vmem:[%s0 + $0x8] sm:$0xff]
    %v71 = vld [vmem:[%s0 + $0x10] sm:$0xff]
    %v72 = vld [vmem:[%s0 + $0x18] sm:$0xff]
    %v73 = vld [vmem:[#allocation2] sm:$0xff]
    %v74 = vld [vmem:[#allocation2 + $0x8] sm:$0xff]
    %v75 = vld [vmem:[#allocation2 + $0x10] sm:$0xff]
    %v76 = vld [vmem:[#allocation2 + $0x18] sm:$0xff]
    %v77 = vld [vmem:[#allocation2 + $0x20] sm:$0xff]
    %v78 = vld [vmem:[#allocation2 + $0x28] sm:$0xff]
    %v79 = vld [vmem:[#allocation2 + $0x30] sm:$0xff]
    %v80 = vld [vmem:[#allocation2 + $0x38] sm:$0xff]
    %v81 = vld [vmem:[#allocation3] sm:$0xff]
    %v82 = vld [vmem:[#allocation3 + $0x8] sm:$0xff]
    %v83 = vld [vmem:[#allocation3 + $0x10] sm:$0xff]
    %v84 = vld [vmem:[#allocation3 + $0x18] sm:$0xff]
    %v85 = vld [vmem:[#allocation3 + $0x20] sm:$0xff]
    %v86 = vld [vmem:[#allocation3 + $0x28] sm:$0xff]
    %v87 = vld [vmem:[#allocation3 + $0x30] sm:$0xff]
    %v88 = vld [vmem:[#allocation3 + $0x38] sm:$0xff]
    %v89 = vld [vmem:[#allocation3 + $0x40] sm:$0xff]
    %v90 = vld [vmem:[#allocation3 + $0x48] sm:$0xff]
    %v91 = vld [vmem:[#allocation3 + $0x50] sm:$0xff]
    %v92 = vld [vmem:[#allocation3 + $0x58] sm:$0xff]
    %v93 = vld [vmem:[#allocation3 + $0x60] sm:$0xff]
    %v94 = vld [vmem:[#allocation3 + $0x68] sm:$0xff]
    %v95 = vld [vmem:[#allocation3 + $0x70] sm:$0xff]
    %v96 = vld [vmem:[#allocation3 + $0x78] sm:$0xff]
    %v97 = vld [vmem:[#allocation3 + $0x80] sm:$0xff]
    %v98 = vld [vmem:[#allocation3 + $0x88] sm:$0xff]
    %v99 = vld [vmem:[#allocation3 + $0x90] sm:$0xff]
    %v100 = vld [vmem:[#allocation3 + $0x98] sm:$0xff]
    %v101 = vld [vmem:[#allocation3 + $0xa0] sm:$0xff]
    %v102 = vld [vmem:[#allocation3 + $0xa8] sm:$0xff]
    %v103 = vld [vmem:[#allocation3 + $0xb0] sm:$0xff]
    %v104 = vld [vmem:[#allocation3 + $0xb8] sm:$0xff]
    %v105 = vld [vmem:[#allocation3 + $0xc0] sm:$0xff]
    %v106 = vld [vmem:[#allocation3 + $0xc8] sm:$0xff]
    %v107 = vld [vmem:[#allocation3 + $0xd0] sm:$0xff]
    %v108 = vld [vmem:[#allocation3 + $0xd8] sm:$0xff]
    %v109 = vld [vmem:[#allocation3 + $0xe0] sm:$0xff]
    %v110 = vld [vmem:[#allocation3 + $0xe8] sm:$0xff]
    %v111 = vld [vmem:[#allocation3 + $0xf0] sm:$0xff]
    %v112 = vld [vmem:[#allocation3 + $0xf8] sm:$0xff]
    %v113 = vld [vmem:[#allocation3 + $0x100] sm:$0xff]
    %v114 = vld [vmem:[#allocation3 + $0x108] sm:$0xff]
    %v115 = vld [vmem:[#allocation3 + $0x110] sm:$0xff]
    %v116 = vld [vmem:[#allocation3 + $0x118] sm:$0xff]
    %v117 = vld [vmem:[#allocation3 + $0x120] sm:$0xff]
    %v118 = vld [vmem:[#allocation3 + $0x128] sm:$0xff]
    %v119 = vld [vmem:[#allocation3 + $0x130] sm:$0xff]
    %v120 = vld [vmem:[#allocation3 + $0x138] sm:$0xff]
    %v121 = vld [vmem:[#allocation3 + $0x140] sm:$0xff]
    %v122 = vld [vmem:[#allocation3 + $0x148] sm:$0xff]
    %v123 = vld [vmem:[#allocation3 + $0x150] sm:$0xff]
    %v124 = vld [vmem:[#allocation3 + $0x158] sm:$0xff]
    %v125 = vld [vmem:[#allocation3 + $0x160] sm:$0xff]
    %v126 = vld [vmem:[#allocation3 + $0x168] sm:$0xff]
    %v127 = vld [vmem:[#allocation3 + $0x170] sm:$0xff]
    %v128 = vld [vmem:[#allocation3 + $0x178] sm:$0xff]
    %v129 = vld [vmem:[#allocation3 + $0x180] sm:$0xff]
    %v130 = vld [vmem:[#allocation3 + $0x188] sm:$0xff]
    %v131 = vld [vmem:[#allocation3 + $0x190] sm:$0xff]
    %v132 = vld [vmem:[#allocation3 + $0x198] sm:$0xff]
    %v133 = vld [vmem:[#allocation3 + $0x1a0] sm:$0xff]
    %v134 = vld [vmem:[#allocation3 + $0x1a8] sm:$0xff]
    %v135 = vld [vmem:[#allocation3 + $0x1b0] sm:$0xff]
    %v136 = vld [vmem:[#allocation3 + $0x1b8] sm:$0xff]
    %v137 = vld [vmem:[#allocation3 + $0x1c0] sm:$0xff]
    %v138 = vld [vmem:[#allocation3 + $0x1c8] sm:$0xff]
    %v139 = vld [vmem:[#allocation3 + $0x1d0] sm:$0xff]
    %v140 = vld [vmem:[#allocation3 + $0x1d8] sm:$0xff]
    %v141 = vld [vmem:[#allocation3 + $0x1e0] sm:$0xff]
    %v142 = vld [vmem:[#allocation3 + $0x1e8] sm:$0xff]
    %v143 = vld [vmem:[#allocation3 + $0x1f0] sm:$0xff]
    %v144 = vld [vmem:[#allocation3 + $0x1f8] sm:$0xff]
    %v145 = vld [vmem:[#allocation3 + $0x200] sm:$0xff]
    %v146 = vld [vmem:[#allocation3 + $0x208] sm:$0xff]
    %v147 = vld [vmem:[#allocation3 + $0x210] sm:$0xff]
    %v148 = vld [vmem:[#allocation3 + $0x218] sm:$0xff]
    %v149 = vld [vmem:[#allocation3 + $0x220] sm:$0xff]
    %v150 = vld [vmem:[#allocation3 + $0x228] sm:$0xff]
    %v151 = vld [vmem:[#allocation3 + $0x230] sm:$0xff]
    %v152 = vld [vmem:[#allocation3 + $0x238] sm:$0xff]
    %v153 = vld [vmem:[#allocation3 + $0x240] sm:$0xff]
    %v154 = vld [vmem:[#allocation3 + $0x248] sm:$0xff]
    %v155 = vld [vmem:[#allocation3 + $0x250] sm:$0xff]
    %v156 = vld [vmem:[#allocation3 + $0x258] sm:$0xff]
    %v157 = vld [vmem:[#allocation3 + $0x260] sm:$0xff]
    %v158 = vld [vmem:[#allocation3 + $0x268] sm:$0xff]
    %v159 = vld [vmem:[#allocation3 + $0x270] sm:$0xff]
    %v160 = vld [vmem:[#allocation3 + $0x278] sm:$0xff]
    %v161 = vld [vmem:[#allocation3 + $0x280] sm:$0xff]
    %v162 = vld [vmem:[#allocation3 + $0x288] sm:$0xff]
    %v163 = vld [vmem:[#allocation3 + $0x290] sm:$0xff]
    %v164 = vld [vmem:[#allocation3 + $0x298] sm:$0xff]
    %v165 = vld [vmem:[#allocation3 + $0x2a0] sm:$0xff]
    %v166 = vld [vmem:[#allocation3 + $0x2a8] sm:$0xff]
    %v167 = vld [vmem:[#allocation3 + $0x2b0] sm:$0xff]
    %v168 = vld [vmem:[#allocation3 + $0x2b8] sm:$0xff]
    %v169 = vld [vmem:[#allocation3 + $0x2c0] sm:$0xff]
    %v170 = vld [vmem:[#allocation3 + $0x2c8] sm:$0xff]
    %v171 = vld [vmem:[#allocation3 + $0x2d0] sm:$0xff]
    %v172 = vld [vmem:[#allocation3 + $0x2d8] sm:$0xff]
    %v173 = vld [vmem:[#allocation3 + $0x2e0] sm:$0xff]
    %v174 = vld [vmem:[#allocation3 + $0x2e8] sm:$0xff]
    %v175 = vld [vmem:[#allocation3 + $0x2f0] sm:$0xff]
    %v176 = vld [vmem:[#allocation3 + $0x2f8] sm:$0xff]
    %v177 = vld [vmem:[#allocation3 + $0x300] sm:$0xff]
    %v178 = vld [vmem:[#allocation3 + $0x308] sm:$0xff]
    %v179 = vld [vmem:[#allocation3 + $0x310] sm:$0xff]
    %v180 = vld [vmem:[#allocation3 + $0x318] sm:$0xff]
    %v181 = vld [vmem:[#allocation3 + $0x320] sm:$0xff]
    %v182 = vld [vmem:[#allocation3 + $0x328] sm:$0xff]
    %v183 = vld [vmem:[#allocation3 + $0x330] sm:$0xff]
    %v184 = vld [vmem:[#allocation3 + $0x338] sm:$0xff]
    %v185 = vld [vmem:[#allocation3 + $0x340] sm:$0xff]
    %v186 = vld [vmem:[#allocation3 + $0x348] sm:$0xff]
    %v187 = vld [vmem:[#allocation3 + $0x350] sm:$0xff]
    %v188 = vld [vmem:[#allocation3 + $0x358] sm:$0xff]
    %v189 = vld [vmem:[#allocation3 + $0x360] sm:$0xff]
    %v190 = vld [vmem:[#allocation3 + $0x368] sm:$0xff]
    %v191 = vld [vmem:[#allocation3 + $0x370] sm:$0xff]
    %v192 = vld [vmem:[#allocation3 + $0x378] sm:$0xff]
    %v193 = vld [vmem:[#allocation3 + $0x380] sm:$0xff]
    %v194 = vld [vmem:[#allocation3 + $0x388] sm:$0xff]
    %v195 = vld [vmem:[#allocation3 + $0x390] sm:$0xff]
    %v196 = vld [vmem:[#allocation3 + $0x398] sm:$0xff]
    %v197 = vld [vmem:[#allocation3 + $0x3a0] sm:$0xff]
    %v198 = vld [vmem:[#allocation3 + $0x3a8] sm:$0xff]
    %v199 = vld [vmem:[#allocation3 + $0x3b0] sm:$0xff]
    %v200 = vld [vmem:[#allocation3 + $0x3b8] sm:$0xff]
    %v201 = vld [vmem:[#allocation3 + $0x3c0] sm:$0xff]
    %v202 = vld [vmem:[#allocation3 + $0x3c8] sm:$0xff]
    %v203 = vld [vmem:[#allocation3 + $0x3d0] sm:$0xff]
    %v204 = vld [vmem:[#allocation3 + $0x3d8] sm:$0xff]
    %v205 = vld [vmem:[#allocation3 + $0x3e0] sm:$0xff]
    %v206 = vld [vmem:[#allocation3 + $0x3e8] sm:$0xff]
    %v207 = vld [vmem:[#allocation3 + $0x3f0] sm:$0xff]
    %v208 = vld [vmem:[#allocation3 + $0x3f8] sm:$0xff]
    %v209 = vld [vmem:[#allocation3 + $0x400] sm:$0xff]
    %v210 = vld [vmem:[#allocation3 + $0x408] sm:$0xff]
    %v211 = vld [vmem:[#allocation3 + $0x410] sm:$0xff]
    %v212 = vld [vmem:[#allocation3 + $0x418] sm:$0xff]
    %v213 = vld [vmem:[#allocation3 + $0x420] sm:$0xff]
    %v214 = vld [vmem:[#allocation3 + $0x428] sm:$0xff]
    %v215 = vld [vmem:[#allocation3 + $0x430] sm:$0xff]
    %v216 = vld [vmem:[#allocation3 + $0x438] sm:$0xff]
    %v217 = vld [vmem:[#allocation3 + $0x440] sm:$0xff]
    %v218 = vld [vmem:[#allocation3 + $0x448] sm:$0xff]
    %v219 = vld [vmem:[#allocation3 + $0x450] sm:$0xff]
    %v220 = vld [vmem:[#allocation3 + $0x458] sm:$0xff]
    %v221 = vld [vmem:[#allocation3 + $0x460] sm:$0xff]
    %v222 = vld [vmem:[#allocation3 + $0x468] sm:$0xff]
    %v223 = vld [vmem:[#allocation3 + $0x470] sm:$0xff]
    %v224 = vld [vmem:[#allocation3 + $0x478] sm:$0xff]
    %v225 = vld [vmem:[#allocation3 + $0x480] sm:$0xff]
    %v226 = vld [vmem:[#allocation3 + $0x488] sm:$0xff]
    %v227 = vld [vmem:[#allocation3 + $0x490] sm:$0xff]
    %v228 = vld [vmem:[#allocation3 + $0x498] sm:$0xff]
    %v229 = vld [vmem:[#allocation3 + $0x4a0] sm:$0xff]
    %v230 = vld [vmem:[#allocation3 + $0x4a8] sm:$0xff]
    %v231 = vld [vmem:[#allocation3 + $0x4b0] sm:$0xff]
    %v232 = vld [vmem:[#allocation3 + $0x4b8] sm:$0xff]
    %v233 = vld [vmem:[#allocation3 + $0x4c0] sm:$0xff]
    %v234 = vld [vmem:[#allocation3 + $0x4c8] sm:$0xff]
    %v235 = vld [vmem:[#allocation3 + $0x4d0] sm:$0xff]
    %v236 = vld [vmem:[#allocation3 + $0x4d8] sm:$0xff]
    %v237 = vld [vmem:[#allocation3 + $0x4e0] sm:$0xff]
    %v238 = vld [vmem:[#allocation3 + $0x4e8] sm:$0xff]
    %v239 = vld [vmem:[#allocation3 + $0x4f0] sm:$0xff]
    %v240 = vld [vmem:[#allocation3 + $0x4f8] sm:$0xff]
    %v241 = vld [vmem:[#allocation3 + $0x500] sm:$0xff]
    %v242 = vld [vmem:[#allocation3 + $0x508] sm:$0xff]
    %v243 = vld [vmem:[#allocation3 + $0x510] sm:$0xff]
    %v244 = vld [vmem:[#allocation3 + $0x518] sm:$0xff]
    %v245 = vld [vmem:[#allocation3 + $0x520] sm:$0xff]
    %v246 = vld [vmem:[#allocation3 + $0x528] sm:$0xff]
    %v247 = vld [vmem:[#allocation3 + $0x530] sm:$0xff]
    %v248 = vld [vmem:[#allocation3 + $0x538] sm:$0xff]
    %v249 = vld [vmem:[#allocation3 + $0x540] sm:$0xff]
    %v250 = vld [vmem:[#allocation3 + $0x548] sm:$0xff]
    %v251 = vld [vmem:[#allocation3 + $0x550] sm:$0xff]
    %v252 = vld [vmem:[#allocation3 + $0x558] sm:$0xff]
    %v253 = vld [vmem:[#allocation3 + $0x560] sm:$0xff]
    %v254 = vld [vmem:[#allocation3 + $0x568] sm:$0xff]
    %v255 = vld [vmem:[#allocation3 + $0x570] sm:$0xff]
    %v256 = vld [vmem:[#allocation3 + $0x578] sm:$0xff]
    %v257 = vld [vmem:[#allocation3 + $0x580] sm:$0xff]
    %v258 = vld [vmem:[#allocation3 + $0x588] sm:$0xff]
    %v259 = vld [vmem:[#allocation3 + $0x590] sm:$0xff]
    %v260 = vld [vmem:[#allocation3 + $0x598] sm:$0xff]
    %v261 = vld [vmem:[#allocation3 + $0x5a0] sm:$0xff]
    %v262 = vld [vmem:[#allocation3 + $0x5a8] sm:$0xff]
    %v263 = vld [vmem:[#allocation3 + $0x5b0] sm:$0xff]
    %v264 = vld [vmem:[#allocation3 + $0x5b8] sm:$0xff]
    %v265 = vld [vmem:[#allocation3 + $0x5c0] sm:$0xff]
    %v266 = vld [vmem:[#allocation3 + $0x5c8] sm:$0xff]
    %v267 = vld [vmem:[#allocation3 + $0x5d0] sm:$0xff]
    %v268 = vld [vmem:[#allocation3 + $0x5d8] sm:$0xff]
    %v269 = vld [vmem:[#allocation3 + $0x5e0] sm:$0xff]
    %v270 = vld [vmem:[#allocation3 + $0x5e8] sm:$0xff]
    %v271 = vld [vmem:[#allocation3 + $0x5f0] sm:$0xff]
    %v272 = vld [vmem:[#allocation3 + $0x5f8] sm:$0xff]
    %v273 = vld [vmem:[#allocation3 + $0x600] sm:$0xff]
    %v274 = vld [vmem:[#allocation3 + $0x608] sm:$0xff]
    %v275 = vld [vmem:[#allocation3 + $0x610] sm:$0xff]
    %v276 = vld [vmem:[#allocation3 + $0x618] sm:$0xff]
    %v277 = vld [vmem:[#allocation3 + $0x620] sm:$0xff]
    %v278 = vld [vmem:[#allocation3 + $0x628] sm:$0xff]
    %v279 = vld [vmem:[#allocation3 + $0x630] sm:$0xff]
    %v280 = vld [vmem:[#allocation3 + $0x638] sm:$0xff]
    %v281 = vld [vmem:[#allocation3 + $0x640] sm:$0xff]
    %v282 = vld [vmem:[#allocation3 + $0x648] sm:$0xff]
    %v283 = vld [vmem:[#allocation3 + $0x650] sm:$0xff]
    %v284 = vld [vmem:[#allocation3 + $0x658] sm:$0xff]
    %v285 = vld [vmem:[#allocation3 + $0x660] sm:$0xff]
    %v286 = vld [vmem:[#allocation3 + $0x668] sm:$0xff]
    %v287 = vld [vmem:[#allocation3 + $0x670] sm:$0xff]
    %v288 = vld [vmem:[#allocation3 + $0x678] sm:$0xff]
    %v289 = vld [vmem:[#allocation3 + $0x680] sm:$0xff]
    %v290 = vld [vmem:[#allocation3 + $0x688] sm:$0xff]
    %v291 = vld [vmem:[#allocation3 + $0x690] sm:$0xff]
    %v292 = vld [vmem:[#allocation3 + $0x698] sm:$0xff]
    %v293 = vld [vmem:[#allocation3 + $0x6a0] sm:$0xff]
    %v294 = vld [vmem:[#allocation3 + $0x6a8] sm:$0xff]
    %v295 = vld [vmem:[#allocation3 + $0x6b0] sm:$0xff]
    %v296 = vld [vmem:[#allocation3 + $0x6b8] sm:$0xff]
    %v297 = vld [vmem:[#allocation3 + $0x6c0] sm:$0xff]
    %v298 = vld [vmem:[#allocation3 + $0x6c8] sm:$0xff]
    %v299 = vld [vmem:[#allocation3 + $0x6d0] sm:$0xff]
    %v300 = vld [vmem:[#allocation3 + $0x6d8] sm:$0xff]
    %v301 = vld [vmem:[#allocation3 + $0x6e0] sm:$0xff]
    %v302 = vld [vmem:[#allocation3 + $0x6e8] sm:$0xff]
    %v303 = vld [vmem:[#allocation3 + $0x6f0] sm:$0xff]
    %v304 = vld [vmem:[#allocation3 + $0x6f8] sm:$0xff]
    %v305 = vld [vmem:[#allocation3 + $0x700] sm:$0xff]
    %v306 = vld [vmem:[#allocation3 + $0x708] sm:$0xff]
    %v307 = vld [vmem:[#allocation3 + $0x710] sm:$0xff]
    %v308 = vld [vmem:[#allocation3 + $0x718] sm:$0xff]
    %v309 = vld [vmem:[#allocation3 + $0x720] sm:$0xff]
    %v310 = vld [vmem:[#allocation3 + $0x728] sm:$0xff]
    %v311 = vld [vmem:[#allocation3 + $0x730] sm:$0xff]
    %v312 = vld [vmem:[#allocation3 + $0x738] sm:$0xff]
    %v313 = vld [vmem:[#allocation3 + $0x740] sm:$0xff]
    %v314 = vld [vmem:[#allocation3 + $0x748] sm:$0xff]
    %v315 = vld [vmem:[#allocation3 + $0x750] sm:$0xff]
    %v316 = vld [vmem:[#allocation3 + $0x758] sm:$0xff]
    %v317 = vld [vmem:[#allocation3 + $0x760] sm:$0xff]
    %v318 = vld [vmem:[#allocation3 + $0x768] sm:$0xff]
    %v319 = vld [vmem:[#allocation3 + $0x770] sm:$0xff]
    %v320 = vld [vmem:[#allocation3 + $0x778] sm:$0xff]
    %v321 = vld [vmem:[#allocation3 + $0x780] sm:$0xff]
    %v322 = vld [vmem:[#allocation3 + $0x788] sm:$0xff]
    %v323 = vld [vmem:[#allocation3 + $0x790] sm:$0xff]
    %v324 = vld [vmem:[#allocation3 + $0x798] sm:$0xff]
    %v325 = vld [vmem:[#allocation3 + $0x7a0] sm:$0xff]
    %v326 = vld [vmem:[#allocation3 + $0x7a8] sm:$0xff]
    %v327 = vld [vmem:[#allocation3 + $0x7b0] sm:$0xff]
    %v328 = vld [vmem:[#allocation3 + $0x7b8] sm:$0xff]
    %v329 = vld [vmem:[#allocation3 + $0x7c0] sm:$0xff]
    %v330 = vld [vmem:[#allocation3 + $0x7c8] sm:$0xff]
    %v331 = vld [vmem:[#allocation3 + $0x7d0] sm:$0xff]
    %v332 = vld [vmem:[#allocation3 + $0x7d8] sm:$0xff]
    %v333 = vld [vmem:[#allocation3 + $0x7e0] sm:$0xff]
    %v334 = vld [vmem:[#allocation3 + $0x7e8] sm:$0xff]
    %v335 = vld [vmem:[#allocation3 + $0x7f0] sm:$0xff]
    %v336 = vld [vmem:[#allocation3 + $0x7f8] sm:$0xff]
    %v337 = vld [vmem:[#allocation3 + $0x800] sm:$0xff]
    %v338 = vld [vmem:[#allocation3 + $0x808] sm:$0xff]
    %v339 = vld [vmem:[#allocation3 + $0x810] sm:$0xff]
    %v340 = vld [vmem:[#allocation3 + $0x818] sm:$0xff]
    %v341 = vld [vmem:[#allocation3 + $0x820] sm:$0xff]
    %v342 = vld [vmem:[#allocation3 + $0x828] sm:$0xff]
    %v343 = vld [vmem:[#allocation3 + $0x830] sm:$0xff]
    %v344 = vld [vmem:[#allocation3 + $0x838] sm:$0xff]
    %v345 = vld [vmem:[#allocation3 + $0x840] sm:$0xff]
    %v346 = vld [vmem:[#allocation3 + $0x848] sm:$0xff]
    %v347 = vld [vmem:[#allocation3 + $0x850] sm:$0xff]
    %v348 = vld [vmem:[#allocation3 + $0x858] sm:$0xff]
    %v349 = vld [vmem:[#allocation3 + $0x860] sm:$0xff]
    %v350 = vld [vmem:[#allocation3 + $0x868] sm:$0xff]
    %v351 = vld [vmem:[#allocation3 + $0x870] sm:$0xff]
    %v352 = vld [vmem:[#allocation3 + $0x878] sm:$0xff]
    %v353 = vld [vmem:[#allocation3 + $0x880] sm:$0xff]
    %v354 = vld [vmem:[#allocation3 + $0x888] sm:$0xff]
    %v355 = vld [vmem:[#allocation3 + $0x890] sm:$0xff]
    %v356 = vld [vmem:[#allocation3 + $0x898] sm:$0xff]
    %v357 = vld [vmem:[#allocation3 + $0x8a0] sm:$0xff]
    %v358 = vld [vmem:[#allocation3 + $0x8a8] sm:$0xff]
    %v359 = vld [vmem:[#allocation3 + $0x8b0] sm:$0xff]
    %v360 = vld [vmem:[#allocation3 + $0x8b8] sm:$0xff]
    %v361 = vld [vmem:[#allocation3 + $0x8c0] sm:$0xff]
    %v362 = vld [vmem:[#allocation3 + $0x8c8] sm:$0xff]
    %v363 = vld [vmem:[#allocation3 + $0x8d0] sm:$0xff]
    %v364 = vld [vmem:[#allocation3 + $0x8d8] sm:$0xff]
    %v365 = vld [vmem:[#allocation3 + $0x8e0] sm:$0xff]
    %v366 = vld [vmem:[#allocation3 + $0x8e8] sm:$0xff]
    %v367 = vld [vmem:[#allocation3 + $0x8f0] sm:$0xff]
    %v368 = vld [vmem:[#allocation3 + $0x8f8] sm:$0xff]
    %v369 = vld [vmem:[#allocation3 + $0x900] sm:$0xff]
    %v370 = vld [vmem:[#allocation3 + $0x908] sm:$0xff]
    %v371 = vld [vmem:[#allocation3 + $0x910] sm:$0xff]
    %v372 = vld [vmem:[#allocation3 + $0x918] sm:$0xff]
    %v373 = vld [vmem:[#allocation3 + $0x920] sm:$0xff]
    %v374 = vld [vmem:[#allocation3 + $0x928] sm:$0xff]
    %v375 = vld [vmem:[#allocation3 + $0x930] sm:$0xff]
    %v376 = vld [vmem:[#allocation3 + $0x938] sm:$0xff]
    %v377 = vld [vmem:[#allocation3 + $0x940] sm:$0xff]
    %v378 = vld [vmem:[#allocation3 + $0x948] sm:$0xff]
    %v379 = vld [vmem:[#allocation3 + $0x950] sm:$0xff]
    %v380 = vld [vmem:[#allocation3 + $0x958] sm:$0xff]
    %v381 = vld [vmem:[#allocation3 + $0x960] sm:$0xff]
    %v382 = vld [vmem:[#allocation3 + $0x968] sm:$0xff]
    %v383 = vld [vmem:[#allocation3 + $0x970] sm:$0xff]
    %v384 = vld [vmem:[#allocation3 + $0x978] sm:$0xff]
    %v385 = vld [vmem:[#allocation3 + $0x980] sm:$0xff]
    %v386 = vld [vmem:[#allocation3 + $0x988] sm:$0xff]
    %v387 = vld [vmem:[#allocation3 + $0x990] sm:$0xff]
    %v388 = vld [vmem:[#allocation3 + $0x998] sm:$0xff]
    %v389 = vld [vmem:[#allocation3 + $0x9a0] sm:$0xff]
    %v390 = vld [vmem:[#allocation3 + $0x9a8] sm:$0xff]
    %v391 = vld [vmem:[#allocation3 + $0x9b0] sm:$0xff]
    %v392 = vld [vmem:[#allocation3 + $0x9b8] sm:$0xff]
    %v393 = vld [vmem:[#allocation3 + $0x9c0] sm:$0xff]
    %v394 = vld [vmem:[#allocation3 + $0x9c8] sm:$0xff]
    %v395 = vld [vmem:[#allocation3 + $0x9d0] sm:$0xff]
    %v396 = vld [vmem:[#allocation3 + $0x9d8] sm:$0xff]
    %v397 = vld [vmem:[#allocation3 + $0x9e0] sm:$0xff]
    %v398 = vld [vmem:[#allocation3 + $0x9e8] sm:$0xff]
    %v399 = vld [vmem:[#allocation3 + $0x9f0] sm:$0xff]
    %v400 = vld [vmem:[#allocation3 + $0x9f8] sm:$0xff]
    %v401 = vld [vmem:[#allocation3 + $0xa00] sm:$0xff]
    %v402 = vld [vmem:[#allocation3 + $0xa08] sm:$0xff]
    %v403 = vld [vmem:[#allocation3 + $0xa10] sm:$0xff]
    %v404 = vld [vmem:[#allocation3 + $0xa18] sm:$0xff]
    %v405 = vld [vmem:[#allocation3 + $0xa20] sm:$0xff]
    %v406 = vld [vmem:[#allocation3 + $0xa28] sm:$0xff]
    %v407 = vld [vmem:[#allocation3 + $0xa30] sm:$0xff]
    %v408 = vld [vmem:[#allocation3 + $0xa38] sm:$0xff]
    %v409 = vld [vmem:[#allocation3 + $0xa40] sm:$0xff]
    %v410 = vld [vmem:[#allocation3 + $0xa48] sm:$0xff]
    %v411 = vld [vmem:[#allocation3 + $0xa50] sm:$0xff]
    %v412 = vld [vmem:[#allocation3 + $0xa58] sm:$0xff]
    %v413 = vld [vmem:[#allocation3 + $0xa60] sm:$0xff]
    %v414 = vld [vmem:[#allocation3 + $0xa68] sm:$0xff]
    %v415 = vld [vmem:[#allocation3 + $0xa70] sm:$0xff]
    %v416 = vld [vmem:[#allocation3 + $0xa78] sm:$0xff]
    %v417 = vld [vmem:[#allocation3 + $0xa80] sm:$0xff]
    %v418 = vld [vmem:[#allocation3 + $0xa88] sm:$0xff]
    %v419 = vld [vmem:[#allocation3 + $0xa90] sm:$0xff]
    %v420 = vld [vmem:[#allocation3 + $0xa98] sm:$0xff]
    %v421 = vld [vmem:[#allocation3 + $0xaa0] sm:$0xff]
    %v422 = vld [vmem:[#allocation3 + $0xaa8] sm:$0xff]
    %v423 = vld [vmem:[#allocation3 + $0xab0] sm:$0xff]
    %v424 = vld [vmem:[#allocation3 + $0xab8] sm:$0xff]
    %v425 = vld [vmem:[#allocation3 + $0xac0] sm:$0xff]
    %v426 = vld [vmem:[#allocation3 + $0xac8] sm:$0xff]
    %v427 = vld [vmem:[#allocation3 + $0xad0] sm:$0xff]
    %v428 = vld [vmem:[#allocation3 + $0xad8] sm:$0xff]
    %v429 = vld [vmem:[#allocation3 + $0xae0] sm:$0xff]
    %v430 = vld [vmem:[#allocation3 + $0xae8] sm:$0xff]
    %v431 = vld [vmem:[#allocation3 + $0xaf0] sm:$0xff]
    %v432 = vld [vmem:[#allocation3 + $0xaf8] sm:$0xff]
    %v433 = vld [vmem:[#allocation3 + $0xb00] sm:$0xff]
    %v434 = vld [vmem:[#allocation3 + $0xb08] sm:$0xff]
    %v435 = vld [vmem:[#allocation3 + $0xb10] sm:$0xff]
    %v436 = vld [vmem:[#allocation3 + $0xb18] sm:$0xff]
    %v437 = vld [vmem:[#allocation3 + $0xb20] sm:$0xff]
    %v438 = vld [vmem:[#allocation3 + $0xb28] sm:$0xff]
    %v439 = vld [vmem:[#allocation3 + $0xb30] sm:$0xff]
    %v440 = vld [vmem:[#allocation3 + $0xb38] sm:$0xff]
    %v441 = vld [vmem:[#allocation3 + $0xb40] sm:$0xff]
    %v442 = vld [vmem:[#allocation3 + $0xb48] sm:$0xff]
    %v443 = vld [vmem:[#allocation3 + $0xb50] sm:$0xff]
    %v444 = vld [vmem:[#allocation3 + $0xb58] sm:$0xff]
    %v445 = vld [vmem:[#allocation3 + $0xb60] sm:$0xff]
    %v446 = vld [vmem:[#allocation3 + $0xb68] sm:$0xff]
    %v447 = vld [vmem:[#allocation3 + $0xb70] sm:$0xff]
    %v448 = vld [vmem:[#allocation3 + $0xb78] sm:$0xff]
    %v449 = vld [vmem:[#allocation3 + $0xb80] sm:$0xff]
    %v450 = vld [vmem:[#allocation3 + $0xb88] sm:$0xff]
    %v451 = vld [vmem:[#allocation3 + $0xb90] sm:$0xff]
    %v452 = vld [vmem:[#allocation3 + $0xb98] sm:$0xff]
    %v453 = vld [vmem:[#allocation3 + $0xba0] sm:$0xff]
    %v454 = vld [vmem:[#allocation3 + $0xba8] sm:$0xff]
    %v455 = vld [vmem:[#allocation3 + $0xbb0] sm:$0xff]
    %v456 = vld [vmem:[#allocation3 + $0xbb8] sm:$0xff]
    %v457 = vld [vmem:[#allocation3 + $0xbc0] sm:$0xff]
    %v458 = vld [vmem:[#allocation3 + $0xbc8] sm:$0xff]
    %v459 = vld [vmem:[#allocation3 + $0xbd0] sm:$0xff]
    %v460 = vld [vmem:[#allocation3 + $0xbd8] sm:$0xff]
    %v461 = vld [vmem:[#allocation3 + $0xbe0] sm:$0xff]
    %v462 = vld [vmem:[#allocation3 + $0xbe8] sm:$0xff]
    %v463 = vld [vmem:[#allocation3 + $0xbf0] sm:$0xff]
    %v464 = vld [vmem:[#allocation3 + $0xbf8] sm:$0xff]
    %v465 = vld [vmem:[#allocation3 + $0xc00] sm:$0xff]
    %v466 = vld [vmem:[#allocation3 + $0xc08] sm:$0xff]
    %v467 = vld [vmem:[#allocation3 + $0xc10] sm:$0xff]
    %v468 = vld [vmem:[#allocation3 + $0xc18] sm:$0xff]
    %v469 = vld [vmem:[#allocation3 + $0xc20] sm:$0xff]
    %v470 = vld [vmem:[#allocation3 + $0xc28] sm:$0xff]
    %v471 = vld [vmem:[#allocation3 + $0xc30] sm:$0xff]
    %v472 = vld [vmem:[#allocation3 + $0xc38] sm:$0xff]
    %v473 = vld [vmem:[#allocation3 + $0xc40] sm:$0xff]
    %v474 = vld [vmem:[#allocation3 + $0xc48] sm:$0xff]
    %v475 = vld [vmem:[#allocation3 + $0xc50] sm:$0xff]
    %v476 = vld [vmem:[#allocation3 + $0xc58] sm:$0xff]
    %v477 = vld [vmem:[#allocation3 + $0xc60] sm:$0xff]
    %v478 = vld [vmem:[#allocation3 + $0xc68] sm:$0xff]
    %v479 = vld [vmem:[#allocation3 + $0xc70] sm:$0xff]
    %v480 = vld [vmem:[#allocation3 + $0xc78] sm:$0xff]
    %v481 = vld [vmem:[#allocation3 + $0xc80] sm:$0xff]
    %v482 = vld [vmem:[#allocation3 + $0xc88] sm:$0xff]
    %v483 = vld [vmem:[#allocation3 + $0xc90] sm:$0xff]
    %v484 = vld [vmem:[#allocation3 + $0xc98] sm:$0xff]
    %v485 = vld [vmem:[#allocation3 + $0xca0] sm:$0xff]
    %v486 = vld [vmem:[#allocation3 + $0xca8] sm:$0xff]
    %v487 = vld [vmem:[#allocation3 + $0xcb0] sm:$0xff]
    %v488 = vld [vmem:[#allocation3 + $0xcb8] sm:$0xff]
    %v489 = vld [vmem:[#allocation3 + $0xcc0] sm:$0xff]
    %v490 = vld [vmem:[#allocation3 + $0xcc8] sm:$0xff]
    %v491 = vld [vmem:[#allocation3 + $0xcd0] sm:$0xff]
    %v492 = vld [vmem:[#allocation3 + $0xcd8] sm:$0xff]
    %v493 = vld [vmem:[#allocation3 + $0xce0] sm:$0xff]
    %v494 = vld [vmem:[#allocation3 + $0xce8] sm:$0xff]
    %v495 = vld [vmem:[#allocation3 + $0xcf0] sm:$0xff]
    %v496 = vld [vmem:[#allocation3 + $0xcf8] sm:$0xff]
    %v497 = vld [vmem:[#allocation3 + $0xd00] sm:$0xff]
    %v498 = vld [vmem:[#allocation3 + $0xd08] sm:$0xff]
    %v499 = vld [vmem:[#allocation3 + $0xd10] sm:$0xff]
    %v500 = vld [vmem:[#allocation3 + $0xd18] sm:$0xff]
    %v501 = vld [vmem:[#allocation3 + $0xd20] sm:$0xff]
    %v502 = vld [vmem:[#allocation3 + $0xd28] sm:$0xff]
    %v503 = vld [vmem:[#allocation3 + $0xd30] sm:$0xff]
    %v504 = vld [vmem:[#allocation3 + $0xd38] sm:$0xff]
    %v505 = vld [vmem:[#allocation3 + $0xd40] sm:$0xff]
    %v506 = vld [vmem:[#allocation3 + $0xd48] sm:$0xff]
    %v507 = vld [vmem:[#allocation3 + $0xd50] sm:$0xff]
    %v508 = vld [vmem:[#allocation3 + $0xd58] sm:$0xff]
    %v509 = vld [vmem:[#allocation3 + $0xd60] sm:$0xff]
    %v510 = vld [vmem:[#allocation3 + $0xd68] sm:$0xff]
    %v511 = vld [vmem:[#allocation3 + $0xd70] sm:$0xff]
    %v512 = vld [vmem:[#allocation3 + $0xd78] sm:$0xff]
    %v513 = vld [vmem:[#allocation3 + $0xd80] sm:$0xff]
    %v514 = vld [vmem:[#allocation3 + $0xd88] sm:$0xff]
    %v515 = vld [vmem:[#allocation3 + $0xd90] sm:$0xff]
    %v516 = vld [vmem:[#allocation3 + $0xd98] sm:$0xff]
    %v517 = vld [vmem:[#allocation3 + $0xda0] sm:$0xff]
    %v518 = vld [vmem:[#allocation3 + $0xda8] sm:$0xff]
    %v519 = vld [vmem:[#allocation3 + $0xdb0] sm:$0xff]
    %v520 = vld [vmem:[#allocation3 + $0xdb8] sm:$0xff]
    %v521 = vld [vmem:[#allocation3 + $0xdc0] sm:$0xff]
    %v522 = vld [vmem:[#allocation3 + $0xdc8] sm:$0xff]
    %v523 = vld [vmem:[#allocation3 + $0xdd0] sm:$0xff]
    %v524 = vld [vmem:[#allocation3 + $0xdd8] sm:$0xff]
    %v525 = vld [vmem:[#allocation3 + $0xde0] sm:$0xff]
    %v526 = vld [vmem:[#allocation3 + $0xde8] sm:$0xff]
    %v527 = vld [vmem:[#allocation3 + $0xdf0] sm:$0xff]
    %v528 = vld [vmem:[#allocation3 + $0xdf8] sm:$0xff]
    %v529 = vld [vmem:[#allocation3 + $0xe00] sm:$0xff]
    %v530 = vld [vmem:[#allocation3 + $0xe08] sm:$0xff]
    %v531 = vld [vmem:[#allocation3 + $0xe10] sm:$0xff]
    %v532 = vld [vmem:[#allocation3 + $0xe18] sm:$0xff]
    %v533 = vld [vmem:[#allocation3 + $0xe20] sm:$0xff]
    %v534 = vld [vmem:[#allocation3 + $0xe28] sm:$0xff]
    %v535 = vld [vmem:[#allocation3 + $0xe30] sm:$0xff]
    %v536 = vld [vmem:[#allocation3 + $0xe38] sm:$0xff]
    %v537 = vld [vmem:[#allocation3 + $0xe40] sm:$0xff]
    %v538 = vld [vmem:[#allocation3 + $0xe48] sm:$0xff]
    %v539 = vld [vmem:[#allocation3 + $0xe50] sm:$0xff]
    %v540 = vld [vmem:[#allocation3 + $0xe58] sm:$0xff]
    %v541 = vld [vmem:[#allocation3 + $0xe60] sm:$0xff]
    %v542 = vld [vmem:[#allocation3 + $0xe68] sm:$0xff]
    %v543 = vld [vmem:[#allocation3 + $0xe70] sm:$0xff]
    %v544 = vld [vmem:[#allocation3 + $0xe78] sm:$0xff]
    %v545 = vld [vmem:[#allocation3 + $0xe80] sm:$0xff]
    %v546 = vld [vmem:[#allocation3 + $0xe88] sm:$0xff]
    %v547 = vld [vmem:[#allocation3 + $0xe90] sm:$0xff]
    %v548 = vld [vmem:[#allocation3 + $0xe98] sm:$0xff]
    %v549 = vld [vmem:[#allocation3 + $0xea0] sm:$0xff]
    %v550 = vld [vmem:[#allocation3 + $0xea8] sm:$0xff]
    %v551 = vld [vmem:[#allocation3 + $0xeb0] sm:$0xff]
    %v552 = vld [vmem:[#allocation3 + $0xeb8] sm:$0xff]
    %v553 = vld [vmem:[#allocation3 + $0xec0] sm:$0xff]
    %v554 = vld [vmem:[#allocation3 + $0xec8] sm:$0xff]
    %v555 = vld [vmem:[#allocation3 + $0xed0] sm:$0xff]
    %v556 = vld [vmem:[#allocation3 + $0xed8] sm:$0xff]
    %v557 = vld [vmem:[#allocation3 + $0xee0] sm:$0xff]
    %v558 = vld [vmem:[#allocation3 + $0xee8] sm:$0xff]
    %v559 = vld [vmem:[#allocation3 + $0xef0] sm:$0xff]
    %v560 = vld [vmem:[#allocation3 + $0xef8] sm:$0xff]
    %v561 = vld [vmem:[#allocation3 + $0xf00] sm:$0xff]
    %v562 = vld [vmem:[#allocation3 + $0xf08] sm:$0xff]
    %v563 = vld [vmem:[#allocation3 + $0xf10] sm:$0xff]
    %v564 = vld [vmem:[#allocation3 + $0xf18] sm:$0xff]
    %v565 = vld [vmem:[#allocation3 + $0xf20] sm:$0xff]
    %v566 = vld [vmem:[#allocation3 + $0xf28] sm:$0xff]
    %v567 = vld [vmem:[#allocation3 + $0xf30] sm:$0xff]
    %v568 = vld [vmem:[#allocation3 + $0xf38] sm:$0xff]
    %v569 = vld [vmem:[#allocation3 + $0xf40] sm:$0xff]
    %v570 = vld [vmem:[#allocation3 + $0xf48] sm:$0xff]
    %v571 = vld [vmem:[#allocation3 + $0xf50] sm:$0xff]
    %v572 = vld [vmem:[#allocation3 + $0xf58] sm:$0xff]
    %v573 = vld [vmem:[#allocation3 + $0xf60] sm:$0xff]
    %v574 = vld [vmem:[#allocation3 + $0xf68] sm:$0xff]
    %v575 = vld [vmem:[#allocation3 + $0xf70] sm:$0xff]
    %v576 = vld [vmem:[#allocation3 + $0xf78] sm:$0xff]
    %v577 = vld [vmem:[#allocation3 + $0xf80] sm:$0xff]
    %v578 = vld [vmem:[#allocation3 + $0xf88] sm:$0xff]
    %v579 = vld [vmem:[#allocation3 + $0xf90] sm:$0xff]
    %v580 = vld [vmem:[#allocation3 + $0xf98] sm:$0xff]
    %v581 = vld [vmem:[#allocation3 + $0xfa0] sm:$0xff]
    %v582 = vld [vmem:[#allocation3 + $0xfa8] sm:$0xff]
    %v583 = vld [vmem:[#allocation3 + $0xfb0] sm:$0xff]
    %v584 = vld [vmem:[#allocation3 + $0xfb8] sm:$0xff]
    %v585 = vld [vmem:[#allocation3 + $0xfc0] sm:$0xff]
    %v586 = vld [vmem:[#allocation3 + $0xfc8] sm:$0xff]
    %v587 = vld [vmem:[#allocation3 + $0xfd0] sm:$0xff]
    %v588 = vld [vmem:[#allocation3 + $0xfd8] sm:$0xff]
    %v589 = vld [vmem:[#allocation3 + $0xfe0] sm:$0xff]
    %v590 = vld [vmem:[#allocation3 + $0xfe8] sm:$0xff]
    %v591 = vld [vmem:[#allocation3 + $0xff0] sm:$0xff]
    %v592 = vld [vmem:[#allocation3 + $0xff8] sm:$0xff]
    %v597 = vunpack.c.l.b16 %v69
    %v598 = vunpack.c.h.b16 %v69
    %v599 = vunpack.c.l.b16 %v70
    %v600 = vunpack.c.h.b16 %v70
    %v601 = vunpack.c.l.b16 %v71
    %v602 = vunpack.c.h.b16 %v71
    %v603 = vunpack.c.l.b16 %v72
    %v604 = vunpack.c.h.b16 %v72
    %v605 = vpack.c.b16 %v597, %v597
    %v606 = vpack.c.b16 %v598, %v598
    %v607 = vpack.c.b16 %v599, %v599
    %v608 = vpack.c.b16 %v600, %v600
    %v609 = vpack.c.b16 %v601, %v601
    %v610 = vpack.c.b16 %v602, %v602
    %v611 = vpack.c.b16 %v603, %v603
    %v612 = vpack.c.b16 %v604, %v604
    %v1133 = vunpack.c.l.b16 %v81
    %v1134 = vunpack.c.h.b16 %v81
    %v1135 = vunpack.c.l.b16 %v82
    %v1136 = vunpack.c.h.b16 %v82
    %v1137 = vunpack.c.l.b16 %v83
    %v1138 = vunpack.c.h.b16 %v83
    %v1139 = vunpack.c.l.b16 %v84
    %v1140 = vunpack.c.h.b16 %v84
    %v1141 = vunpack.c.l.b16 %v85
    %v1142 = vunpack.c.h.b16 %v85
    %v1143 = vunpack.c.l.b16 %v86
    %v1144 = vunpack.c.h.b16 %v86
    %v1145 = vunpack.c.l.b16 %v87
    %v1146 = vunpack.c.h.b16 %v87
    %v1147 = vunpack.c.l.b16 %v88
    %v1148 = vunpack.c.h.b16 %v88
    %v1149 = vunpack.c.l.b16 %v89
    %v1150 = vunpack.c.h.b16 %v89
    %v1151 = vunpack.c.l.b16 %v90
    %v1152 = vunpack.c.h.b16 %v90
    %v1153 = vunpack.c.l.b16 %v91
    %v1154 = vunpack.c.h.b16 %v91
    %v1155 = vunpack.c.l.b16 %v92
    %v1156 = vunpack.c.h.b16 %v92
    %v1157 = vunpack.c.l.b16 %v93
    %v1158 = vunpack.c.h.b16 %v93
    %v1159 = vunpack.c.l.b16 %v94
    %v1160 = vunpack.c.h.b16 %v94
    %v1161 = vunpack.c.l.b16 %v95
    %v1162 = vunpack.c.h.b16 %v95
    %v1163 = vunpack.c.l.b16 %v96
    %v1164 = vunpack.c.h.b16 %v96
    %v1165 = vunpack.c.l.b16 %v97
    %v1166 = vunpack.c.h.b16 %v97
    %v1167 = vunpack.c.l.b16 %v98
    %v1168 = vunpack.c.h.b16 %v98
    %v1169 = vunpack.c.l.b16 %v99
    %v1170 = vunpack.c.h.b16 %v99
    %v1171 = vunpack.c.l.b16 %v100
    %v1172 = vunpack.c.h.b16 %v100
    %v1173 = vunpack.c.l.b16 %v101
    %v1174 = vunpack.c.h.b16 %v101
    %v1175 = vunpack.c.l.b16 %v102
    %v1176 = vunpack.c.h.b16 %v102
    %v1177 = vunpack.c.l.b16 %v103
    %v1178 = vunpack.c.h.b16 %v103
    %v1179 = vunpack.c.l.b16 %v104
    %v1180 = vunpack.c.h.b16 %v104
    %v1181 = vunpack.c.l.b16 %v105
    %v1182 = vunpack.c.h.b16 %v105
    %v1183 = vunpack.c.l.b16 %v106
    %v1184 = vunpack.c.h.b16 %v106
    %v1185 = vunpack.c.l.b16 %v107
    %v1186 = vunpack.c.h.b16 %v107
    %v1187 = vunpack.c.l.b16 %v108
    %v1188 = vunpack.c.h.b16 %v108
    %v1189 = vunpack.c.l.b16 %v109
    %v1190 = vunpack.c.h.b16 %v109
    %v1191 = vunpack.c.l.b16 %v110
    %v1192 = vunpack.c.h.b16 %v110
    %v1193 = vunpack.c.l.b16 %v111
    %v1194 = vunpack.c.h.b16 %v111
    %v1195 = vunpack.c.l.b16 %v112
    %v1196 = vunpack.c.h.b16 %v112
    %v1197 = vunpack.c.l.b16 %v113
    %v1198 = vunpack.c.h.b16 %v113
    %v1199 = vunpack.c.l.b16 %v114
    %v1200 = vunpack.c.h.b16 %v114
    %v1201 = vunpack.c.l.b16 %v115
    %v1202 = vunpack.c.h.b16 %v115
    %v1203 = vunpack.c.l.b16 %v116
    %v1204 = vunpack.c.h.b16 %v116
    %v1205 = vunpack.c.l.b16 %v117
    %v1206 = vunpack.c.h.b16 %v117
    %v1207 = vunpack.c.l.b16 %v118
    %v1208 = vunpack.c.h.b16 %v118
    %v1209 = vunpack.c.l.b16 %v119
    %v1210 = vunpack.c.h.b16 %v119
    %v1211 = vunpack.c.l.b16 %v120
    %v1212 = vunpack.c.h.b16 %v120
    %v1213 = vunpack.c.l.b16 %v121
    %v1214 = vunpack.c.h.b16 %v121
    %v1215 = vunpack.c.l.b16 %v122
    %v1216 = vunpack.c.h.b16 %v122
    %v1217 = vunpack.c.l.b16 %v123
    %v1218 = vunpack.c.h.b16 %v123
    %v1219 = vunpack.c.l.b16 %v124
    %v1220 = vunpack.c.h.b16 %v124
    %v1221 = vunpack.c.l.b16 %v125
    %v1222 = vunpack.c.h.b16 %v125
    %v1223 = vunpack.c.l.b16 %v126
    %v1224 = vunpack.c.h.b16 %v126
    %v1225 = vunpack.c.l.b16 %v127
    %v1226 = vunpack.c.h.b16 %v127
    %v1227 = vunpack.c.l.b16 %v128
    %v1228 = vunpack.c.h.b16 %v128
    %v1229 = vunpack.c.l.b16 %v129
    %v1230 = vunpack.c.h.b16 %v129
    %v1231 = vunpack.c.l.b16 %v130
    %v1232 = vunpack.c.h.b16 %v130
    %v1233 = vunpack.c.l.b16 %v131
    %v1234 = vunpack.c.h.b16 %v131
    %v1235 = vunpack.c.l.b16 %v132
    %v1236 = vunpack.c.h.b16 %v132
    %v1237 = vunpack.c.l.b16 %v133
    %v1238 = vunpack.c.h.b16 %v133
    %v1239 = vunpack.c.l.b16 %v134
    %v1240 = vunpack.c.h.b16 %v134
    %v1241 = vunpack.c.l.b16 %v135
    %v1242 = vunpack.c.h.b16 %v135
    %v1243 = vunpack.c.l.b16 %v136
    %v1244 = vunpack.c.h.b16 %v136
    %v1245 = vunpack.c.l.b16 %v137
    %v1246 = vunpack.c.h.b16 %v137
    %v1247 = vunpack.c.l.b16 %v138
    %v1248 = vunpack.c.h.b16 %v138
    %v1249 = vunpack.c.l.b16 %v139
    %v1250 = vunpack.c.h.b16 %v139
    %v1251 = vunpack.c.l.b16 %v140
    %v1252 = vunpack.c.h.b16 %v140
    %v1253 = vunpack.c.l.b16 %v141
    %v1254 = vunpack.c.h.b16 %v141
    %v1255 = vunpack.c.l.b16 %v142
    %v1256 = vunpack.c.h.b16 %v142
    %v1257 = vunpack.c.l.b16 %v143
    %v1258 = vunpack.c.h.b16 %v143
    %v1259 = vunpack.c.l.b16 %v144
    %v1260 = vunpack.c.h.b16 %v144
    %v1261 = vunpack.c.l.b16 %v145
    %v1262 = vunpack.c.h.b16 %v145
    %v1263 = vunpack.c.l.b16 %v146
    %v1264 = vunpack.c.h.b16 %v146
    %v1265 = vunpack.c.l.b16 %v147
    %v1266 = vunpack.c.h.b16 %v147
    %v1267 = vunpack.c.l.b16 %v148
    %v1268 = vunpack.c.h.b16 %v148
    %v1269 = vunpack.c.l.b16 %v149
    %v1270 = vunpack.c.h.b16 %v149
    %v1271 = vunpack.c.l.b16 %v150
    %v1272 = vunpack.c.h.b16 %v150
    %v1273 = vunpack.c.l.b16 %v151
    %v1274 = vunpack.c.h.b16 %v151
    %v1275 = vunpack.c.l.b16 %v152
    %v1276 = vunpack.c.h.b16 %v152
    %v1277 = vunpack.c.l.b16 %v153
    %v1278 = vunpack.c.h.b16 %v153
    %v1279 = vunpack.c.l.b16 %v154
    %v1280 = vunpack.c.h.b16 %v154
    %v1281 = vunpack.c.l.b16 %v155
    %v1282 = vunpack.c.h.b16 %v155
    %v1283 = vunpack.c.l.b16 %v156
    %v1284 = vunpack.c.h.b16 %v156
    %v1285 = vunpack.c.l.b16 %v157
    %v1286 = vunpack.c.h.b16 %v157
    %v1287 = vunpack.c.l.b16 %v158
    %v1288 = vunpack.c.h.b16 %v158
    %v1289 = vunpack.c.l.b16 %v159
    %v1290 = vunpack.c.h.b16 %v159
    %v1291 = vunpack.c.l.b16 %v160
    %v1292 = vunpack.c.h.b16 %v160
    %v1293 = vunpack.c.l.b16 %v161
    %v1294 = vunpack.c.h.b16 %v161
    %v1295 = vunpack.c.l.b16 %v162
    %v1296 = vunpack.c.h.b16 %v162
    %v1297 = vunpack.c.l.b16 %v163
    %v1298 = vunpack.c.h.b16 %v163
    %v1299 = vunpack.c.l.b16 %v164
    %v1300 = vunpack.c.h.b16 %v164
    %v1301 = vunpack.c.l.b16 %v165
    %v1302 = vunpack.c.h.b16 %v165
    %v1303 = vunpack.c.l.b16 %v166
    %v1304 = vunpack.c.h.b16 %v166
    %v1305 = vunpack.c.l.b16 %v167
    %v1306 = vunpack.c.h.b16 %v167
    %v1307 = vunpack.c.l.b16 %v168
    %v1308 = vunpack.c.h.b16 %v168
    %v1309 = vunpack.c.l.b16 %v169
    %v1310 = vunpack.c.h.b16 %v169
    %v1311 = vunpack.c.l.b16 %v170
    %v1312 = vunpack.c.h.b16 %v170
    %v1313 = vunpack.c.l.b16 %v171
    %v1314 = vunpack.c.h.b16 %v171
    %v1315 = vunpack.c.l.b16 %v172
    %v1316 = vunpack.c.h.b16 %v172
    %v1317 = vunpack.c.l.b16 %v173
    %v1318 = vunpack.c.h.b16 %v173
    %v1319 = vunpack.c.l.b16 %v174
    %v1320 = vunpack.c.h.b16 %v174
    %v1321 = vunpack.c.l.b16 %v175
    %v1322 = vunpack.c.h.b16 %v175
    %v1323 = vunpack.c.l.b16 %v176
    %v1324 = vunpack.c.h.b16 %v176
    %v1325 = vunpack.c.l.b16 %v177
    %v1326 = vunpack.c.h.b16 %v177
    %v1327 = vunpack.c.l.b16 %v178
    %v1328 = vunpack.c.h.b16 %v178
    %v1329 = vunpack.c.l.b16 %v179
    %v1330 = vunpack.c.h.b16 %v179
    %v1331 = vunpack.c.l.b16 %v180
    %v1332 = vunpack.c.h.b16 %v180
    %v1333 = vunpack.c.l.b16 %v181
    %v1334 = vunpack.c.h.b16 %v181
    %v1335 = vunpack.c.l.b16 %v182
    %v1336 = vunpack.c.h.b16 %v182
    %v1337 = vunpack.c.l.b16 %v183
    %v1338 = vunpack.c.h.b16 %v183
    %v1339 = vunpack.c.l.b16 %v184
    %v1340 = vunpack.c.h.b16 %v184
    %v1341 = vunpack.c.l.b16 %v185
    %v1342 = vunpack.c.h.b16 %v185
    %v1343 = vunpack.c.l.b16 %v186
    %v1344 = vunpack.c.h.b16 %v186
    %v1345 = vunpack.c.l.b16 %v187
    %v1346 = vunpack.c.h.b16 %v187
    %v1347 = vunpack.c.l.b16 %v188
    %v1348 = vunpack.c.h.b16 %v188
    %v1349 = vunpack.c.l.b16 %v189
    %v1350 = vunpack.c.h.b16 %v189
    %v1351 = vunpack.c.l.b16 %v190
    %v1352 = vunpack.c.h.b16 %v190
    %v1353 = vunpack.c.l.b16 %v191
    %v1354 = vunpack.c.h.b16 %v191
    %v1355 = vunpack.c.l.b16 %v192
    %v1356 = vunpack.c.h.b16 %v192
    %v1357 = vunpack.c.l.b16 %v193
    %v1358 = vunpack.c.h.b16 %v193
    %v1359 = vunpack.c.l.b16 %v194
    %v1360 = vunpack.c.h.b16 %v194
    %v1361 = vunpack.c.l.b16 %v195
    %v1362 = vunpack.c.h.b16 %v195
    %v1363 = vunpack.c.l.b16 %v196
    %v1364 = vunpack.c.h.b16 %v196
    %v1365 = vunpack.c.l.b16 %v197
    %v1366 = vunpack.c.h.b16 %v197
    %v1367 = vunpack.c.l.b16 %v198
    %v1368 = vunpack.c.h.b16 %v198
    %v1369 = vunpack.c.l.b16 %v199
    %v1370 = vunpack.c.h.b16 %v199
    %v1371 = vunpack.c.l.b16 %v200
    %v1372 = vunpack.c.h.b16 %v200
    %v1373 = vunpack.c.l.b16 %v201
    %v1374 = vunpack.c.h.b16 %v201
    %v1375 = vunpack.c.l.b16 %v202
    %v1376 = vunpack.c.h.b16 %v202
    %v1377 = vunpack.c.l.b16 %v203
    %v1378 = vunpack.c.h.b16 %v203
    %v1379 = vunpack.c.l.b16 %v204
    %v1380 = vunpack.c.h.b16 %v204
    %v1381 = vunpack.c.l.b16 %v205
    %v1382 = vunpack.c.h.b16 %v205
    %v1383 = vunpack.c.l.b16 %v206
    %v1384 = vunpack.c.h.b16 %v206
    %v1385 = vunpack.c.l.b16 %v207
    %v1386 = vunpack.c.h.b16 %v207
    %v1387 = vunpack.c.l.b16 %v208
    %v1388 = vunpack.c.h.b16 %v208
    %v1389 = vunpack.c.l.b16 %v209
    %v1390 = vunpack.c.h.b16 %v209
    %v1391 = vunpack.c.l.b16 %v210
    %v1392 = vunpack.c.h.b16 %v210
    %v1393 = vunpack.c.l.b16 %v211
    %v1394 = vunpack.c.h.b16 %v211
    %v1395 = vunpack.c.l.b16 %v212
    %v1396 = vunpack.c.h.b16 %v212
    %v1397 = vunpack.c.l.b16 %v213
    %v1398 = vunpack.c.h.b16 %v213
    %v1399 = vunpack.c.l.b16 %v214
    %v1400 = vunpack.c.h.b16 %v214
    %v1401 = vunpack.c.l.b16 %v215
    %v1402 = vunpack.c.h.b16 %v215
    %v1403 = vunpack.c.l.b16 %v216
    %v1404 = vunpack.c.h.b16 %v216
    %v1405 = vunpack.c.l.b16 %v217
    %v1406 = vunpack.c.h.b16 %v217
    %v1407 = vunpack.c.l.b16 %v218
    %v1408 = vunpack.c.h.b16 %v218
    %v1409 = vunpack.c.l.b16 %v219
    %v1410 = vunpack.c.h.b16 %v219
    %v1411 = vunpack.c.l.b16 %v220
    %v1412 = vunpack.c.h.b16 %v220
    %v1413 = vunpack.c.l.b16 %v221
    %v1414 = vunpack.c.h.b16 %v221
    %v1415 = vunpack.c.l.b16 %v222
    %v1416 = vunpack.c.h.b16 %v222
    %v1417 = vunpack.c.l.b16 %v223
    %v1418 = vunpack.c.h.b16 %v223
    %v1419 = vunpack.c.l.b16 %v224
    %v1420 = vunpack.c.h.b16 %v224
    %v1421 = vunpack.c.l.b16 %v225
    %v1422 = vunpack.c.h.b16 %v225
    %v1423 = vunpack.c.l.b16 %v226
    %v1424 = vunpack.c.h.b16 %v226
    %v1425 = vunpack.c.l.b16 %v227
    %v1426 = vunpack.c.h.b16 %v227
    %v1427 = vunpack.c.l.b16 %v228
    %v1428 = vunpack.c.h.b16 %v228
    %v1429 = vunpack.c.l.b16 %v229
    %v1430 = vunpack.c.h.b16 %v229
    %v1431 = vunpack.c.l.b16 %v230
    %v1432 = vunpack.c.h.b16 %v230
    %v1433 = vunpack.c.l.b16 %v231
    %v1434 = vunpack.c.h.b16 %v231
    %v1435 = vunpack.c.l.b16 %v232
    %v1436 = vunpack.c.h.b16 %v232
    %v1437 = vunpack.c.l.b16 %v233
    %v1438 = vunpack.c.h.b16 %v233
    %v1439 = vunpack.c.l.b16 %v234
    %v1440 = vunpack.c.h.b16 %v234
    %v1441 = vunpack.c.l.b16 %v235
    %v1442 = vunpack.c.h.b16 %v235
    %v1443 = vunpack.c.l.b16 %v236
    %v1444 = vunpack.c.h.b16 %v236
    %v1445 = vunpack.c.l.b16 %v237
    %v1446 = vunpack.c.h.b16 %v237
    %v1447 = vunpack.c.l.b16 %v238
    %v1448 = vunpack.c.h.b16 %v238
    %v1449 = vunpack.c.l.b16 %v239
    %v1450 = vunpack.c.h.b16 %v239
    %v1451 = vunpack.c.l.b16 %v240
    %v1452 = vunpack.c.h.b16 %v240
    %v1453 = vunpack.c.l.b16 %v241
    %v1454 = vunpack.c.h.b16 %v241
    %v1455 = vunpack.c.l.b16 %v242
    %v1456 = vunpack.c.h.b16 %v242
    %v1457 = vunpack.c.l.b16 %v243
    %v1458 = vunpack.c.h.b16 %v243
    %v1459 = vunpack.c.l.b16 %v244
    %v1460 = vunpack.c.h.b16 %v244
    %v1461 = vunpack.c.l.b16 %v245
    %v1462 = vunpack.c.h.b16 %v245
    %v1463 = vunpack.c.l.b16 %v246
    %v1464 = vunpack.c.h.b16 %v246
    %v1465 = vunpack.c.l.b16 %v247
    %v1466 = vunpack.c.h.b16 %v247
    %v1467 = vunpack.c.l.b16 %v248
    %v1468 = vunpack.c.h.b16 %v248
    %v1469 = vunpack.c.l.b16 %v249
    %v1470 = vunpack.c.h.b16 %v249
    %v1471 = vunpack.c.l.b16 %v250
    %v1472 = vunpack.c.h.b16 %v250
    %v1473 = vunpack.c.l.b16 %v251
    %v1474 = vunpack.c.h.b16 %v251
    %v1475 = vunpack.c.l.b16 %v252
    %v1476 = vunpack.c.h.b16 %v252
    %v1477 = vunpack.c.l.b16 %v253
    %v1478 = vunpack.c.h.b16 %v253
    %v1479 = vunpack.c.l.b16 %v254
    %v1480 = vunpack.c.h.b16 %v254
    %v1481 = vunpack.c.l.b16 %v255
    %v1482 = vunpack.c.h.b16 %v255
    %v1483 = vunpack.c.l.b16 %v256
    %v1484 = vunpack.c.h.b16 %v256
    %v1485 = vunpack.c.l.b16 %v257
    %v1486 = vunpack.c.h.b16 %v257
    %v1487 = vunpack.c.l.b16 %v258
    %v1488 = vunpack.c.h.b16 %v258
    %v1489 = vunpack.c.l.b16 %v259
    %v1490 = vunpack.c.h.b16 %v259
    %v1491 = vunpack.c.l.b16 %v260
    %v1492 = vunpack.c.h.b16 %v260
    %v1493 = vunpack.c.l.b16 %v261
    %v1494 = vunpack.c.h.b16 %v261
    %v1495 = vunpack.c.l.b16 %v262
    %v1496 = vunpack.c.h.b16 %v262
    %v1497 = vunpack.c.l.b16 %v263
    %v1498 = vunpack.c.h.b16 %v263
    %v1499 = vunpack.c.l.b16 %v264
    %v1500 = vunpack.c.h.b16 %v264
    %v1501 = vunpack.c.l.b16 %v265
    %v1502 = vunpack.c.h.b16 %v265
    %v1503 = vunpack.c.l.b16 %v266
    %v1504 = vunpack.c.h.b16 %v266
    %v1505 = vunpack.c.l.b16 %v267
    %v1506 = vunpack.c.h.b16 %v267
    %v1507 = vunpack.c.l.b16 %v268
    %v1508 = vunpack.c.h.b16 %v268
    %v1509 = vunpack.c.l.b16 %v269
    %v1510 = vunpack.c.h.b16 %v269
    %v1511 = vunpack.c.l.b16 %v270
    %v1512 = vunpack.c.h.b16 %v270
    %v1513 = vunpack.c.l.b16 %v271
    %v1514 = vunpack.c.h.b16 %v271
    %v1515 = vunpack.c.l.b16 %v272
    %v1516 = vunpack.c.h.b16 %v272
    %v1517 = vunpack.c.l.b16 %v273
    %v1518 = vunpack.c.h.b16 %v273
    %v1519 = vunpack.c.l.b16 %v274
    %v1520 = vunpack.c.h.b16 %v274
    %v1521 = vunpack.c.l.b16 %v275
    %v1522 = vunpack.c.h.b16 %v275
    %v1523 = vunpack.c.l.b16 %v276
    %v1524 = vunpack.c.h.b16 %v276
    %v1525 = vunpack.c.l.b16 %v277
    %v1526 = vunpack.c.h.b16 %v277
    %v1527 = vunpack.c.l.b16 %v278
    %v1528 = vunpack.c.h.b16 %v278
    %v1529 = vunpack.c.l.b16 %v279
    %v1530 = vunpack.c.h.b16 %v279
    %v1531 = vunpack.c.l.b16 %v280
    %v1532 = vunpack.c.h.b16 %v280
    %v1533 = vunpack.c.l.b16 %v281
    %v1534 = vunpack.c.h.b16 %v281
    %v1535 = vunpack.c.l.b16 %v282
    %v1536 = vunpack.c.h.b16 %v282
    %v1537 = vunpack.c.l.b16 %v283
    %v1538 = vunpack.c.h.b16 %v283
    %v1539 = vunpack.c.l.b16 %v284
    %v1540 = vunpack.c.h.b16 %v284
    %v1541 = vunpack.c.l.b16 %v285
    %v1542 = vunpack.c.h.b16 %v285
    %v1543 = vunpack.c.l.b16 %v286
    %v1544 = vunpack.c.h.b16 %v286
    %v1545 = vunpack.c.l.b16 %v287
    %v1546 = vunpack.c.h.b16 %v287
    %v1547 = vunpack.c.l.b16 %v288
    %v1548 = vunpack.c.h.b16 %v288
    %v1549 = vunpack.c.l.b16 %v289
    %v1550 = vunpack.c.h.b16 %v289
    %v1551 = vunpack.c.l.b16 %v290
    %v1552 = vunpack.c.h.b16 %v290
    %v1553 = vunpack.c.l.b16 %v291
    %v1554 = vunpack.c.h.b16 %v291
    %v1555 = vunpack.c.l.b16 %v292
    %v1556 = vunpack.c.h.b16 %v292
    %v1557 = vunpack.c.l.b16 %v293
    %v1558 = vunpack.c.h.b16 %v293
    %v1559 = vunpack.c.l.b16 %v294
    %v1560 = vunpack.c.h.b16 %v294
    %v1561 = vunpack.c.l.b16 %v295
    %v1562 = vunpack.c.h.b16 %v295
    %v1563 = vunpack.c.l.b16 %v296
    %v1564 = vunpack.c.h.b16 %v296
    %v1565 = vunpack.c.l.b16 %v297
    %v1566 = vunpack.c.h.b16 %v297
    %v1567 = vunpack.c.l.b16 %v298
    %v1568 = vunpack.c.h.b16 %v298
    %v1569 = vunpack.c.l.b16 %v299
    %v1570 = vunpack.c.h.b16 %v299
    %v1571 = vunpack.c.l.b16 %v300
    %v1572 = vunpack.c.h.b16 %v300
    %v1573 = vunpack.c.l.b16 %v301
    %v1574 = vunpack.c.h.b16 %v301
    %v1575 = vunpack.c.l.b16 %v302
    %v1576 = vunpack.c.h.b16 %v302
    %v1577 = vunpack.c.l.b16 %v303
    %v1578 = vunpack.c.h.b16 %v303
    %v1579 = vunpack.c.l.b16 %v304
    %v1580 = vunpack.c.h.b16 %v304
    %v1581 = vunpack.c.l.b16 %v305
    %v1582 = vunpack.c.h.b16 %v305
    %v1583 = vunpack.c.l.b16 %v306
    %v1584 = vunpack.c.h.b16 %v306
    %v1585 = vunpack.c.l.b16 %v307
    %v1586 = vunpack.c.h.b16 %v307
    %v1587 = vunpack.c.l.b16 %v308
    %v1588 = vunpack.c.h.b16 %v308
    %v1589 = vunpack.c.l.b16 %v309
    %v1590 = vunpack.c.h.b16 %v309
    %v1591 = vunpack.c.l.b16 %v310
    %v1592 = vunpack.c.h.b16 %v310
    %v1593 = vunpack.c.l.b16 %v311
    %v1594 = vunpack.c.h.b16 %v311
    %v1595 = vunpack.c.l.b16 %v312
    %v1596 = vunpack.c.h.b16 %v312
    %v1597 = vunpack.c.l.b16 %v313
    %v1598 = vunpack.c.h.b16 %v313
    %v1599 = vunpack.c.l.b16 %v314
    %v1600 = vunpack.c.h.b16 %v314
    %v1601 = vunpack.c.l.b16 %v315
    %v1602 = vunpack.c.h.b16 %v315
    %v1603 = vunpack.c.l.b16 %v316
    %v1604 = vunpack.c.h.b16 %v316
    %v1605 = vunpack.c.l.b16 %v317
    %v1606 = vunpack.c.h.b16 %v317
    %v1607 = vunpack.c.l.b16 %v318
    %v1608 = vunpack.c.h.b16 %v318
    %v1609 = vunpack.c.l.b16 %v319
    %v1610 = vunpack.c.h.b16 %v319
    %v1611 = vunpack.c.l.b16 %v320
    %v1612 = vunpack.c.h.b16 %v320
    %v1613 = vunpack.c.l.b16 %v321
    %v1614 = vunpack.c.h.b16 %v321
    %v1615 = vunpack.c.l.b16 %v322
    %v1616 = vunpack.c.h.b16 %v322
    %v1617 = vunpack.c.l.b16 %v323
    %v1618 = vunpack.c.h.b16 %v323
    %v1619 = vunpack.c.l.b16 %v324
    %v1620 = vunpack.c.h.b16 %v324
    %v1621 = vunpack.c.l.b16 %v325
    %v1622 = vunpack.c.h.b16 %v325
    %v1623 = vunpack.c.l.b16 %v326
    %v1624 = vunpack.c.h.b16 %v326
    %v1625 = vunpack.c.l.b16 %v327
    %v1626 = vunpack.c.h.b16 %v327
    %v1627 = vunpack.c.l.b16 %v328
    %v1628 = vunpack.c.h.b16 %v328
    %v1629 = vunpack.c.l.b16 %v329
    %v1630 = vunpack.c.h.b16 %v329
    %v1631 = vunpack.c.l.b16 %v330
    %v1632 = vunpack.c.h.b16 %v330
    %v1633 = vunpack.c.l.b16 %v331
    %v1634 = vunpack.c.h.b16 %v331
    %v1635 = vunpack.c.l.b16 %v332
    %v1636 = vunpack.c.h.b16 %v332
    %v1637 = vunpack.c.l.b16 %v333
    %v1638 = vunpack.c.h.b16 %v333
    %v1639 = vunpack.c.l.b16 %v334
    %v1640 = vunpack.c.h.b16 %v334
    %v1641 = vunpack.c.l.b16 %v335
    %v1642 = vunpack.c.h.b16 %v335
    %v1643 = vunpack.c.l.b16 %v336
    %v1644 = vunpack.c.h.b16 %v336
    %v1645 = vunpack.c.l.b16 %v337
    %v1646 = vunpack.c.h.b16 %v337
    %v1647 = vunpack.c.l.b16 %v338
    %v1648 = vunpack.c.h.b16 %v338
    %v1649 = vunpack.c.l.b16 %v339
    %v1650 = vunpack.c.h.b16 %v339
    %v1651 = vunpack.c.l.b16 %v340
    %v1652 = vunpack.c.h.b16 %v340
    %v1653 = vunpack.c.l.b16 %v341
    %v1654 = vunpack.c.h.b16 %v341
    %v1655 = vunpack.c.l.b16 %v342
    %v1656 = vunpack.c.h.b16 %v342
    %v1657 = vunpack.c.l.b16 %v343
    %v1658 = vunpack.c.h.b16 %v343
    %v1659 = vunpack.c.l.b16 %v344
    %v1660 = vunpack.c.h.b16 %v344
    %v1661 = vunpack.c.l.b16 %v345
    %v1662 = vunpack.c.h.b16 %v345
    %v1663 = vunpack.c.l.b16 %v346
    %v1664 = vunpack.c.h.b16 %v346
    %v1665 = vunpack.c.l.b16 %v347
    %v1666 = vunpack.c.h.b16 %v347
    %v1667 = vunpack.c.l.b16 %v348
    %v1668 = vunpack.c.h.b16 %v348
    %v1669 = vunpack.c.l.b16 %v349
    %v1670 = vunpack.c.h.b16 %v349
    %v1671 = vunpack.c.l.b16 %v350
    %v1672 = vunpack.c.h.b16 %v350
    %v1673 = vunpack.c.l.b16 %v351
    %v1674 = vunpack.c.h.b16 %v351
    %v1675 = vunpack.c.l.b16 %v352
    %v1676 = vunpack.c.h.b16 %v352
    %v1677 = vunpack.c.l.b16 %v353
    %v1678 = vunpack.c.h.b16 %v353
    %v1679 = vunpack.c.l.b16 %v354
    %v1680 = vunpack.c.h.b16 %v354
    %v1681 = vunpack.c.l.b16 %v355
    %v1682 = vunpack.c.h.b16 %v355
    %v1683 = vunpack.c.l.b16 %v356
    %v1684 = vunpack.c.h.b16 %v356
    %v1685 = vunpack.c.l.b16 %v357
    %v1686 = vunpack.c.h.b16 %v357
    %v1687 = vunpack.c.l.b16 %v358
    %v1688 = vunpack.c.h.b16 %v358
    %v1689 = vunpack.c.l.b16 %v359
    %v1690 = vunpack.c.h.b16 %v359
    %v1691 = vunpack.c.l.b16 %v360
    %v1692 = vunpack.c.h.b16 %v360
    %v1693 = vunpack.c.l.b16 %v361
    %v1694 = vunpack.c.h.b16 %v361
    %v1695 = vunpack.c.l.b16 %v362
    %v1696 = vunpack.c.h.b16 %v362
    %v1697 = vunpack.c.l.b16 %v363
    %v1698 = vunpack.c.h.b16 %v363
    %v1699 = vunpack.c.l.b16 %v364
    %v1700 = vunpack.c.h.b16 %v364
    %v1701 = vunpack.c.l.b16 %v365
    %v1702 = vunpack.c.h.b16 %v365
    %v1703 = vunpack.c.l.b16 %v366
    %v1704 = vunpack.c.h.b16 %v366
    %v1705 = vunpack.c.l.b16 %v367
    %v1706 = vunpack.c.h.b16 %v367
    %v1707 = vunpack.c.l.b16 %v368
    %v1708 = vunpack.c.h.b16 %v368
    %v1709 = vunpack.c.l.b16 %v369
    %v1710 = vunpack.c.h.b16 %v369
    %v1711 = vunpack.c.l.b16 %v370
    %v1712 = vunpack.c.h.b16 %v370
    %v1713 = vunpack.c.l.b16 %v371
    %v1714 = vunpack.c.h.b16 %v371
    %v1715 = vunpack.c.l.b16 %v372
    %v1716 = vunpack.c.h.b16 %v372
    %v1717 = vunpack.c.l.b16 %v373
    %v1718 = vunpack.c.h.b16 %v373
    %v1719 = vunpack.c.l.b16 %v374
    %v1720 = vunpack.c.h.b16 %v374
    %v1721 = vunpack.c.l.b16 %v375
    %v1722 = vunpack.c.h.b16 %v375
    %v1723 = vunpack.c.l.b16 %v376
    %v1724 = vunpack.c.h.b16 %v376
    %v1725 = vunpack.c.l.b16 %v377
    %v1726 = vunpack.c.h.b16 %v377
    %v1727 = vunpack.c.l.b16 %v378
    %v1728 = vunpack.c.h.b16 %v378
    %v1729 = vunpack.c.l.b16 %v379
    %v1730 = vunpack.c.h.b16 %v379
    %v1731 = vunpack.c.l.b16 %v380
    %v1732 = vunpack.c.h.b16 %v380
    %v1733 = vunpack.c.l.b16 %v381
    %v1734 = vunpack.c.h.b16 %v381
    %v1735 = vunpack.c.l.b16 %v382
    %v1736 = vunpack.c.h.b16 %v382
    %v1737 = vunpack.c.l.b16 %v383
    %v1738 = vunpack.c.h.b16 %v383
    %v1739 = vunpack.c.l.b16 %v384
    %v1740 = vunpack.c.h.b16 %v384
    %v1741 = vunpack.c.l.b16 %v385
    %v1742 = vunpack.c.h.b16 %v385
    %v1743 = vunpack.c.l.b16 %v386
    %v1744 = vunpack.c.h.b16 %v386
    %v1745 = vunpack.c.l.b16 %v387
    %v1746 = vunpack.c.h.b16 %v387
    %v1747 = vunpack.c.l.b16 %v388
    %v1748 = vunpack.c.h.b16 %v388
    %v1749 = vunpack.c.l.b16 %v389
    %v1750 = vunpack.c.h.b16 %v389
    %v1751 = vunpack.c.l.b16 %v390
    %v1752 = vunpack.c.h.b16 %v390
    %v1753 = vunpack.c.l.b16 %v391
    %v1754 = vunpack.c.h.b16 %v391
    %v1755 = vunpack.c.l.b16 %v392
    %v1756 = vunpack.c.h.b16 %v392
    %v1757 = vunpack.c.l.b16 %v393
    %v1758 = vunpack.c.h.b16 %v393
    %v1759 = vunpack.c.l.b16 %v394
    %v1760 = vunpack.c.h.b16 %v394
    %v1761 = vunpack.c.l.b16 %v395
    %v1762 = vunpack.c.h.b16 %v395
    %v1763 = vunpack.c.l.b16 %v396
    %v1764 = vunpack.c.h.b16 %v396
    %v1765 = vunpack.c.l.b16 %v397
    %v1766 = vunpack.c.h.b16 %v397
    %v1767 = vunpack.c.l.b16 %v398
    %v1768 = vunpack.c.h.b16 %v398
    %v1769 = vunpack.c.l.b16 %v399
    %v1770 = vunpack.c.h.b16 %v399
    %v1771 = vunpack.c.l.b16 %v400
    %v1772 = vunpack.c.h.b16 %v400
    %v1773 = vunpack.c.l.b16 %v401
    %v1774 = vunpack.c.h.b16 %v401
    %v1775 = vunpack.c.l.b16 %v402
    %v1776 = vunpack.c.h.b16 %v402
    %v1777 = vunpack.c.l.b16 %v403
    %v1778 = vunpack.c.h.b16 %v403
    %v1779 = vunpack.c.l.b16 %v404
    %v1780 = vunpack.c.h.b16 %v404
    %v1781 = vunpack.c.l.b16 %v405
    %v1782 = vunpack.c.h.b16 %v405
    %v1783 = vunpack.c.l.b16 %v406
    %v1784 = vunpack.c.h.b16 %v406
    %v1785 = vunpack.c.l.b16 %v407
    %v1786 = vunpack.c.h.b16 %v407
    %v1787 = vunpack.c.l.b16 %v408
    %v1788 = vunpack.c.h.b16 %v408
    %v1789 = vunpack.c.l.b16 %v409
    %v1790 = vunpack.c.h.b16 %v409
    %v1791 = vunpack.c.l.b16 %v410
    %v1792 = vunpack.c.h.b16 %v410
    %v1793 = vunpack.c.l.b16 %v411
    %v1794 = vunpack.c.h.b16 %v411
    %v1795 = vunpack.c.l.b16 %v412
    %v1796 = vunpack.c.h.b16 %v412
    %v1797 = vunpack.c.l.b16 %v413
    %v1798 = vunpack.c.h.b16 %v413
    %v1799 = vunpack.c.l.b16 %v414
    %v1800 = vunpack.c.h.b16 %v414
    %v1801 = vunpack.c.l.b16 %v415
    %v1802 = vunpack.c.h.b16 %v415
    %v1803 = vunpack.c.l.b16 %v416
    %v1804 = vunpack.c.h.b16 %v416
    %v1805 = vunpack.c.l.b16 %v417
    %v1806 = vunpack.c.h.b16 %v417
    %v1807 = vunpack.c.l.b16 %v418
    %v1808 = vunpack.c.h.b16 %v418
    %v1809 = vunpack.c.l.b16 %v419
    %v1810 = vunpack.c.h.b16 %v419
    %v1811 = vunpack.c.l.b16 %v420
    %v1812 = vunpack.c.h.b16 %v420
    %v1813 = vunpack.c.l.b16 %v421
    %v1814 = vunpack.c.h.b16 %v421
    %v1815 = vunpack.c.l.b16 %v422
    %v1816 = vunpack.c.h.b16 %v422
    %v1817 = vunpack.c.l.b16 %v423
    %v1818 = vunpack.c.h.b16 %v423
    %v1819 = vunpack.c.l.b16 %v424
    %v1820 = vunpack.c.h.b16 %v424
    %v1821 = vunpack.c.l.b16 %v425
    %v1822 = vunpack.c.h.b16 %v425
    %v1823 = vunpack.c.l.b16 %v426
    %v1824 = vunpack.c.h.b16 %v426
    %v1825 = vunpack.c.l.b16 %v427
    %v1826 = vunpack.c.h.b16 %v427
    %v1827 = vunpack.c.l.b16 %v428
    %v1828 = vunpack.c.h.b16 %v428
    %v1829 = vunpack.c.l.b16 %v429
    %v1830 = vunpack.c.h.b16 %v429
    %v1831 = vunpack.c.l.b16 %v430
    %v1832 = vunpack.c.h.b16 %v430
    %v1833 = vunpack.c.l.b16 %v431
    %v1834 = vunpack.c.h.b16 %v431
    %v1835 = vunpack.c.l.b16 %v432
    %v1836 = vunpack.c.h.b16 %v432
    %v1837 = vunpack.c.l.b16 %v433
    %v1838 = vunpack.c.h.b16 %v433
    %v1839 = vunpack.c.l.b16 %v434
    %v1840 = vunpack.c.h.b16 %v434
    %v1841 = vunpack.c.l.b16 %v435
    %v1842 = vunpack.c.h.b16 %v435
    %v1843 = vunpack.c.l.b16 %v436
    %v1844 = vunpack.c.h.b16 %v436
    %v1845 = vunpack.c.l.b16 %v437
    %v1846 = vunpack.c.h.b16 %v437
    %v1847 = vunpack.c.l.b16 %v438
    %v1848 = vunpack.c.h.b16 %v438
    %v1849 = vunpack.c.l.b16 %v439
    %v1850 = vunpack.c.h.b16 %v439
    %v1851 = vunpack.c.l.b16 %v440
    %v1852 = vunpack.c.h.b16 %v440
    %v1853 = vunpack.c.l.b16 %v441
    %v1854 = vunpack.c.h.b16 %v441
    %v1855 = vunpack.c.l.b16 %v442
    %v1856 = vunpack.c.h.b16 %v442
    %v1857 = vunpack.c.l.b16 %v443
    %v1858 = vunpack.c.h.b16 %v443
    %v1859 = vunpack.c.l.b16 %v444
    %v1860 = vunpack.c.h.b16 %v444
    %v1861 = vunpack.c.l.b16 %v445
    %v1862 = vunpack.c.h.b16 %v445
    %v1863 = vunpack.c.l.b16 %v446
    %v1864 = vunpack.c.h.b16 %v446
    %v1865 = vunpack.c.l.b16 %v447
    %v1866 = vunpack.c.h.b16 %v447
    %v1867 = vunpack.c.l.b16 %v448
    %v1868 = vunpack.c.h.b16 %v448
    %v1869 = vunpack.c.l.b16 %v449
    %v1870 = vunpack.c.h.b16 %v449
    %v1871 = vunpack.c.l.b16 %v450
    %v1872 = vunpack.c.h.b16 %v450
    %v1873 = vunpack.c.l.b16 %v451
    %v1874 = vunpack.c.h.b16 %v451
    %v1875 = vunpack.c.l.b16 %v452
    %v1876 = vunpack.c.h.b16 %v452
    %v1877 = vunpack.c.l.b16 %v453
    %v1878 = vunpack.c.h.b16 %v453
    %v1879 = vunpack.c.l.b16 %v454
    %v1880 = vunpack.c.h.b16 %v454
    %v1881 = vunpack.c.l.b16 %v455
    %v1882 = vunpack.c.h.b16 %v455
    %v1883 = vunpack.c.l.b16 %v456
    %v1884 = vunpack.c.h.b16 %v456
    %v1885 = vunpack.c.l.b16 %v457
    %v1886 = vunpack.c.h.b16 %v457
    %v1887 = vunpack.c.l.b16 %v458
    %v1888 = vunpack.c.h.b16 %v458
    %v1889 = vunpack.c.l.b16 %v459
    %v1890 = vunpack.c.h.b16 %v459
    %v1891 = vunpack.c.l.b16 %v460
    %v1892 = vunpack.c.h.b16 %v460
    %v1893 = vunpack.c.l.b16 %v461
    %v1894 = vunpack.c.h.b16 %v461
    %v1895 = vunpack.c.l.b16 %v462
    %v1896 = vunpack.c.h.b16 %v462
    %v1897 = vunpack.c.l.b16 %v463
    %v1898 = vunpack.c.h.b16 %v463
    %v1899 = vunpack.c.l.b16 %v464
    %v1900 = vunpack.c.h.b16 %v464
    %v1901 = vunpack.c.l.b16 %v465
    %v1902 = vunpack.c.h.b16 %v465
    %v1903 = vunpack.c.l.b16 %v466
    %v1904 = vunpack.c.h.b16 %v466
    %v1905 = vunpack.c.l.b16 %v467
    %v1906 = vunpack.c.h.b16 %v467
    %v1907 = vunpack.c.l.b16 %v468
    %v1908 = vunpack.c.h.b16 %v468
    %v1909 = vunpack.c.l.b16 %v469
    %v1910 = vunpack.c.h.b16 %v469
    %v1911 = vunpack.c.l.b16 %v470
    %v1912 = vunpack.c.h.b16 %v470
    %v1913 = vunpack.c.l.b16 %v471
    %v1914 = vunpack.c.h.b16 %v471
    %v1915 = vunpack.c.l.b16 %v472
    %v1916 = vunpack.c.h.b16 %v472
    %v1917 = vunpack.c.l.b16 %v473
    %v1918 = vunpack.c.h.b16 %v473
    %v1919 = vunpack.c.l.b16 %v474
    %v1920 = vunpack.c.h.b16 %v474
    %v1921 = vunpack.c.l.b16 %v475
    %v1922 = vunpack.c.h.b16 %v475
    %v1923 = vunpack.c.l.b16 %v476
    %v1924 = vunpack.c.h.b16 %v476
    %v1925 = vunpack.c.l.b16 %v477
    %v1926 = vunpack.c.h.b16 %v477
    %v1927 = vunpack.c.l.b16 %v478
    %v1928 = vunpack.c.h.b16 %v478
    %v1929 = vunpack.c.l.b16 %v479
    %v1930 = vunpack.c.h.b16 %v479
    %v1931 = vunpack.c.l.b16 %v480
    %v1932 = vunpack.c.h.b16 %v480
    %v1933 = vunpack.c.l.b16 %v481
    %v1934 = vunpack.c.h.b16 %v481
    %v1935 = vunpack.c.l.b16 %v482
    %v1936 = vunpack.c.h.b16 %v482
    %v1937 = vunpack.c.l.b16 %v483
    %v1938 = vunpack.c.h.b16 %v483
    %v1939 = vunpack.c.l.b16 %v484
    %v1940 = vunpack.c.h.b16 %v484
    %v1941 = vunpack.c.l.b16 %v485
    %v1942 = vunpack.c.h.b16 %v485
    %v1943 = vunpack.c.l.b16 %v486
    %v1944 = vunpack.c.h.b16 %v486
    %v1945 = vunpack.c.l.b16 %v487
    %v1946 = vunpack.c.h.b16 %v487
    %v1947 = vunpack.c.l.b16 %v488
    %v1948 = vunpack.c.h.b16 %v488
    %v1949 = vunpack.c.l.b16 %v489
    %v1950 = vunpack.c.h.b16 %v489
    %v1951 = vunpack.c.l.b16 %v490
    %v1952 = vunpack.c.h.b16 %v490
    %v1953 = vunpack.c.l.b16 %v491
    %v1954 = vunpack.c.h.b16 %v491
    %v1955 = vunpack.c.l.b16 %v492
    %v1956 = vunpack.c.h.b16 %v492
    %v1957 = vunpack.c.l.b16 %v493
    %v1958 = vunpack.c.h.b16 %v493
    %v1959 = vunpack.c.l.b16 %v494
    %v1960 = vunpack.c.h.b16 %v494
    %v1961 = vunpack.c.l.b16 %v495
    %v1962 = vunpack.c.h.b16 %v495
    %v1963 = vunpack.c.l.b16 %v496
    %v1964 = vunpack.c.h.b16 %v496
    %v1965 = vunpack.c.l.b16 %v497
    %v1966 = vunpack.c.h.b16 %v497
    %v1967 = vunpack.c.l.b16 %v498
    %v1968 = vunpack.c.h.b16 %v498
    %v1969 = vunpack.c.l.b16 %v499
    %v1970 = vunpack.c.h.b16 %v499
    %v1971 = vunpack.c.l.b16 %v500
    %v1972 = vunpack.c.h.b16 %v500
    %v1973 = vunpack.c.l.b16 %v501
    %v1974 = vunpack.c.h.b16 %v501
    %v1975 = vunpack.c.l.b16 %v502
    %v1976 = vunpack.c.h.b16 %v502
    %v1977 = vunpack.c.l.b16 %v503
    %v1978 = vunpack.c.h.b16 %v503
    %v1979 = vunpack.c.l.b16 %v504
    %v1980 = vunpack.c.h.b16 %v504
    %v1981 = vunpack.c.l.b16 %v505
    %v1982 = vunpack.c.h.b16 %v505
    %v1983 = vunpack.c.l.b16 %v506
    %v1984 = vunpack.c.h.b16 %v506
    %v1985 = vunpack.c.l.b16 %v507
    %v1986 = vunpack.c.h.b16 %v507
    %v1987 = vunpack.c.l.b16 %v508
    %v1988 = vunpack.c.h.b16 %v508
    %v1989 = vunpack.c.l.b16 %v509
    %v1990 = vunpack.c.h.b16 %v509
    %v1991 = vunpack.c.l.b16 %v510
    %v1992 = vunpack.c.h.b16 %v510
    %v1993 = vunpack.c.l.b16 %v511
    %v1994 = vunpack.c.h.b16 %v511
    %v1995 = vunpack.c.l.b16 %v512
    %v1996 = vunpack.c.h.b16 %v512
    %v1997 = vunpack.c.l.b16 %v513
    %v1998 = vunpack.c.h.b16 %v513
    %v1999 = vunpack.c.l.b16 %v514
    %v2000 = vunpack.c.h.b16 %v514
    %v2001 = vunpack.c.l.b16 %v515
    %v2002 = vunpack.c.h.b16 %v515
    %v2003 = vunpack.c.l.b16 %v516
    %v2004 = vunpack.c.h.b16 %v516
    %v2005 = vunpack.c.l.b16 %v517
    %v2006 = vunpack.c.h.b16 %v517
    %v2007 = vunpack.c.l.b16 %v518
    %v2008 = vunpack.c.h.b16 %v518
    %v2009 = vunpack.c.l.b16 %v519
    %v2010 = vunpack.c.h.b16 %v519
    %v2011 = vunpack.c.l.b16 %v520
    %v2012 = vunpack.c.h.b16 %v520
    %v2013 = vunpack.c.l.b16 %v521
    %v2014 = vunpack.c.h.b16 %v521
    %v2015 = vunpack.c.l.b16 %v522
    %v2016 = vunpack.c.h.b16 %v522
    %v2017 = vunpack.c.l.b16 %v523
    %v2018 = vunpack.c.h.b16 %v523
    %v2019 = vunpack.c.l.b16 %v524
    %v2020 = vunpack.c.h.b16 %v524
    %v2021 = vunpack.c.l.b16 %v525
    %v2022 = vunpack.c.h.b16 %v525
    %v2023 = vunpack.c.l.b16 %v526
    %v2024 = vunpack.c.h.b16 %v526
    %v2025 = vunpack.c.l.b16 %v527
    %v2026 = vunpack.c.h.b16 %v527
    %v2027 = vunpack.c.l.b16 %v528
    %v2028 = vunpack.c.h.b16 %v528
    %v2029 = vunpack.c.l.b16 %v529
    %v2030 = vunpack.c.h.b16 %v529
    %v2031 = vunpack.c.l.b16 %v530
    %v2032 = vunpack.c.h.b16 %v530
    %v2033 = vunpack.c.l.b16 %v531
    %v2034 = vunpack.c.h.b16 %v531
    %v2035 = vunpack.c.l.b16 %v532
    %v2036 = vunpack.c.h.b16 %v532
    %v2037 = vunpack.c.l.b16 %v533
    %v2038 = vunpack.c.h.b16 %v533
    %v2039 = vunpack.c.l.b16 %v534
    %v2040 = vunpack.c.h.b16 %v534
    %v2041 = vunpack.c.l.b16 %v535
    %v2042 = vunpack.c.h.b16 %v535
    %v2043 = vunpack.c.l.b16 %v536
    %v2044 = vunpack.c.h.b16 %v536
    %v2045 = vunpack.c.l.b16 %v537
    %v2046 = vunpack.c.h.b16 %v537
    %v2047 = vunpack.c.l.b16 %v538
    %v2048 = vunpack.c.h.b16 %v538
    %v2049 = vunpack.c.l.b16 %v539
    %v2050 = vunpack.c.h.b16 %v539
    %v2051 = vunpack.c.l.b16 %v540
    %v2052 = vunpack.c.h.b16 %v540
    %v2053 = vunpack.c.l.b16 %v541
    %v2054 = vunpack.c.h.b16 %v541
    %v2055 = vunpack.c.l.b16 %v542
    %v2056 = vunpack.c.h.b16 %v542
    %v2057 = vunpack.c.l.b16 %v543
    %v2058 = vunpack.c.h.b16 %v543
    %v2059 = vunpack.c.l.b16 %v544
    %v2060 = vunpack.c.h.b16 %v544
    %v2061 = vunpack.c.l.b16 %v545
    %v2062 = vunpack.c.h.b16 %v545
    %v2063 = vunpack.c.l.b16 %v546
    %v2064 = vunpack.c.h.b16 %v546
    %v2065 = vunpack.c.l.b16 %v547
    %v2066 = vunpack.c.h.b16 %v547
    %v2067 = vunpack.c.l.b16 %v548
    %v2068 = vunpack.c.h.b16 %v548
    %v2069 = vunpack.c.l.b16 %v549
    %v2070 = vunpack.c.h.b16 %v549
    %v2071 = vunpack.c.l.b16 %v550
    %v2072 = vunpack.c.h.b16 %v550
    %v2073 = vunpack.c.l.b16 %v551
    %v2074 = vunpack.c.h.b16 %v551
    %v2075 = vunpack.c.l.b16 %v552
    %v2076 = vunpack.c.h.b16 %v552
    %v2077 = vunpack.c.l.b16 %v553
    %v2078 = vunpack.c.h.b16 %v553
    %v2079 = vunpack.c.l.b16 %v554
    %v2080 = vunpack.c.h.b16 %v554
    %v2081 = vunpack.c.l.b16 %v555
    %v2082 = vunpack.c.h.b16 %v555
    %v2083 = vunpack.c.l.b16 %v556
    %v2084 = vunpack.c.h.b16 %v556
    %v2085 = vunpack.c.l.b16 %v557
    %v2086 = vunpack.c.h.b16 %v557
    %v2087 = vunpack.c.l.b16 %v558
    %v2088 = vunpack.c.h.b16 %v558
    %v2089 = vunpack.c.l.b16 %v559
    %v2090 = vunpack.c.h.b16 %v559
    %v2091 = vunpack.c.l.b16 %v560
    %v2092 = vunpack.c.h.b16 %v560
    %v2093 = vunpack.c.l.b16 %v561
    %v2094 = vunpack.c.h.b16 %v561
    %v2095 = vunpack.c.l.b16 %v562
    %v2096 = vunpack.c.h.b16 %v562
    %v2097 = vunpack.c.l.b16 %v563
    %v2098 = vunpack.c.h.b16 %v563
    %v2099 = vunpack.c.l.b16 %v564
    %v2100 = vunpack.c.h.b16 %v564
    %v2101 = vunpack.c.l.b16 %v565
    %v2102 = vunpack.c.h.b16 %v565
    %v2103 = vunpack.c.l.b16 %v566
    %v2104 = vunpack.c.h.b16 %v566
    %v2105 = vunpack.c.l.b16 %v567
    %v2106 = vunpack.c.h.b16 %v567
    %v2107 = vunpack.c.l.b16 %v568
    %v2108 = vunpack.c.h.b16 %v568
    %v2109 = vunpack.c.l.b16 %v569
    %v2110 = vunpack.c.h.b16 %v569
    %v2111 = vunpack.c.l.b16 %v570
    %v2112 = vunpack.c.h.b16 %v570
    %v2113 = vunpack.c.l.b16 %v571
    %v2114 = vunpack.c.h.b16 %v571
    %v2115 = vunpack.c.l.b16 %v572
    %v2116 = vunpack.c.h.b16 %v572
    %v2117 = vunpack.c.l.b16 %v573
    %v2118 = vunpack.c.h.b16 %v573
    %v2119 = vunpack.c.l.b16 %v574
    %v2120 = vunpack.c.h.b16 %v574
    %v2121 = vunpack.c.l.b16 %v575
    %v2122 = vunpack.c.h.b16 %v575
    %v2123 = vunpack.c.l.b16 %v576
    %v2124 = vunpack.c.h.b16 %v576
    %v2125 = vunpack.c.l.b16 %v577
    %v2126 = vunpack.c.h.b16 %v577
    %v2127 = vunpack.c.l.b16 %v578
    %v2128 = vunpack.c.h.b16 %v578
    %v2129 = vunpack.c.l.b16 %v579
    %v2130 = vunpack.c.h.b16 %v579
    %v2131 = vunpack.c.l.b16 %v580
    %v2132 = vunpack.c.h.b16 %v580
    %v2133 = vunpack.c.l.b16 %v581
    %v2134 = vunpack.c.h.b16 %v581
    %v2135 = vunpack.c.l.b16 %v582
    %v2136 = vunpack.c.h.b16 %v582
    %v2137 = vunpack.c.l.b16 %v583
    %v2138 = vunpack.c.h.b16 %v583
    %v2139 = vunpack.c.l.b16 %v584
    %v2140 = vunpack.c.h.b16 %v584
    %v2141 = vunpack.c.l.b16 %v585
    %v2142 = vunpack.c.h.b16 %v585
    %v2143 = vunpack.c.l.b16 %v586
    %v2144 = vunpack.c.h.b16 %v586
    %v2145 = vunpack.c.l.b16 %v587
    %v2146 = vunpack.c.h.b16 %v587
    %v2147 = vunpack.c.l.b16 %v588
    %v2148 = vunpack.c.h.b16 %v588
    %v2149 = vunpack.c.l.b16 %v589
    %v2150 = vunpack.c.h.b16 %v589
    %v2151 = vunpack.c.l.b16 %v590
    %v2152 = vunpack.c.h.b16 %v590
    %v2153 = vunpack.c.l.b16 %v591
    %v2154 = vunpack.c.h.b16 %v591
    %v2155 = vunpack.c.l.b16 %v592
    %v2156 = vunpack.c.h.b16 %v592
    %v2157 = vpack.c.b16 %v1141, %v1133
    %v2158 = vpack.c.b16 %v1142, %v1134
    %v2159 = vpack.c.b16 %v1143, %v1135
    %v2160 = vpack.c.b16 %v1144, %v1136
    %v2161 = vpack.c.b16 %v1145, %v1137
    %v2162 = vpack.c.b16 %v1146, %v1138
    %v2163 = vpack.c.b16 %v1147, %v1139
    %v2164 = vpack.c.b16 %v1148, %v1140
    %v2165 = vpack.c.b16 %v1157, %v1149
    %v2166 = vpack.c.b16 %v1158, %v1150
    %v2167 = vpack.c.b16 %v1159, %v1151
    %v2168 = vpack.c.b16 %v1160, %v1152
    %v2169 = vpack.c.b16 %v1161, %v1153
    %v2170 = vpack.c.b16 %v1162, %v1154
    %v2171 = vpack.c.b16 %v1163, %v1155
    %v2172 = vpack.c.b16 %v1164, %v1156
    %v2173 = vpack.c.b16 %v1173, %v1165
    %v2174 = vpack.c.b16 %v1174, %v1166
    %v2175 = vpack.c.b16 %v1175, %v1167
    %v2176 = vpack.c.b16 %v1176, %v1168
    %v2177 = vpack.c.b16 %v1177, %v1169
    %v2178 = vpack.c.b16 %v1178, %v1170
    %v2179 = vpack.c.b16 %v1179, %v1171
    %v2180 = vpack.c.b16 %v1180, %v1172
    %v2181 = vpack.c.b16 %v1189, %v1181
    %v2182 = vpack.c.b16 %v1190, %v1182
    %v2183 = vpack.c.b16 %v1191, %v1183
    %v2184 = vpack.c.b16 %v1192, %v1184
    %v2185 = vpack.c.b16 %v1193, %v1185
    %v2186 = vpack.c.b16 %v1194, %v1186
    %v2187 = vpack.c.b16 %v1195, %v1187
    %v2188 = vpack.c.b16 %v1196, %v1188
    %v2189 = vpack.c.b16 %v1205, %v1197
    %v2190 = vpack.c.b16 %v1206, %v1198
    %v2191 = vpack.c.b16 %v1207, %v1199
    %v2192 = vpack.c.b16 %v1208, %v1200
    %v2193 = vpack.c.b16 %v1209, %v1201
    %v2194 = vpack.c.b16 %v1210, %v1202
    %v2195 = vpack.c.b16 %v1211, %v1203
    %v2196 = vpack.c.b16 %v1212, %v1204
    %v2197 = vpack.c.b16 %v1221, %v1213
    %v2198 = vpack.c.b16 %v1222, %v1214
    %v2199 = vpack.c.b16 %v1223, %v1215
    %v2200 = vpack.c.b16 %v1224, %v1216
    %v2201 = vpack.c.b16 %v1225, %v1217
    %v2202 = vpack.c.b16 %v1226, %v1218
    %v2203 = vpack.c.b16 %v1227, %v1219
    %v2204 = vpack.c.b16 %v1228, %v1220
    %v2205 = vpack.c.b16 %v1237, %v1229
    %v2206 = vpack.c.b16 %v1238, %v1230
    %v2207 = vpack.c.b16 %v1239, %v1231
    %v2208 = vpack.c.b16 %v1240, %v1232
    %v2209 = vpack.c.b16 %v1241, %v1233
    %v2210 = vpack.c.b16 %v1242, %v1234
    %v2211 = vpack.c.b16 %v1243, %v1235
    %v2212 = vpack.c.b16 %v1244, %v1236
    %v2213 = vpack.c.b16 %v1253, %v1245
    %v2214 = vpack.c.b16 %v1254, %v1246
    %v2215 = vpack.c.b16 %v1255, %v1247
    %v2216 = vpack.c.b16 %v1256, %v1248
    %v2217 = vpack.c.b16 %v1257, %v1249
    %v2218 = vpack.c.b16 %v1258, %v1250
    %v2219 = vpack.c.b16 %v1259, %v1251
    %v2220 = vpack.c.b16 %v1260, %v1252
    %v2221 = vpack.c.b16 %v1269, %v1261
    %v2222 = vpack.c.b16 %v1270, %v1262
    %v2223 = vpack.c.b16 %v1271, %v1263
    %v2224 = vpack.c.b16 %v1272, %v1264
    %v2225 = vpack.c.b16 %v1273, %v1265
    %v2226 = vpack.c.b16 %v1274, %v1266
    %v2227 = vpack.c.b16 %v1275, %v1267
    %v2228 = vpack.c.b16 %v1276, %v1268
    %v2229 = vpack.c.b16 %v1285, %v1277
    %v2230 = vpack.c.b16 %v1286, %v1278
    %v2231 = vpack.c.b16 %v1287, %v1279
    %v2232 = vpack.c.b16 %v1288, %v1280
    %v2233 = vpack.c.b16 %v1289, %v1281
    %v2234 = vpack.c.b16 %v1290, %v1282
    %v2235 = vpack.c.b16 %v1291, %v1283
    %v2236 = vpack.c.b16 %v1292, %v1284
    %v2237 = vpack.c.b16 %v1301, %v1293
    %v2238 = vpack.c.b16 %v1302, %v1294
    %v2239 = vpack.c.b16 %v1303, %v1295
    %v2240 = vpack.c.b16 %v1304, %v1296
    %v2241 = vpack.c.b16 %v1305, %v1297
    %v2242 = vpack.c.b16 %v1306, %v1298
    %v2243 = vpack.c.b16 %v1307, %v1299
    %v2244 = vpack.c.b16 %v1308, %v1300
    %v2245 = vpack.c.b16 %v1317, %v1309
    %v2246 = vpack.c.b16 %v1318, %v1310
    %v2247 = vpack.c.b16 %v1319, %v1311
    %v2248 = vpack.c.b16 %v1320, %v1312
    %v2249 = vpack.c.b16 %v1321, %v1313
    %v2250 = vpack.c.b16 %v1322, %v1314
    %v2251 = vpack.c.b16 %v1323, %v1315
    %v2252 = vpack.c.b16 %v1324, %v1316
    %v2253 = vpack.c.b16 %v1333, %v1325
    %v2254 = vpack.c.b16 %v1334, %v1326
    %v2255 = vpack.c.b16 %v1335, %v1327
    %v2256 = vpack.c.b16 %v1336, %v1328
    %v2257 = vpack.c.b16 %v1337, %v1329
    %v2258 = vpack.c.b16 %v1338, %v1330
    %v2259 = vpack.c.b16 %v1339, %v1331
    %v2260 = vpack.c.b16 %v1340, %v1332
    %v2261 = vpack.c.b16 %v1349, %v1341
    %v2262 = vpack.c.b16 %v1350, %v1342
    %v2263 = vpack.c.b16 %v1351, %v1343
    %v2264 = vpack.c.b16 %v1352, %v1344
    %v2265 = vpack.c.b16 %v1353, %v1345
    %v2266 = vpack.c.b16 %v1354, %v1346
    %v2267 = vpack.c.b16 %v1355, %v1347
    %v2268 = vpack.c.b16 %v1356, %v1348
    %v2269 = vpack.c.b16 %v1365, %v1357
    %v2270 = vpack.c.b16 %v1366, %v1358
    %v2271 = vpack.c.b16 %v1367, %v1359
    %v2272 = vpack.c.b16 %v1368, %v1360
    %v2273 = vpack.c.b16 %v1369, %v1361
    %v2274 = vpack.c.b16 %v1370, %v1362
    %v2275 = vpack.c.b16 %v1371, %v1363
    %v2276 = vpack.c.b16 %v1372, %v1364
    %v2277 = vpack.c.b16 %v1381, %v1373
    %v2278 = vpack.c.b16 %v1382, %v1374
    %v2279 = vpack.c.b16 %v1383, %v1375
    %v2280 = vpack.c.b16 %v1384, %v1376
    %v2281 = vpack.c.b16 %v1385, %v1377
    %v2282 = vpack.c.b16 %v1386, %v1378
    %v2283 = vpack.c.b16 %v1387, %v1379
    %v2284 = vpack.c.b16 %v1388, %v1380
    %v2285 = vpack.c.b16 %v1397, %v1389
    %v2286 = vpack.c.b16 %v1398, %v1390
    %v2287 = vpack.c.b16 %v1399, %v1391
    %v2288 = vpack.c.b16 %v1400, %v1392
    %v2289 = vpack.c.b16 %v1401, %v1393
    %v2290 = vpack.c.b16 %v1402, %v1394
    %v2291 = vpack.c.b16 %v1403, %v1395
    %v2292 = vpack.c.b16 %v1404, %v1396
    %v2293 = vpack.c.b16 %v1413, %v1405
    %v2294 = vpack.c.b16 %v1414, %v1406
    %v2295 = vpack.c.b16 %v1415, %v1407
    %v2296 = vpack.c.b16 %v1416, %v1408
    %v2297 = vpack.c.b16 %v1417, %v1409
    %v2298 = vpack.c.b16 %v1418, %v1410
    %v2299 = vpack.c.b16 %v1419, %v1411
    %v2300 = vpack.c.b16 %v1420, %v1412
    %v2301 = vpack.c.b16 %v1429, %v1421
    %v2302 = vpack.c.b16 %v1430, %v1422
    %v2303 = vpack.c.b16 %v1431, %v1423
    %v2304 = vpack.c.b16 %v1432, %v1424
    %v2305 = vpack.c.b16 %v1433, %v1425
    %v2306 = vpack.c.b16 %v1434, %v1426
    %v2307 = vpack.c.b16 %v1435, %v1427
    %v2308 = vpack.c.b16 %v1436, %v1428
    %v2309 = vpack.c.b16 %v1445, %v1437
    %v2310 = vpack.c.b16 %v1446, %v1438
    %v2311 = vpack.c.b16 %v1447, %v1439
    %v2312 = vpack.c.b16 %v1448, %v1440
    %v2313 = vpack.c.b16 %v1449, %v1441
    %v2314 = vpack.c.b16 %v1450, %v1442
    %v2315 = vpack.c.b16 %v1451, %v1443
    %v2316 = vpack.c.b16 %v1452, %v1444
    %v2317 = vpack.c.b16 %v1461, %v1453
    %v2318 = vpack.c.b16 %v1462, %v1454
    %v2319 = vpack.c.b16 %v1463, %v1455
    %v2320 = vpack.c.b16 %v1464, %v1456
    %v2321 = vpack.c.b16 %v1465, %v1457
    %v2322 = vpack.c.b16 %v1466, %v1458
    %v2323 = vpack.c.b16 %v1467, %v1459
    %v2324 = vpack.c.b16 %v1468, %v1460
    %v2325 = vpack.c.b16 %v1477, %v1469
    %v2326 = vpack.c.b16 %v1478, %v1470
    %v2327 = vpack.c.b16 %v1479, %v1471
    %v2328 = vpack.c.b16 %v1480, %v1472
    %v2329 = vpack.c.b16 %v1481, %v1473
    %v2330 = vpack.c.b16 %v1482, %v1474
    %v2331 = vpack.c.b16 %v1483, %v1475
    %v2332 = vpack.c.b16 %v1484, %v1476
    %v2333 = vpack.c.b16 %v1493, %v1485
    %v2334 = vpack.c.b16 %v1494, %v1486
    %v2335 = vpack.c.b16 %v1495, %v1487
    %v2336 = vpack.c.b16 %v1496, %v1488
    %v2337 = vpack.c.b16 %v1497, %v1489
    %v2338 = vpack.c.b16 %v1498, %v1490
    %v2339 = vpack.c.b16 %v1499, %v1491
    %v2340 = vpack.c.b16 %v1500, %v1492
    %v2341 = vpack.c.b16 %v1509, %v1501
    %v2342 = vpack.c.b16 %v1510, %v1502
    %v2343 = vpack.c.b16 %v1511, %v1503
    %v2344 = vpack.c.b16 %v1512, %v1504
    %v2345 = vpack.c.b16 %v1513, %v1505
    %v2346 = vpack.c.b16 %v1514, %v1506
    %v2347 = vpack.c.b16 %v1515, %v1507
    %v2348 = vpack.c.b16 %v1516, %v1508
    %v2349 = vpack.c.b16 %v1525, %v1517
    %v2350 = vpack.c.b16 %v1526, %v1518
    %v2351 = vpack.c.b16 %v1527, %v1519
    %v2352 = vpack.c.b16 %v1528, %v1520
    %v2353 = vpack.c.b16 %v1529, %v1521
    %v2354 = vpack.c.b16 %v1530, %v1522
    %v2355 = vpack.c.b16 %v1531, %v1523
    %v2356 = vpack.c.b16 %v1532, %v1524
    %v2357 = vpack.c.b16 %v1541, %v1533
    %v2358 = vpack.c.b16 %v1542, %v1534
    %v2359 = vpack.c.b16 %v1543, %v1535
    %v2360 = vpack.c.b16 %v1544, %v1536
    %v2361 = vpack.c.b16 %v1545, %v1537
    %v2362 = vpack.c.b16 %v1546, %v1538
    %v2363 = vpack.c.b16 %v1547, %v1539
    %v2364 = vpack.c.b16 %v1548, %v1540
    %v2365 = vpack.c.b16 %v1557, %v1549
    %v2366 = vpack.c.b16 %v1558, %v1550
    %v2367 = vpack.c.b16 %v1559, %v1551
    %v2368 = vpack.c.b16 %v1560, %v1552
    %v2369 = vpack.c.b16 %v1561, %v1553
    %v2370 = vpack.c.b16 %v1562, %v1554
    %v2371 = vpack.c.b16 %v1563, %v1555
    %v2372 = vpack.c.b16 %v1564, %v1556
    %v2373 = vpack.c.b16 %v1573, %v1565
    %v2374 = vpack.c.b16 %v1574, %v1566
    %v2375 = vpack.c.b16 %v1575, %v1567
    %v2376 = vpack.c.b16 %v1576, %v1568
    %v2377 = vpack.c.b16 %v1577, %v1569
    %v2378 = vpack.c.b16 %v1578, %v1570
    %v2379 = vpack.c.b16 %v1579, %v1571
    %v2380 = vpack.c.b16 %v1580, %v1572
    %v2381 = vpack.c.b16 %v1589, %v1581
    %v2382 = vpack.c.b16 %v1590, %v1582
    %v2383 = vpack.c.b16 %v1591, %v1583
    %v2384 = vpack.c.b16 %v1592, %v1584
    %v2385 = vpack.c.b16 %v1593, %v1585
    %v2386 = vpack.c.b16 %v1594, %v1586
    %v2387 = vpack.c.b16 %v1595, %v1587
    %v2388 = vpack.c.b16 %v1596, %v1588
    %v2389 = vpack.c.b16 %v1605, %v1597
    %v2390 = vpack.c.b16 %v1606, %v1598
    %v2391 = vpack.c.b16 %v1607, %v1599
    %v2392 = vpack.c.b16 %v1608, %v1600
    %v2393 = vpack.c.b16 %v1609, %v1601
    %v2394 = vpack.c.b16 %v1610, %v1602
    %v2395 = vpack.c.b16 %v1611, %v1603
    %v2396 = vpack.c.b16 %v1612, %v1604
    %v2397 = vpack.c.b16 %v1621, %v1613
    %v2398 = vpack.c.b16 %v1622, %v1614
    %v2399 = vpack.c.b16 %v1623, %v1615
    %v2400 = vpack.c.b16 %v1624, %v1616
    %v2401 = vpack.c.b16 %v1625, %v1617
    %v2402 = vpack.c.b16 %v1626, %v1618
    %v2403 = vpack.c.b16 %v1627, %v1619
    %v2404 = vpack.c.b16 %v1628, %v1620
    %v2405 = vpack.c.b16 %v1637, %v1629
    %v2406 = vpack.c.b16 %v1638, %v1630
    %v2407 = vpack.c.b16 %v1639, %v1631
    %v2408 = vpack.c.b16 %v1640, %v1632
    %v2409 = vpack.c.b16 %v1641, %v1633
    %v2410 = vpack.c.b16 %v1642, %v1634
    %v2411 = vpack.c.b16 %v1643, %v1635
    %v2412 = vpack.c.b16 %v1644, %v1636
    %v2413 = vpack.c.b16 %v1653, %v1645
    %v2414 = vpack.c.b16 %v1654, %v1646
    %v2415 = vpack.c.b16 %v1655, %v1647
    %v2416 = vpack.c.b16 %v1656, %v1648
    %v2417 = vpack.c.b16 %v1657, %v1649
    %v2418 = vpack.c.b16 %v1658, %v1650
    %v2419 = vpack.c.b16 %v1659, %v1651
    %v2420 = vpack.c.b16 %v1660, %v1652
    %v2421 = vpack.c.b16 %v1669, %v1661
    %v2422 = vpack.c.b16 %v1670, %v1662
    %v2423 = vpack.c.b16 %v1671, %v1663
    %v2424 = vpack.c.b16 %v1672, %v1664
    %v2425 = vpack.c.b16 %v1673, %v1665
    %v2426 = vpack.c.b16 %v1674, %v1666
    %v2427 = vpack.c.b16 %v1675, %v1667
    %v2428 = vpack.c.b16 %v1676, %v1668
    %v2429 = vpack.c.b16 %v1685, %v1677
    %v2430 = vpack.c.b16 %v1686, %v1678
    %v2431 = vpack.c.b16 %v1687, %v1679
    %v2432 = vpack.c.b16 %v1688, %v1680
    %v2433 = vpack.c.b16 %v1689, %v1681
    %v2434 = vpack.c.b16 %v1690, %v1682
    %v2435 = vpack.c.b16 %v1691, %v1683
    %v2436 = vpack.c.b16 %v1692, %v1684
    %v2437 = vpack.c.b16 %v1701, %v1693
    %v2438 = vpack.c.b16 %v1702, %v1694
    %v2439 = vpack.c.b16 %v1703, %v1695
    %v2440 = vpack.c.b16 %v1704, %v1696
    %v2441 = vpack.c.b16 %v1705, %v1697
    %v2442 = vpack.c.b16 %v1706, %v1698
    %v2443 = vpack.c.b16 %v1707, %v1699
    %v2444 = vpack.c.b16 %v1708, %v1700
    %v2445 = vpack.c.b16 %v1717, %v1709
    %v2446 = vpack.c.b16 %v1718, %v1710
    %v2447 = vpack.c.b16 %v1719, %v1711
    %v2448 = vpack.c.b16 %v1720, %v1712
    %v2449 = vpack.c.b16 %v1721, %v1713
    %v2450 = vpack.c.b16 %v1722, %v1714
    %v2451 = vpack.c.b16 %v1723, %v1715
    %v2452 = vpack.c.b16 %v1724, %v1716
    %v2453 = vpack.c.b16 %v1733, %v1725
    %v2454 = vpack.c.b16 %v1734, %v1726
    %v2455 = vpack.c.b16 %v1735, %v1727
    %v2456 = vpack.c.b16 %v1736, %v1728
    %v2457 = vpack.c.b16 %v1737, %v1729
    %v2458 = vpack.c.b16 %v1738, %v1730
    %v2459 = vpack.c.b16 %v1739, %v1731
    %v2460 = vpack.c.b16 %v1740, %v1732
    %v2461 = vpack.c.b16 %v1749, %v1741
    %v2462 = vpack.c.b16 %v1750, %v1742
    %v2463 = vpack.c.b16 %v1751, %v1743
    %v2464 = vpack.c.b16 %v1752, %v1744
    %v2465 = vpack.c.b16 %v1753, %v1745
    %v2466 = vpack.c.b16 %v1754, %v1746
    %v2467 = vpack.c.b16 %v1755, %v1747
    %v2468 = vpack.c.b16 %v1756, %v1748
    %v2469 = vpack.c.b16 %v1765, %v1757
    %v2470 = vpack.c.b16 %v1766, %v1758
    %v2471 = vpack.c.b16 %v1767, %v1759
    %v2472 = vpack.c.b16 %v1768, %v1760
    %v2473 = vpack.c.b16 %v1769, %v1761
    %v2474 = vpack.c.b16 %v1770, %v1762
    %v2475 = vpack.c.b16 %v1771, %v1763
    %v2476 = vpack.c.b16 %v1772, %v1764
    %v2477 = vpack.c.b16 %v1781, %v1773
    %v2478 = vpack.c.b16 %v1782, %v1774
    %v2479 = vpack.c.b16 %v1783, %v1775
    %v2480 = vpack.c.b16 %v1784, %v1776
    %v2481 = vpack.c.b16 %v1785, %v1777
    %v2482 = vpack.c.b16 %v1786, %v1778
    %v2483 = vpack.c.b16 %v1787, %v1779
    %v2484 = vpack.c.b16 %v1788, %v1780
    %v2485 = vpack.c.b16 %v1797, %v1789
    %v2486 = vpack.c.b16 %v1798, %v1790
    %v2487 = vpack.c.b16 %v1799, %v1791
    %v2488 = vpack.c.b16 %v1800, %v1792
    %v2489 = vpack.c.b16 %v1801, %v1793
    %v2490 = vpack.c.b16 %v1802, %v1794
    %v2491 = vpack.c.b16 %v1803, %v1795
    %v2492 = vpack.c.b16 %v1804, %v1796
    %v2493 = vpack.c.b16 %v1813, %v1805
    %v2494 = vpack.c.b16 %v1814, %v1806
    %v2495 = vpack.c.b16 %v1815, %v1807
    %v2496 = vpack.c.b16 %v1816, %v1808
    %v2497 = vpack.c.b16 %v1817, %v1809
    %v2498 = vpack.c.b16 %v1818, %v1810
    %v2499 = vpack.c.b16 %v1819, %v1811
    %v2500 = vpack.c.b16 %v1820, %v1812
    %v2501 = vpack.c.b16 %v1829, %v1821
    %v2502 = vpack.c.b16 %v1830, %v1822
    %v2503 = vpack.c.b16 %v1831, %v1823
    %v2504 = vpack.c.b16 %v1832, %v1824
    %v2505 = vpack.c.b16 %v1833, %v1825
    %v2506 = vpack.c.b16 %v1834, %v1826
    %v2507 = vpack.c.b16 %v1835, %v1827
    %v2508 = vpack.c.b16 %v1836, %v1828
    %v2509 = vpack.c.b16 %v1845, %v1837
    %v2510 = vpack.c.b16 %v1846, %v1838
    %v2511 = vpack.c.b16 %v1847, %v1839
    %v2512 = vpack.c.b16 %v1848, %v1840
    %v2513 = vpack.c.b16 %v1849, %v1841
    %v2514 = vpack.c.b16 %v1850, %v1842
    %v2515 = vpack.c.b16 %v1851, %v1843
    %v2516 = vpack.c.b16 %v1852, %v1844
    %v2517 = vpack.c.b16 %v1861, %v1853
    %v2518 = vpack.c.b16 %v1862, %v1854
    %v2519 = vpack.c.b16 %v1863, %v1855
    %v2520 = vpack.c.b16 %v1864, %v1856
    %v2521 = vpack.c.b16 %v1865, %v1857
    %v2522 = vpack.c.b16 %v1866, %v1858
    %v2523 = vpack.c.b16 %v1867, %v1859
    %v2524 = vpack.c.b16 %v1868, %v1860
    %v2525 = vpack.c.b16 %v1877, %v1869
    %v2526 = vpack.c.b16 %v1878, %v1870
    %v2527 = vpack.c.b16 %v1879, %v1871
    %v2528 = vpack.c.b16 %v1880, %v1872
    %v2529 = vpack.c.b16 %v1881, %v1873
    %v2530 = vpack.c.b16 %v1882, %v1874
    %v2531 = vpack.c.b16 %v1883, %v1875
    %v2532 = vpack.c.b16 %v1884, %v1876
    %v2533 = vpack.c.b16 %v1893, %v1885
    %v2534 = vpack.c.b16 %v1894, %v1886
    %v2535 = vpack.c.b16 %v1895, %v1887
    %v2536 = vpack.c.b16 %v1896, %v1888
    %v2537 = vpack.c.b16 %v1897, %v1889
    %v2538 = vpack.c.b16 %v1898, %v1890
    %v2539 = vpack.c.b16 %v1899, %v1891
    %v2540 = vpack.c.b16 %v1900, %v1892
    %v2541 = vpack.c.b16 %v1909, %v1901
    %v2542 = vpack.c.b16 %v1910, %v1902
    %v2543 = vpack.c.b16 %v1911, %v1903
    %v2544 = vpack.c.b16 %v1912, %v1904
    %v2545 = vpack.c.b16 %v1913, %v1905
    %v2546 = vpack.c.b16 %v1914, %v1906
    %v2547 = vpack.c.b16 %v1915, %v1907
    %v2548 = vpack.c.b16 %v1916, %v1908
    %v2549 = vpack.c.b16 %v1925, %v1917
    %v2550 = vpack.c.b16 %v1926, %v1918
    %v2551 = vpack.c.b16 %v1927, %v1919
    %v2552 = vpack.c.b16 %v1928, %v1920
    %v2553 = vpack.c.b16 %v1929, %v1921
    %v2554 = vpack.c.b16 %v1930, %v1922
    %v2555 = vpack.c.b16 %v1931, %v1923
    %v2556 = vpack.c.b16 %v1932, %v1924
    %v2557 = vpack.c.b16 %v1941, %v1933
    %v2558 = vpack.c.b16 %v1942, %v1934
    %v2559 = vpack.c.b16 %v1943, %v1935
    %v2560 = vpack.c.b16 %v1944, %v1936
    %v2561 = vpack.c.b16 %v1945, %v1937
    %v2562 = vpack.c.b16 %v1946, %v1938
    %v2563 = vpack.c.b16 %v1947, %v1939
    %v2564 = vpack.c.b16 %v1948, %v1940
    %v2565 = vpack.c.b16 %v1957, %v1949
    %v2566 = vpack.c.b16 %v1958, %v1950
    %v2567 = vpack.c.b16 %v1959, %v1951
    %v2568 = vpack.c.b16 %v1960, %v1952
    %v2569 = vpack.c.b16 %v1961, %v1953
    %v2570 = vpack.c.b16 %v1962, %v1954
    %v2571 = vpack.c.b16 %v1963, %v1955
    %v2572 = vpack.c.b16 %v1964, %v1956
    %v2573 = vpack.c.b16 %v1973, %v1965
    %v2574 = vpack.c.b16 %v1974, %v1966
    %v2575 = vpack.c.b16 %v1975, %v1967
    %v2576 = vpack.c.b16 %v1976, %v1968
    %v2577 = vpack.c.b16 %v1977, %v1969
    %v2578 = vpack.c.b16 %v1978, %v1970
    %v2579 = vpack.c.b16 %v1979, %v1971
    %v2580 = vpack.c.b16 %v1980, %v1972
    %v2581 = vpack.c.b16 %v1989, %v1981
    %v2582 = vpack.c.b16 %v1990, %v1982
    %v2583 = vpack.c.b16 %v1991, %v1983
    %v2584 = vpack.c.b16 %v1992, %v1984
    %v2585 = vpack.c.b16 %v1993, %v1985
    %v2586 = vpack.c.b16 %v1994, %v1986
    %v2587 = vpack.c.b16 %v1995, %v1987
    %v2588 = vpack.c.b16 %v1996, %v1988
    %v2589 = vpack.c.b16 %v2005, %v1997
    %v2590 = vpack.c.b16 %v2006, %v1998
    %v2591 = vpack.c.b16 %v2007, %v1999
    %v2592 = vpack.c.b16 %v2008, %v2000
    %v2593 = vpack.c.b16 %v2009, %v2001
    %v2594 = vpack.c.b16 %v2010, %v2002
    %v2595 = vpack.c.b16 %v2011, %v2003
    %v2596 = vpack.c.b16 %v2012, %v2004
    %v2597 = vpack.c.b16 %v2021, %v2013
    %v2598 = vpack.c.b16 %v2022, %v2014
    %v2599 = vpack.c.b16 %v2023, %v2015
    %v2600 = vpack.c.b16 %v2024, %v2016
    %v2601 = vpack.c.b16 %v2025, %v2017
    %v2602 = vpack.c.b16 %v2026, %v2018
    %v2603 = vpack.c.b16 %v2027, %v2019
    %v2604 = vpack.c.b16 %v2028, %v2020
    %v2605 = vpack.c.b16 %v2037, %v2029
    %v2606 = vpack.c.b16 %v2038, %v2030
    %v2607 = vpack.c.b16 %v2039, %v2031
    %v2608 = vpack.c.b16 %v2040, %v2032
    %v2609 = vpack.c.b16 %v2041, %v2033
    %v2610 = vpack.c.b16 %v2042, %v2034
    %v2611 = vpack.c.b16 %v2043, %v2035
    %v2612 = vpack.c.b16 %v2044, %v2036
    %v2613 = vpack.c.b16 %v2053, %v2045
    %v2614 = vpack.c.b16 %v2054, %v2046
    %v2615 = vpack.c.b16 %v2055, %v2047
    %v2616 = vpack.c.b16 %v2056, %v2048
    %v2617 = vpack.c.b16 %v2057, %v2049
    %v2618 = vpack.c.b16 %v2058, %v2050
    %v2619 = vpack.c.b16 %v2059, %v2051
    %v2620 = vpack.c.b16 %v2060, %v2052
    %v2621 = vpack.c.b16 %v2069, %v2061
    %v2622 = vpack.c.b16 %v2070, %v2062
    %v2623 = vpack.c.b16 %v2071, %v2063
    %v2624 = vpack.c.b16 %v2072, %v2064
    %v2625 = vpack.c.b16 %v2073, %v2065
    %v2626 = vpack.c.b16 %v2074, %v2066
    %v2627 = vpack.c.b16 %v2075, %v2067
    %v2628 = vpack.c.b16 %v2076, %v2068
    %v2629 = vpack.c.b16 %v2085, %v2077
    %v2630 = vpack.c.b16 %v2086, %v2078
    %v2631 = vpack.c.b16 %v2087, %v2079
    %v2632 = vpack.c.b16 %v2088, %v2080
    %v2633 = vpack.c.b16 %v2089, %v2081
    %v2634 = vpack.c.b16 %v2090, %v2082
    %v2635 = vpack.c.b16 %v2091, %v2083
    %v2636 = vpack.c.b16 %v2092, %v2084
    %v2637 = vpack.c.b16 %v2101, %v2093
    %v2638 = vpack.c.b16 %v2102, %v2094
    %v2639 = vpack.c.b16 %v2103, %v2095
    %v2640 = vpack.c.b16 %v2104, %v2096
    %v2641 = vpack.c.b16 %v2105, %v2097
    %v2642 = vpack.c.b16 %v2106, %v2098
    %v2643 = vpack.c.b16 %v2107, %v2099
    %v2644 = vpack.c.b16 %v2108, %v2100
    %v2645 = vpack.c.b16 %v2117, %v2109
    %v2646 = vpack.c.b16 %v2118, %v2110
    %v2647 = vpack.c.b16 %v2119, %v2111
    %v2648 = vpack.c.b16 %v2120, %v2112
    %v2649 = vpack.c.b16 %v2121, %v2113
    %v2650 = vpack.c.b16 %v2122, %v2114
    %v2651 = vpack.c.b16 %v2123, %v2115
    %v2652 = vpack.c.b16 %v2124, %v2116
    %v2653 = vpack.c.b16 %v2133, %v2125
    %v2654 = vpack.c.b16 %v2134, %v2126
    %v2655 = vpack.c.b16 %v2135, %v2127
    %v2656 = vpack.c.b16 %v2136, %v2128
    %v2657 = vpack.c.b16 %v2137, %v2129
    %v2658 = vpack.c.b16 %v2138, %v2130
    %v2659 = vpack.c.b16 %v2139, %v2131
    %v2660 = vpack.c.b16 %v2140, %v2132
    %v2661 = vpack.c.b16 %v2149, %v2141
    %v2662 = vpack.c.b16 %v2150, %v2142
    %v2663 = vpack.c.b16 %v2151, %v2143
    %v2664 = vpack.c.b16 %v2152, %v2144
    %v2665 = vpack.c.b16 %v2153, %v2145
    %v2666 = vpack.c.b16 %v2154, %v2146
    %v2667 = vpack.c.b16 %v2155, %v2147
    %v2668 = vpack.c.b16 %v2156, %v2148
    %3181 = vmatprep.subr.bf16.mxu0 %v2158
    %3182 = vmatpush1.bf16.msra.mxu0 %v2157
    %3183 = vmatprep.subr.bf16.mxu0 %v2166
    %3184 = vmatpush1.bf16.msra.mxu0 %v2165
    %3185 = vmatprep.subr.bf16.mxu0 %v2174
    %3186 = vmatpush1.bf16.msra.mxu0 %v2173
    %3187 = vmatprep.subr.bf16.mxu0 %v2182
    %3188 = vmatpush1.bf16.msra.mxu0 %v2181
    %3189 = vmatprep.subr.bf16.mxu0 %v2190
    %3190 = vmatpush1.bf16.msra.mxu0 %v2189
    %3191 = vmatprep.subr.bf16.mxu0 %v2198
    %3192 = vmatpush1.bf16.msra.mxu0 %v2197
    %3193 = vmatprep.subr.bf16.mxu0 %v2206
    %3194 = vmatpush1.bf16.msra.mxu0 %v2205
    %3195 = vmatprep.subr.bf16.mxu0 %v2214
    %3196 = vmatpush1.bf16.msra.mxu0 %v2213
    %3197 = vmatprep.subr.bf16.mxu0 %v2222
    %3198 = vmatpush1.bf16.msra.mxu0 %v2221
    %3199 = vmatprep.subr.bf16.mxu0 %v2230
    %3200 = vmatpush1.bf16.msra.mxu0 %v2229
    %3201 = vmatprep.subr.bf16.mxu0 %v2238
    %3202 = vmatpush1.bf16.msra.mxu0 %v2237
    %3203 = vmatprep.subr.bf16.mxu0 %v2246
    %3204 = vmatpush1.bf16.msra.mxu0 %v2245
    %3205 = vmatprep.subr.bf16.mxu0 %v2254
    %3206 = vmatpush1.bf16.msra.mxu0 %v2253
    %3207 = vmatprep.subr.bf16.mxu0 %v2262
    %3208 = vmatpush1.bf16.msra.mxu0 %v2261
    %3209 = vmatprep.subr.bf16.mxu0 %v2270
    %3210 = vmatpush1.bf16.msra.mxu0 %v2269
    %3211 = vmatprep.subr.bf16.mxu0 %v2278
    %3212 = vmatpush1.bf16.msra.mxu0 %v2277
    %3213 = vmatprep.mubr.bf16.mxu0 %v606
    %3214 = vmatmul.mubr.bf16.gmra.mrb[0].mxu0 %v605
    %v3215 = vpop.f32.mrb[0].mxu0
    %v3216 = vadd.f32 0.0, %v3215
    %v3217 = vpop.f32.mrb[0].mxu0
    %v3218 = vadd.f32 0.0, %v3217
    %v3219 = vpop.f32.mrb[0].mxu0
    %v3220 = vpop.f32.mrb[0].mxu0
    %3221 = vdwg.mxu0
    %3222 = vmatprep.subr.bf16.mxu0 %v2286
    %3223 = vmatpush1.bf16.msra.mxu0 %v2285
    %3224 = vmatprep.subr.bf16.mxu0 %v2294
    %3225 = vmatpush1.bf16.msra.mxu0 %v2293
    %3226 = vmatprep.subr.bf16.mxu0 %v2302
    %3227 = vmatpush1.bf16.msra.mxu0 %v2301
    %3228 = vmatprep.subr.bf16.mxu0 %v2310
    %3229 = vmatpush1.bf16.msra.mxu0 %v2309
    %3230 = vmatprep.subr.bf16.mxu0 %v2318
    %3231 = vmatpush1.bf16.msra.mxu0 %v2317
    %3232 = vmatprep.subr.bf16.mxu0 %v2326
    %3233 = vmatpush1.bf16.msra.mxu0 %v2325
    %3234 = vmatprep.subr.bf16.mxu0 %v2334
    %3235 = vmatpush1.bf16.msra.mxu0 %v2333
    %3236 = vmatprep.subr.bf16.mxu0 %v2342
    %3237 = vmatpush1.bf16.msra.mxu0 %v2341
    %3238 = vmatprep.subr.bf16.mxu0 %v2350
    %3239 = vmatpush1.bf16.msra.mxu0 %v2349
    %3240 = vmatprep.subr.bf16.mxu0 %v2358
    %3241 = vmatpush1.bf16.msra.mxu0 %v2357
    %3242 = vmatprep.subr.bf16.mxu0 %v2366
    %3243 = vmatpush1.bf16.msra.mxu0 %v2365
    %3244 = vmatprep.subr.bf16.mxu0 %v2374
    %3245 = vmatpush1.bf16.msra.mxu0 %v2373
    %3246 = vmatprep.subr.bf16.mxu0 %v2382
    %3247 = vmatpush1.bf16.msra.mxu0 %v2381
    %3248 = vmatprep.subr.bf16.mxu0 %v2390
    %3249 = vmatpush1.bf16.msra.mxu0 %v2389
    %3250 = vmatprep.subr.bf16.mxu0 %v2398
    %3251 = vmatpush1.bf16.msra.mxu0 %v2397
    %3252 = vmatprep.subr.bf16.mxu0 %v2406
    %3253 = vmatpush1.bf16.msra.mxu0 %v2405
    %3254 = vmatprep.mubr.bf16.mxu0 %v608
    %3255 = vmatmul.mubr.bf16.gmra.mrb[0].mxu0 %v607
    %v3256 = vpop.f32.mrb[0].mxu0
    %v3257 = vadd.f32 %v3216, %v3256
    %v3258 = vpop.f32.mrb[0].mxu0
    %v3259 = vadd.f32 %v3218, %v3258
    %v3260 = vpop.f32.mrb[0].mxu0
    %v3261 = vpop.f32.mrb[0].mxu0
    %3262 = vdwg.mxu0
    %3263 = vmatprep.subr.bf16.mxu0 %v2414
    %3264 = vmatpush1.bf16.msra.mxu0 %v2413
    %3265 = vmatprep.subr.bf16.mxu0 %v2422
    %3266 = vmatpush1.bf16.msra.mxu0 %v2421
    %3267 = vmatprep.subr.bf16.mxu0 %v2430
    %3268 = vmatpush1.bf16.msra.mxu0 %v2429
    %3269 = vmatprep.subr.bf16.mxu0 %v2438
    %3270 = vmatpush1.bf16.msra.mxu0 %v2437
    %3271 = vmatprep.subr.bf16.mxu0 %v2446
    %3272 = vmatpush1.bf16.msra.mxu0 %v2445
    %3273 = vmatprep.subr.bf16.mxu0 %v2454
    %3274 = vmatpush1.bf16.msra.mxu0 %v2453
    %3275 = vmatprep.subr.bf16.mxu0 %v2462
    %3276 = vmatpush1.bf16.msra.mxu0 %v2461
    %3277 = vmatprep.subr.bf16.mxu0 %v2470
    %3278 = vmatpush1.bf16.msra.mxu0 %v2469
    %3279 = vmatprep.subr.bf16.mxu0 %v2478
    %3280 = vmatpush1.bf16.msra.mxu0 %v2477
    %3281 = vmatprep.subr.bf16.mxu0 %v2486
    %3282 = vmatpush1.bf16.msra.mxu0 %v2485
    %3283 = vmatprep.subr.bf16.mxu0 %v2494
    %3284 = vmatpush1.bf16.msra.mxu0 %v2493
    %3285 = vmatprep.subr.bf16.mxu0 %v2502
    %3286 = vmatpush1.bf16.msra.mxu0 %v2501
    %3287 = vmatprep.subr.bf16.mxu0 %v2510
    %3288 = vmatpush1.bf16.msra.mxu0 %v2509
    %3289 = vmatprep.subr.bf16.mxu0 %v2518
    %3290 = vmatpush1.bf16.msra.mxu0 %v2517
    %3291 = vmatprep.subr.bf16.mxu0 %v2526
    %3292 = vmatpush1.bf16.msra.mxu0 %v2525
    %3293 = vmatprep.subr.bf16.mxu0 %v2534
    %3294 = vmatpush1.bf16.msra.mxu0 %v2533
    %3295 = vmatprep.mubr.bf16.mxu0 %v610
    %3296 = vmatmul.mubr.bf16.gmra.mrb[0].mxu0 %v609
    %v3297 = vpop.f32.mrb[0].mxu0
    %v3298 = vadd.f32 %v3257, %v3297
    %v3299 = vpop.f32.mrb[0].mxu0
    %v3300 = vadd.f32 %v3259, %v3299
    %v3301 = vpop.f32.mrb[0].mxu0
    %v3302 = vpop.f32.mrb[0].mxu0
    %3303 = vdwg.mxu0
    %3304 = vmatprep.subr.bf16.mxu0 %v2542
    %3305 = vmatpush1.bf16.msra.mxu0 %v2541
    %3306 = vmatprep.subr.bf16.mxu0 %v2550
    %3307 = vmatpush1.bf16.msra.mxu0 %v2549
    %3308 = vmatprep.subr.bf16.mxu0 %v2558
    %3309 = vmatpush1.bf16.msra.mxu0 %v2557
    %3310 = vmatprep.subr.bf16.mxu0 %v2566
    %3311 = vmatpush1.bf16.msra.mxu0 %v2565
    %3312 = vmatprep.subr.bf16.mxu0 %v2574
    %3313 = vmatpush1.bf16.msra.mxu0 %v2573
    %3314 = vmatprep.subr.bf16.mxu0 %v2582
    %3315 = vmatpush1.bf16.msra.mxu0 %v2581
    %3316 = vmatprep.subr.bf16.mxu0 %v2590
    %3317 = vmatpush1.bf16.msra.mxu0 %v2589
    %3318 = vmatprep.subr.bf16.mxu0 %v2598
    %3319 = vmatpush1.bf16.msra.mxu0 %v2597
    %3320 = vmatprep.subr.bf16.mxu0 %v2606
    %3321 = vmatpush1.bf16.msra.mxu0 %v2605
    %3322 = vmatprep.subr.bf16.mxu0 %v2614
    %3323 = vmatpush1.bf16.msra.mxu0 %v2613
    %3324 = vmatprep.subr.bf16.mxu0 %v2622
    %3325 = vmatpush1.bf16.msra.mxu0 %v2621
    %3326 = vmatprep.subr.bf16.mxu0 %v2630
    %3327 = vmatpush1.bf16.msra.mxu0 %v2629
    %3328 = vmatprep.subr.bf16.mxu0 %v2638
    %3329 = vmatpush1.bf16.msra.mxu0 %v2637
    %3330 = vmatprep.subr.bf16.mxu0 %v2646
    %3331 = vmatpush1.bf16.msra.mxu0 %v2645
    %3332 = vmatprep.subr.bf16.mxu0 %v2654
    %3333 = vmatpush1.bf16.msra.mxu0 %v2653
    %3334 = vmatprep.subr.bf16.mxu0 %v2662
    %3335 = vmatpush1.bf16.msra.mxu0 %v2661
    %3336 = vmatprep.mubr.bf16.mxu0 %v612
    %3337 = vmatmul.mubr.bf16.gmra.mrb[0].mxu0 %v611
    %v3338 = vpop.f32.mrb[0].mxu0
    %v3339 = vadd.f32 %v3298, %v3338
    %v3340 = vpop.f32.mrb[0].mxu0
    %v3341 = vadd.f32 %v3300, %v3340
    %v3342 = vpop.f32.mrb[0].mxu0
    %v3343 = vpop.f32.mrb[0].mxu0
    %3344 = vdwg.mxu0
    %3345 = vmatprep.subr.bf16.mxu0 %v2160
    %3346 = vmatpush1.bf16.msra.mxu0 %v2159
    %3347 = vmatprep.subr.bf16.mxu0 %v2168
    %3348 = vmatpush1.bf16.msra.mxu0 %v2167
    %3349 = vmatprep.subr.bf16.mxu0 %v2176
    %3350 = vmatpush1.bf16.msra.mxu0 %v2175
    %3351 = vmatprep.subr.bf16.mxu0 %v2184
    %3352 = vmatpush1.bf16.msra.mxu0 %v2183
    %3353 = vmatprep.subr.bf16.mxu0 %v2192
    %3354 = vmatpush1.bf16.msra.mxu0 %v2191
    %3355 = vmatprep.subr.bf16.mxu0 %v2200
    %3356 = vmatpush1.bf16.msra.mxu0 %v2199
    %3357 = vmatprep.subr.bf16.mxu0 %v2208
    %3358 = vmatpush1.bf16.msra.mxu0 %v2207
    %3359 = vmatprep.subr.bf16.mxu0 %v2216
    %3360 = vmatpush1.bf16.msra.mxu0 %v2215
    %3361 = vmatprep.subr.bf16.mxu0 %v2224
    %3362 = vmatpush1.bf16.msra.mxu0 %v2223
    %3363 = vmatprep.subr.bf16.mxu0 %v2232
    %3364 = vmatpush1.bf16.msra.mxu0 %v2231
    %3365 = vmatprep.subr.bf16.mxu0 %v2240
    %3366 = vmatpush1.bf16.msra.mxu0 %v2239
    %3367 = vmatprep.subr.bf16.mxu0 %v2248
    %3368 = vmatpush1.bf16.msra.mxu0 %v2247
    %3369 = vmatprep.subr.bf16.mxu0 %v2256
    %3370 = vmatpush1.bf16.msra.mxu0 %v2255
    %3371 = vmatprep.subr.bf16.mxu0 %v2264
    %3372 = vmatpush1.bf16.msra.mxu0 %v2263
    %3373 = vmatprep.subr.bf16.mxu0 %v2272
    %3374 = vmatpush1.bf16.msra.mxu0 %v2271
    %3375 = vmatprep.subr.bf16.mxu0 %v2280
    %3376 = vmatpush1.bf16.msra.mxu0 %v2279
    %3377 = vmatprep.mubr.bf16.mxu0 %v606
    %3378 = vmatmul.mubr.bf16.gmra.mrb[0].mxu0 %v605
    %v3379 = vpop.f32.mrb[0].mxu0
    %v3380 = vadd.f32 0.0, %v3379
    %v3381 = vpop.f32.mrb[0].mxu0
    %v3382 = vadd.f32 0.0, %v3381
    %v3383 = vpop.f32.mrb[0].mxu0
    %v3384 = vpop.f32.mrb[0].mxu0
    %3385 = vdwg.mxu0
    %3386 = vmatprep.subr.bf16.mxu0 %v2288
    %3387 = vmatpush1.bf16.msra.mxu0 %v2287
    %3388 = vmatprep.subr.bf16.mxu0 %v2296
    %3389 = vmatpush1.bf16.msra.mxu0 %v2295
    %3390 = vmatprep.subr.bf16.mxu0 %v2304
    %3391 = vmatpush1.bf16.msra.mxu0 %v2303
    %3392 = vmatprep.subr.bf16.mxu0 %v2312
    %3393 = vmatpush1.bf16.msra.mxu0 %v2311
    %3394 = vmatprep.subr.bf16.mxu0 %v2320
    %3395 = vmatpush1.bf16.msra.mxu0 %v2319
    %3396 = vmatprep.subr.bf16.mxu0 %v2328
    %3397 = vmatpush1.bf16.msra.mxu0 %v2327
    %3398 = vmatprep.subr.bf16.mxu0 %v2336
    %3399 = vmatpush1.bf16.msra.mxu0 %v2335
    %3400 = vmatprep.subr.bf16.mxu0 %v2344
    %3401 = vmatpush1.bf16.msra.mxu0 %v2343
    %3402 = vmatprep.subr.bf16.mxu0 %v2352
    %3403 = vmatpush1.bf16.msra.mxu0 %v2351
    %3404 = vmatprep.subr.bf16.mxu0 %v2360
    %3405 = vmatpush1.bf16.msra.mxu0 %v2359
    %3406 = vmatprep.subr.bf16.mxu0 %v2368
    %3407 = vmatpush1.bf16.msra.mxu0 %v2367
    %3408 = vmatprep.subr.bf16.mxu0 %v2376
    %3409 = vmatpush1.bf16.msra.mxu0 %v2375
    %3410 = vmatprep.subr.bf16.mxu0 %v2384
    %3411 = vmatpush1.bf16.msra.mxu0 %v2383
    %3412 = vmatprep.subr.bf16.mxu0 %v2392
    %3413 = vmatpush1.bf16.msra.mxu0 %v2391
    %3414 = vmatprep.subr.bf16.mxu0 %v2400
    %3415 = vmatpush1.bf16.msra.mxu0 %v2399
    %3416 = vmatprep.subr.bf16.mxu0 %v2408
    %3417 = vmatpush1.bf16.msra.mxu0 %v2407
    %3418 = vmatprep.mubr.bf16.mxu0 %v608
    %3419 = vmatmul.mubr.bf16.gmra.mrb[0].mxu0 %v607
    %v3420 = vpop.f32.mrb[0].mxu0
    %v3421 = vadd.f32 %v3380, %v3420
    %v3422 = vpop.f32.mrb[0].mxu0
    %v3423 = vadd.f32 %v3382, %v3422
    %v3424 = vpop.f32.mrb[0].mxu0
    %v3425 = vpop.f32.mrb[0].mxu0
    %3426 = vdwg.mxu0
    %3427 = vmatprep.subr.bf16.mxu0 %v2416
    %3428 = vmatpush1.bf16.msra.mxu0 %v2415
    %3429 = vmatprep.subr.bf16.mxu0 %v2424
    %3430 = vmatpush1.bf16.msra.mxu0 %v2423
    %3431 = vmatprep.subr.bf16.mxu0 %v2432
    %3432 = vmatpush1.bf16.msra.mxu0 %v2431
    %3433 = vmatprep.subr.bf16.mxu0 %v2440
    %3434 = vmatpush1.bf16.msra.mxu0 %v2439
    %3435 = vmatprep.subr.bf16.mxu0 %v2448
    %3436 = vmatpush1.bf16.msra.mxu0 %v2447
    %3437 = vmatprep.subr.bf16.mxu0 %v2456
    %3438 = vmatpush1.bf16.msra.mxu0 %v2455
    %3439 = vmatprep.subr.bf16.mxu0 %v2464
    %3440 = vmatpush1.bf16.msra.mxu0 %v2463
    %3441 = vmatprep.subr.bf16.mxu0 %v2472
    %3442 = vmatpush1.bf16.msra.mxu0 %v2471
    %3443 = vmatprep.subr.bf16.mxu0 %v2480
    %3444 = vmatpush1.bf16.msra.mxu0 %v2479
    %3445 = vmatprep.subr.bf16.mxu0 %v2488
    %3446 = vmatpush1.bf16.msra.mxu0 %v2487
    %3447 = vmatprep.subr.bf16.mxu0 %v2496
    %3448 = vmatpush1.bf16.msra.mxu0 %v2495
    %3449 = vmatprep.subr.bf16.mxu0 %v2504
    %3450 = vmatpush1.bf16.msra.mxu0 %v2503
    %3451 = vmatprep.subr.bf16.mxu0 %v2512
    %3452 = vmatpush1.bf16.msra.mxu0 %v2511
    %3453 = vmatprep.subr.bf16.mxu0 %v2520
    %3454 = vmatpush1.bf16.msra.mxu0 %v2519
    %3455 = vmatprep.subr.bf16.mxu0 %v2528
    %3456 = vmatpush1.bf16.msra.mxu0 %v2527
    %3457 = vmatprep.subr.bf16.mxu0 %v2536
    %3458 = vmatpush1.bf16.msra.mxu0 %v2535
    %3459 = vmatprep.mubr.bf16.mxu0 %v610
    %3460 = vmatmul.mubr.bf16.gmra.mrb[0].mxu0 %v609
    %v3461 = vpop.f32.mrb[0].mxu0
    %v3462 = vadd.f32 %v3421, %v3461
    %v3463 = vpop.f32.mrb[0].mxu0
    %v3464 = vadd.f32 %v3423, %v3463
    %v3465 = vpop.f32.mrb[0].mxu0
    %v3466 = vpop.f32.mrb[0].mxu0
    %3467 = vdwg.mxu0
    %3468 = vmatprep.subr.bf16.mxu0 %v2544
    %3469 = vmatpush1.bf16.msra.mxu0 %v2543
    %3470 = vmatprep.subr.bf16.mxu0 %v2552
    %3471 = vmatpush1.bf16.msra.mxu0 %v2551
    %3472 = vmatprep.subr.bf16.mxu0 %v2560
    %3473 = vmatpush1.bf16.msra.mxu0 %v2559
    %3474 = vmatprep.subr.bf16.mxu0 %v2568
    %3475 = vmatpush1.bf16.msra.mxu0 %v2567
    %3476 = vmatprep.subr.bf16.mxu0 %v2576
    %3477 = vmatpush1.bf16.msra.mxu0 %v2575
    %3478 = vmatprep.subr.bf16.mxu0 %v2584
    %3479 = vmatpush1.bf16.msra.mxu0 %v2583
    %3480 = vmatprep.subr.bf16.mxu0 %v2592
    %3481 = vmatpush1.bf16.msra.mxu0 %v2591
    %3482 = vmatprep.subr.bf16.mxu0 %v2600
    %3483 = vmatpush1.bf16.msra.mxu0 %v2599
    %3484 = vmatprep.subr.bf16.mxu0 %v2608
    %3485 = vmatpush1.bf16.msra.mxu0 %v2607
    %3486 = vmatprep.subr.bf16.mxu0 %v2616
    %3487 = vmatpush1.bf16.msra.mxu0 %v2615
    %3488 = vmatprep.subr.bf16.mxu0 %v2624
    %3489 = vmatpush1.bf16.msra.mxu0 %v2623
    %3490 = vmatprep.subr.bf16.mxu0 %v2632
    %3491 = vmatpush1.bf16.msra.mxu0 %v2631
    %3492 = vmatprep.subr.bf16.mxu0 %v2640
    %3493 = vmatpush1.bf16.msra.mxu0 %v2639
    %3494 = vmatprep.subr.bf16.mxu0 %v2648
    %3495 = vmatpush1.bf16.msra.mxu0 %v2647
    %3496 = vmatprep.subr.bf16.mxu0 %v2656
    %3497 = vmatpush1.bf16.msra.mxu0 %v2655
    %3498 = vmatprep.subr.bf16.mxu0 %v2664
    %3499 = vmatpush1.bf16.msra.mxu0 %v2663
    %3500 = vmatprep.mubr.bf16.mxu0 %v612
    %3501 = vmatmul.mubr.bf16.gmra.mrb[0].mxu0 %v611
    %v3502 = vpop.f32.mrb[0].mxu0
    %v3503 = vadd.f32 %v3462, %v3502
    %v3504 = vpop.f32.mrb[0].mxu0
    %v3505 = vadd.f32 %v3464, %v3504
    %v3506 = vpop.f32.mrb[0].mxu0
    %v3507 = vpop.f32.mrb[0].mxu0
    %3508 = vdwg.mxu0
    %3509 = vmatprep.subr.bf16.mxu0 %v2162
    %3510 = vmatpush1.bf16.msra.mxu0 %v2161
    %3511 = vmatprep.subr.bf16.mxu0 %v2170
    %3512 = vmatpush1.bf16.msra.mxu0 %v2169
    %3513 = vmatprep.subr.bf16.mxu0 %v2178
    %3514 = vmatpush1.bf16.msra.mxu0 %v2177
    %3515 = vmatprep.subr.bf16.mxu0 %v2186
    %3516 = vmatpush1.bf16.msra.mxu0 %v2185
    %3517 = vmatprep.subr.bf16.mxu0 %v2194
    %3518 = vmatpush1.bf16.msra.mxu0 %v2193
    %3519 = vmatprep.subr.bf16.mxu0 %v2202
    %3520 = vmatpush1.bf16.msra.mxu0 %v2201
    %3521 = vmatprep.subr.bf16.mxu0 %v2210
    %3522 = vmatpush1.bf16.msra.mxu0 %v2209
    %3523 = vmatprep.subr.bf16.mxu0 %v2218
    %3524 = vmatpush1.bf16.msra.mxu0 %v2217
    %3525 = vmatprep.subr.bf16.mxu0 %v2226
    %3526 = vmatpush1.bf16.msra.mxu0 %v2225
    %3527 = vmatprep.subr.bf16.mxu0 %v2234
    %3528 = vmatpush1.bf16.msra.mxu0 %v2233
    %3529 = vmatprep.subr.bf16.mxu0 %v2242
    %3530 = vmatpush1.bf16.msra.mxu0 %v2241
    %3531 = vmatprep.subr.bf16.mxu0 %v2250
    %3532 = vmatpush1.bf16.msra.mxu0 %v2249
    %3533 = vmatprep.subr.bf16.mxu0 %v2258
    %3534 = vmatpush1.bf16.msra.mxu0 %v2257
    %3535 = vmatprep.subr.bf16.mxu0 %v2266
    %3536 = vmatpush1.bf16.msra.mxu0 %v2265
    %3537 = vmatprep.subr.bf16.mxu0 %v2274
    %3538 = vmatpush1.bf16.msra.mxu0 %v2273
    %3539 = vmatprep.subr.bf16.mxu0 %v2282
    %3540 = vmatpush1.bf16.msra.mxu0 %v2281
    %3541 = vmatprep.mubr.bf16.mxu0 %v606
    %3542 = vmatmul.mubr.bf16.gmra.mrb[0].mxu0 %v605
    %v3543 = vpop.f32.mrb[0].mxu0
    %v3544 = vadd.f32 0.0, %v3543
    %v3545 = vpop.f32.mrb[0].mxu0
    %v3546 = vadd.f32 0.0, %v3545
    %v3547 = vpop.f32.mrb[0].mxu0
    %v3548 = vpop.f32.mrb[0].mxu0
    %3549 = vdwg.mxu0
    %3550 = vmatprep.subr.bf16.mxu0 %v2290
    %3551 = vmatpush1.bf16.msra.mxu0 %v2289
    %3552 = vmatprep.subr.bf16.mxu0 %v2298
    %3553 = vmatpush1.bf16.msra.mxu0 %v2297
    %3554 = vmatprep.subr.bf16.mxu0 %v2306
    %3555 = vmatpush1.bf16.msra.mxu0 %v2305
    %3556 = vmatprep.subr.bf16.mxu0 %v2314
    %3557 = vmatpush1.bf16.msra.mxu0 %v2313
    %3558 = vmatprep.subr.bf16.mxu0 %v2322
    %3559 = vmatpush1.bf16.msra.mxu0 %v2321
    %3560 = vmatprep.subr.bf16.mxu0 %v2330
    %3561 = vmatpush1.bf16.msra.mxu0 %v2329
    %3562 = vmatprep.subr.bf16.mxu0 %v2338
    %3563 = vmatpush1.bf16.msra.mxu0 %v2337
    %3564 = vmatprep.subr.bf16.mxu0 %v2346
    %3565 = vmatpush1.bf16.msra.mxu0 %v2345
    %3566 = vmatprep.subr.bf16.mxu0 %v2354
    %3567 = vmatpush1.bf16.msra.mxu0 %v2353
    %3568 = vmatprep.subr.bf16.mxu0 %v2362
    %3569 = vmatpush1.bf16.msra.mxu0 %v2361
    %3570 = vmatprep.subr.bf16.mxu0 %v2370
    %3571 = vmatpush1.bf16.msra.mxu0 %v2369
    %3572 = vmatprep.subr.bf16.mxu0 %v2378
    %3573 = vmatpush1.bf16.msra.mxu0 %v2377
    %3574 = vmatprep.subr.bf16.mxu0 %v2386
    %3575 = vmatpush1.bf16.msra.mxu0 %v2385
    %3576 = vmatprep.subr.bf16.mxu0 %v2394
    %3577 = vmatpush1.bf16.msra.mxu0 %v2393
    %3578 = vmatprep.subr.bf16.mxu0 %v2402
    %3579 = vmatpush1.bf16.msra.mxu0 %v2401
    %3580 = vmatprep.subr.bf16.mxu0 %v2410
    %3581 = vmatpush1.bf16.msra.mxu0 %v2409
    %3582 = vmatprep.mubr.bf16.mxu0 %v608
    %3583 = vmatmul.mubr.bf16.gmra.mrb[0].mxu0 %v607
    %v3584 = vpop.f32.mrb[0].mxu0
    %v3585 = vadd.f32 %v3544, %v3584
    %v3586 = vpop.f32.mrb[0].mxu0
    %v3587 = vadd.f32 %v3546, %v3586
    %v3588 = vpop.f32.mrb[0].mxu0
    %v3589 = vpop.f32.mrb[0].mxu0
    %3590 = vdwg.mxu0
    %3591 = vmatprep.subr.bf16.mxu0 %v2418
    %3592 = vmatpush1.bf16.msra.mxu0 %v2417
    %3593 = vmatprep.subr.bf16.mxu0 %v2426
    %3594 = vmatpush1.bf16.msra.mxu0 %v2425
    %3595 = vmatprep.subr.bf16.mxu0 %v2434
    %3596 = vmatpush1.bf16.msra.mxu0 %v2433
    %3597 = vmatprep.subr.bf16.mxu0 %v2442
    %3598 = vmatpush1.bf16.msra.mxu0 %v2441
    %3599 = vmatprep.subr.bf16.mxu0 %v2450
    %3600 = vmatpush1.bf16.msra.mxu0 %v2449
    %3601 = vmatprep.subr.bf16.mxu0 %v2458
    %3602 = vmatpush1.bf16.msra.mxu0 %v2457
    %3603 = vmatprep.subr.bf16.mxu0 %v2466
    %3604 = vmatpush1.bf16.msra.mxu0 %v2465
    %3605 = vmatprep.subr.bf16.mxu0 %v2474
    %3606 = vmatpush1.bf16.msra.mxu0 %v2473
    %3607 = vmatprep.subr.bf16.mxu0 %v2482
    %3608 = vmatpush1.bf16.msra.mxu0 %v2481
    %3609 = vmatprep.subr.bf16.mxu0 %v2490
    %3610 = vmatpush1.bf16.msra.mxu0 %v2489
    %3611 = vmatprep.subr.bf16.mxu0 %v2498
    %3612 = vmatpush1.bf16.msra.mxu0 %v2497
    %3613 = vmatprep.subr.bf16.mxu0 %v2506
    %3614 = vmatpush1.bf16.msra.mxu0 %v2505
    %3615 = vmatprep.subr.bf16.mxu0 %v2514
    %3616 = vmatpush1.bf16.msra.mxu0 %v2513
    %3617 = vmatprep.subr.bf16.mxu0 %v2522
    %3618 = vmatpush1.bf16.msra.mxu0 %v2521
    %3619 = vmatprep.subr.bf16.mxu0 %v2530
    %3620 = vmatpush1.bf16.msra.mxu0 %v2529
    %3621 = vmatprep.subr.bf16.mxu0 %v2538
    %3622 = vmatpush1.bf16.msra.mxu0 %v2537
    %3623 = vmatprep.mubr.bf16.mxu0 %v610
    %3624 = vmatmul.mubr.bf16.gmra.mrb[0].mxu0 %v609
    %v3625 = vpop.f32.mrb[0].mxu0
    %v3626 = vadd.f32 %v3585, %v3625
    %v3627 = vpop.f32.mrb[0].mxu0
    %v3628 = vadd.f32 %v3587, %v3627
    %v3629 = vpop.f32.mrb[0].mxu0
    %v3630 = vpop.f32.mrb[0].mxu0
    %3631 = vdwg.mxu0
    %3632 = vmatprep.subr.bf16.mxu0 %v2546
    %3633 = vmatpush1.bf16.msra.mxu0 %v2545
    %3634 = vmatprep.subr.bf16.mxu0 %v2554
    %3635 = vmatpush1.bf16.msra.mxu0 %v2553
    %3636 = vmatprep.subr.bf16.mxu0 %v2562
    %3637 = vmatpush1.bf16.msra.mxu0 %v2561
    %3638 = vmatprep.subr.bf16.mxu0 %v2570
    %3639 = vmatpush1.bf16.msra.mxu0 %v2569
    %3640 = vmatprep.subr.bf16.mxu0 %v2578
    %3641 = vmatpush1.bf16.msra.mxu0 %v2577
    %3642 = vmatprep.subr.bf16.mxu0 %v2586
    %3643 = vmatpush1.bf16.msra.mxu0 %v2585
    %3644 = vmatprep.subr.bf16.mxu0 %v2594
    %3645 = vmatpush1.bf16.msra.mxu0 %v2593
    %3646 = vmatprep.subr.bf16.mxu0 %v2602
    %3647 = vmatpush1.bf16.msra.mxu0 %v2601
    %3648 = vmatprep.subr.bf16.mxu0 %v2610
    %3649 = vmatpush1.bf16.msra.mxu0 %v2609
    %3650 = vmatprep.subr.bf16.mxu0 %v2618
    %3651 = vmatpush1.bf16.msra.mxu0 %v2617
    %3652 = vmatprep.subr.bf16.mxu0 %v2626
    %3653 = vmatpush1.bf16.msra.mxu0 %v2625
    %3654 = vmatprep.subr.bf16.mxu0 %v2634
    %3655 = vmatpush1.bf16.msra.mxu0 %v2633
    %3656 = vmatprep.subr.bf16.mxu0 %v2642
    %3657 = vmatpush1.bf16.msra.mxu0 %v2641
    %3658 = vmatprep.subr.bf16.mxu0 %v2650
    %3659 = vmatpush1.bf16.msra.mxu0 %v2649
    %3660 = vmatprep.subr.bf16.mxu0 %v2658
    %3661 = vmatpush1.bf16.msra.mxu0 %v2657
    %3662 = vmatprep.subr.bf16.mxu0 %v2666
    %3663 = vmatpush1.bf16.msra.mxu0 %v2665
    %3664 = vmatprep.mubr.bf16.mxu0 %v612
    %3665 = vmatmul.mubr.bf16.gmra.mrb[0].mxu0 %v611
    %v3666 = vpop.f32.mrb[0].mxu0
    %v3667 = vadd.f32 %v3626, %v3666
    %v3668 = vpop.f32.mrb[0].mxu0
    %v3669 = vadd.f32 %v3628, %v3668
    %v3670 = vpop.f32.mrb[0].mxu0
    %v3671 = vpop.f32.mrb[0].mxu0
    %3672 = vdwg.mxu0
    %3673 = vmatprep.subr.bf16.mxu0 %v2164
    %3674 = vmatpush1.bf16.msra.mxu0 %v2163
    %3675 = vmatprep.subr.bf16.mxu0 %v2172
    %3676 = vmatpush1.bf16.msra.mxu0 %v2171
    %3677 = vmatprep.subr.bf16.mxu0 %v2180
    %3678 = vmatpush1.bf16.msra.mxu0 %v2179
    %3679 = vmatprep.subr.bf16.mxu0 %v2188
    %3680 = vmatpush1.bf16.msra.mxu0 %v2187
    %3681 = vmatprep.subr.bf16.mxu0 %v2196
    %3682 = vmatpush1.bf16.msra.mxu0 %v2195
    %3683 = vmatprep.subr.bf16.mxu0 %v2204
    %3684 = vmatpush1.bf16.msra.mxu0 %v2203
    %3685 = vmatprep.subr.bf16.mxu0 %v2212
    %3686 = vmatpush1.bf16.msra.mxu0 %v2211
    %3687 = vmatprep.subr.bf16.mxu0 %v2220
    %3688 = vmatpush1.bf16.msra.mxu0 %v2219
    %3689 = vmatprep.subr.bf16.mxu0 %v2228
    %3690 = vmatpush1.bf16.msra.mxu0 %v2227
    %3691 = vmatprep.subr.bf16.mxu0 %v2236
    %3692 = vmatpush1.bf16.msra.mxu0 %v2235
    %3693 = vmatprep.subr.bf16.mxu0 %v2244
    %3694 = vmatpush1.bf16.msra.mxu0 %v2243
    %3695 = vmatprep.subr.bf16.mxu0 %v2252
    %3696 = vmatpush1.bf16.msra.mxu0 %v2251
    %3697 = vmatprep.subr.bf16.mxu0 %v2260
    %3698 = vmatpush1.bf16.msra.mxu0 %v2259
    %3699 = vmatprep.subr.bf16.mxu0 %v2268
    %3700 = vmatpush1.bf16.msra.mxu0 %v2267
    %3701 = vmatprep.subr.bf16.mxu0 %v2276
    %3702 = vmatpush1.bf16.msra.mxu0 %v2275
    %3703 = vmatprep.subr.bf16.mxu0 %v2284
    %3704 = vmatpush1.bf16.msra.mxu0 %v2283
    %3705 = vmatprep.mubr.bf16.mxu0 %v606
    %3706 = vmatmul.mubr.bf16.gmra.mrb[0].mxu0 %v605
    %v3707 = vpop.f32.mrb[0].mxu0
    %v3708 = vadd.f32 0.0, %v3707
    %v3709 = vpop.f32.mrb[0].mxu0
    %v3710 = vadd.f32 0.0, %v3709
    %v3711 = vpop.f32.mrb[0].mxu0
    %v3712 = vpop.f32.mrb[0].mxu0
    %3713 = vdwg.mxu0
    %3714 = vmatprep.subr.bf16.mxu0 %v2292
    %3715 = vmatpush1.bf16.msra.mxu0 %v2291
    %3716 = vmatprep.subr.bf16.mxu0 %v2300
    %3717 = vmatpush1.bf16.msra.mxu0 %v2299
    %3718 = vmatprep.subr.bf16.mxu0 %v2308
    %3719 = vmatpush1.bf16.msra.mxu0 %v2307
    %3720 = vmatprep.subr.bf16.mxu0 %v2316
    %3721 = vmatpush1.bf16.msra.mxu0 %v2315
    %3722 = vmatprep.subr.bf16.mxu0 %v2324
    %3723 = vmatpush1.bf16.msra.mxu0 %v2323
    %3724 = vmatprep.subr.bf16.mxu0 %v2332
    %3725 = vmatpush1.bf16.msra.mxu0 %v2331
    %3726 = vmatprep.subr.bf16.mxu0 %v2340
    %3727 = vmatpush1.bf16.msra.mxu0 %v2339
    %3728 = vmatprep.subr.bf16.mxu0 %v2348
    %3729 = vmatpush1.bf16.msra.mxu0 %v2347
    %3730 = vmatprep.subr.bf16.mxu0 %v2356
    %3731 = vmatpush1.bf16.msra.mxu0 %v2355
    %3732 = vmatprep.subr.bf16.mxu0 %v2364
    %3733 = vmatpush1.bf16.msra.mxu0 %v2363
    %3734 = vmatprep.subr.bf16.mxu0 %v2372
    %3735 = vmatpush1.bf16.msra.mxu0 %v2371
    %3736 = vmatprep.subr.bf16.mxu0 %v2380
    %3737 = vmatpush1.bf16.msra.mxu0 %v2379
    %3738 = vmatprep.subr.bf16.mxu0 %v2388
    %3739 = vmatpush1.bf16.msra.mxu0 %v2387
    %3740 = vmatprep.subr.bf16.mxu0 %v2396
    %3741 = vmatpush1.bf16.msra.mxu0 %v2395
    %3742 = vmatprep.subr.bf16.mxu0 %v2404
    %3743 = vmatpush1.bf16.msra.mxu0 %v2403
    %3744 = vmatprep.subr.bf16.mxu0 %v2412
    %3745 = vmatpush1.bf16.msra.mxu0 %v2411
    %3746 = vmatprep.mubr.bf16.mxu0 %v608
    %3747 = vmatmul.mubr.bf16.gmra.mrb[0].mxu0 %v607
    %v3748 = vpop.f32.mrb[0].mxu0
    %v3749 = vadd.f32 %v3708, %v3748
    %v3750 = vpop.f32.mrb[0].mxu0
    %v3751 = vadd.f32 %v3710, %v3750
    %v3752 = vpop.f32.mrb[0].mxu0
    %v3753 = vpop.f32.mrb[0].mxu0
    %3754 = vdwg.mxu0
    %3755 = vmatprep.subr.bf16.mxu0 %v2420
    %3756 = vmatpush1.bf16.msra.mxu0 %v2419
    %3757 = vmatprep.subr.bf16.mxu0 %v2428
    %3758 = vmatpush1.bf16.msra.mxu0 %v2427
    %3759 = vmatprep.subr.bf16.mxu0 %v2436
    %3760 = vmatpush1.bf16.msra.mxu0 %v2435
    %3761 = vmatprep.subr.bf16.mxu0 %v2444
    %3762 = vmatpush1.bf16.msra.mxu0 %v2443
    %3763 = vmatprep.subr.bf16.mxu0 %v2452
    %3764 = vmatpush1.bf16.msra.mxu0 %v2451
    %3765 = vmatprep.subr.bf16.mxu0 %v2460
    %3766 = vmatpush1.bf16.msra.mxu0 %v2459
    %3767 = vmatprep.subr.bf16.mxu0 %v2468
    %3768 = vmatpush1.bf16.msra.mxu0 %v2467
    %3769 = vmatprep.subr.bf16.mxu0 %v2476
    %3770 = vmatpush1.bf16.msra.mxu0 %v2475
    %3771 = vmatprep.subr.bf16.mxu0 %v2484
    %3772 = vmatpush1.bf16.msra.mxu0 %v2483
    %3773 = vmatprep.subr.bf16.mxu0 %v2492
    %3774 = vmatpush1.bf16.msra.mxu0 %v2491
    %3775 = vmatprep.subr.bf16.mxu0 %v2500
    %3776 = vmatpush1.bf16.msra.mxu0 %v2499
    %3777 = vmatprep.subr.bf16.mxu0 %v2508
    %3778 = vmatpush1.bf16.msra.mxu0 %v2507
    %3779 = vmatprep.subr.bf16.mxu0 %v2516
    %3780 = vmatpush1.bf16.msra.mxu0 %v2515
    %3781 = vmatprep.subr.bf16.mxu0 %v2524
    %3782 = vmatpush1.bf16.msra.mxu0 %v2523
    %3783 = vmatprep.subr.bf16.mxu0 %v2532
    %3784 = vmatpush1.bf16.msra.mxu0 %v2531
    %3785 = vmatprep.subr.bf16.mxu0 %v2540
    %3786 = vmatpush1.bf16.msra.mxu0 %v2539
    %3787 = vmatprep.mubr.bf16.mxu0 %v610
    %3788 = vmatmul.mubr.bf16.gmra.mrb[0].mxu0 %v609
    %v3789 = vpop.f32.mrb[0].mxu0
    %v3790 = vadd.f32 %v3749, %v3789
    %v3791 = vpop.f32.mrb[0].mxu0
    %v3792 = vadd.f32 %v3751, %v3791
    %v3793 = vpop.f32.mrb[0].mxu0
    %v3794 = vpop.f32.mrb[0].mxu0
    %3795 = vdwg.mxu0
    %3796 = vmatprep.subr.bf16.mxu0 %v2548
    %3797 = vmatpush1.bf16.msra.mxu0 %v2547
    %3798 = vmatprep.subr.bf16.mxu0 %v2556
    %3799 = vmatpush1.bf16.msra.mxu0 %v2555
    %3800 = vmatprep.subr.bf16.mxu0 %v2564
    %3801 = vmatpush1.bf16.msra.mxu0 %v2563
    %3802 = vmatprep.subr.bf16.mxu0 %v2572
    %3803 = vmatpush1.bf16.msra.mxu0 %v2571
    %3804 = vmatprep.subr.bf16.mxu0 %v2580
    %3805 = vmatpush1.bf16.msra.mxu0 %v2579
    %3806 = vmatprep.subr.bf16.mxu0 %v2588
    %3807 = vmatpush1.bf16.msra.mxu0 %v2587
    %3808 = vmatprep.subr.bf16.mxu0 %v2596
    %3809 = vmatpush1.bf16.msra.mxu0 %v2595
    %3810 = vmatprep.subr.bf16.mxu0 %v2604
    %3811 = vmatpush1.bf16.msra.mxu0 %v2603
    %3812 = vmatprep.subr.bf16.mxu0 %v2612
    %3813 = vmatpush1.bf16.msra.mxu0 %v2611
    %3814 = vmatprep.subr.bf16.mxu0 %v2620
    %3815 = vmatpush1.bf16.msra.mxu0 %v2619
    %3816 = vmatprep.subr.bf16.mxu0 %v2628
    %3817 = vmatpush1.bf16.msra.mxu0 %v2627
    %3818 = vmatprep.subr.bf16.mxu0 %v2636
    %3819 = vmatpush1.bf16.msra.mxu0 %v2635
    %3820 = vmatprep.subr.bf16.mxu0 %v2644
    %3821 = vmatpush1.bf16.msra.mxu0 %v2643
    %3822 = vmatprep.subr.bf16.mxu0 %v2652
    %3823 = vmatpush1.bf16.msra.mxu0 %v2651
    %3824 = vmatprep.subr.bf16.mxu0 %v2660
    %3825 = vmatpush1.bf16.msra.mxu0 %v2659
    %3826 = vmatprep.subr.bf16.mxu0 %v2668
    %3827 = vmatpush1.bf16.msra.mxu0 %v2667
    %3828 = vmatprep.mubr.bf16.mxu0 %v612
    %3829 = vmatmul.mubr.bf16.gmra.mrb[0].mxu0 %v611
    %v3830 = vpop.f32.mrb[0].mxu0
    %v3831 = vadd.f32 %v3790, %v3830
    %v3832 = vpop.f32.mrb[0].mxu0
    %v3833 = vadd.f32 %v3792, %v3832
    %v3834 = vpop.f32.mrb[0].mxu0
    %v3835 = vpop.f32.mrb[0].mxu0
    %3836 = vdwg.mxu0
    %v3837 = vadd.f32 %v73, %v3339
    %v3838 = vadd.f32 %v74, %v3341
    %v3839 = vadd.f32 %v75, %v3503
    %v3840 = vadd.f32 %v76, %v3505
    %v3841 = vadd.f32 %v77, %v3667
    %v3842 = vadd.f32 %v78, %v3669
    %v3843 = vadd.f32 %v79, %v3831
    %v3844 = vadd.f32 %v80, %v3833
    %3845 = vst [vmem:[#allocation2] sm:$0xff] %v3837
    %3846 = vst [vmem:[#allocation2 + $0x8] sm:$0xff] %v3838
    %3847 = vst [vmem:[#allocation2 + $0x10] sm:$0xff] %v3839
    %3848 = vst [vmem:[#allocation2 + $0x18] sm:$0xff] %v3840
    %3849 = vst [vmem:[#allocation2 + $0x20] sm:$0xff] %v3841
    %3850 = vst [vmem:[#allocation2 + $0x28] sm:$0xff] %v3842
    %3851 = vst [vmem:[#allocation2 + $0x30] sm:$0xff] %v3843
    %3852 = vst [vmem:[#allocation2 + $0x38] sm:$0xff] %v3844
    // Predicated region
    $region38: #{nima_forward.1} parent=1 // pred_check
      %p3853 = pneg %p57
    $region39: #{nima_forward.1} parent=1 // pred_check_branch
      %3855 = sbr.rel (%p3853) target = $region41
    $region40: #{nima_forward.1} parent=1 // pred_region
      %v3856 = vld [vmem:[#allocation2] sm:$0xff]
      %v3857 = vld [vmem:[#allocation2 + $0x8] sm:$0xff]
      %v3858 = vld [vmem:[#allocation2 + $0x10] sm:$0xff]
      %v3859 = vld [vmem:[#allocation2 + $0x18] sm:$0xff]
      %v3860 = vld [vmem:[#allocation2 + $0x20] sm:$0xff]
      %v3861 = vld [vmem:[#allocation2 + $0x28] sm:$0xff]
      %v3862 = vld [vmem:[#allocation2 + $0x30] sm:$0xff]
      %v3863 = vld [vmem:[#allocation2 + $0x38] sm:$0xff]
      %v3864 = vld [vmem:[#allocation5] sm:$0xff]
      %v3866 = vlaneseq
      %v3867 = vshrl.u32 %v3866, 7
      %v3868 = vsub.s32 0, %v3867
      %v3869 = vrot.slane %v3864, %v3868
      %v3870 = vlaneseq
      %v3871 = vshrl.u32 %v3870, 7
      %v3872 = vsub.s32 1, %v3871
      %v3873 = vrot.slane %v3864, %v3872
      %v3874 = vlaneseq
      %v3875 = vshrl.u32 %v3874, 7
      %v3876 = vsub.s32 2, %v3875
      %v3877 = vrot.slane %v3864, %v3876
      %v3878 = vlaneseq
      %v3879 = vshrl.u32 %v3878, 7
      %v3880 = vsub.s32 3, %v3879
      %v3881 = vrot.slane %v3864, %v3880
      %v3882 = vlaneseq
      %v3883 = vshrl.u32 %v3882, 7
      %v3884 = vsub.s32 4, %v3883
      %v3885 = vrot.slane %v3864, %v3884
      %v3886 = vlaneseq
      %v3887 = vshrl.u32 %v3886, 7
      %v3888 = vsub.s32 5, %v3887
      %v3889 = vrot.slane %v3864, %v3888
      %v3890 = vlaneseq
      %v3891 = vshrl.u32 %v3890, 7
      %v3892 = vsub.s32 6, %v3891
      %v3893 = vrot.slane %v3864, %v3892
      %v3894 = vlaneseq
      %v3895 = vshrl.u32 %v3894, 7
      %v3896 = vsub.s32 7, %v3895
      %v3897 = vrot.slane %v3864, %v3896
      %v3906 = vadd.f32 %v3856, %v3869
      %v3907 = vadd.f32 %v3857, %v3873
      %v3908 = vadd.f32 %v3858, %v3877
      %v3909 = vadd.f32 %v3859, %v3881
      %v3910 = vadd.f32 %v3860, %v3885
      %v3911 = vadd.f32 %v3861, %v3889
      %v3912 = vadd.f32 %v3862, %v3893
      %v3913 = vadd.f32 %v3863, %v3897
      %v3914 = vld [vmem:[%s3] sm:$0xff]
      %v3915 = vld [vmem:[%s3 + $0x8] sm:$0xff]
      %v3916 = vld [vmem:[%s3 + $0x10] sm:$0xff]
      %v3917 = vld [vmem:[%s3 + $0x18] sm:$0xff]
      %v3918 = vld [vmem:[%s3 + $0x20] sm:$0xff]
      %v3919 = vld [vmem:[%s3 + $0x28] sm:$0xff]
      %v3920 = vld [vmem:[%s3 + $0x30] sm:$0xff]
      %v3921 = vld [vmem:[%s3 + $0x38] sm:$0xff]
      %v3922 = vld [vmem:[%s3 + $0x40] sm:$0xff]
      %v3923 = vld [vmem:[%s3 + $0x48] sm:$0xff]
      %v3924 = vld [vmem:[%s3 + $0x50] sm:$0xff]
      %v3925 = vld [vmem:[%s3 + $0x58] sm:$0xff]
      %v3926 = vld [vmem:[%s3 + $0x60] sm:$0xff]
      %v3927 = vld [vmem:[%s3 + $0x68] sm:$0xff]
      %v3928 = vld [vmem:[%s3 + $0x70] sm:$0xff]
      %v3929 = vld [vmem:[%s3 + $0x78] sm:$0xff]
      %v3930 = vld [vmem:[%s3 + $0x80] sm:$0xff]
      %v3931 = vld [vmem:[%s3 + $0x88] sm:$0xff]
      %v3932 = vld [vmem:[%s3 + $0x90] sm:$0xff]
      %v3933 = vld [vmem:[%s3 + $0x98] sm:$0xff]
      %v3934 = vld [vmem:[%s3 + $0xa0] sm:$0xff]
      %v3935 = vld [vmem:[%s3 + $0xa8] sm:$0xff]
      %v3936 = vld [vmem:[%s3 + $0xb0] sm:$0xff]
      %v3937 = vld [vmem:[%s3 + $0xb8] sm:$0xff]
      %v3938 = vld [vmem:[%s3 + $0xc0] sm:$0xff]
      %v3939 = vld [vmem:[%s3 + $0xc8] sm:$0xff]
      %v3940 = vld [vmem:[%s3 + $0xd0] sm:$0xff]
      %v3941 = vld [vmem:[%s3 + $0xd8] sm:$0xff]
      %v3942 = vld [vmem:[%s3 + $0xe0] sm:$0xff]
      %v3943 = vld [vmem:[%s3 + $0xe8] sm:$0xff]
      %v3944 = vld [vmem:[%s3 + $0xf0] sm:$0xff]
      %v3945 = vld [vmem:[%s3 + $0xf8] sm:$0xff]
      %v3946 = vld [vmem:[%s3 + $0x100] sm:$0xff]
      %v3947 = vld [vmem:[%s3 + $0x108] sm:$0xff]
      %v3948 = vld [vmem:[%s3 + $0x110] sm:$0xff]
      %v3949 = vld [vmem:[%s3 + $0x118] sm:$0xff]
      %v3950 = vld [vmem:[%s3 + $0x120] sm:$0xff]
      %v3951 = vld [vmem:[%s3 + $0x128] sm:$0xff]
      %v3952 = vld [vmem:[%s3 + $0x130] sm:$0xff]
      %v3953 = vld [vmem:[%s3 + $0x138] sm:$0xff]
      %v3954 = vld [vmem:[%s3 + $0x140] sm:$0xff]
      %v3955 = vld [vmem:[%s3 + $0x148] sm:$0xff]
      %v3956 = vld [vmem:[%s3 + $0x150] sm:$0xff]
      %v3957 = vld [vmem:[%s3 + $0x158] sm:$0xff]
      %v3958 = vld [vmem:[%s3 + $0x160] sm:$0xff]
      %v3959 = vld [vmem:[%s3 + $0x168] sm:$0xff]
      %v3960 = vld [vmem:[%s3 + $0x170] sm:$0xff]
      %v3961 = vld [vmem:[%s3 + $0x178] sm:$0xff]
      %v3962 = vld [vmem:[%s3 + $0x180] sm:$0xff]
      %v3963 = vld [vmem:[%s3 + $0x188] sm:$0xff]
      %v3964 = vld [vmem:[%s3 + $0x190] sm:$0xff]
      %v3965 = vld [vmem:[%s3 + $0x198] sm:$0xff]
      %v3966 = vld [vmem:[%s3 + $0x1a0] sm:$0xff]
      %v3967 = vld [vmem:[%s3 + $0x1a8] sm:$0xff]
      %v3968 = vld [vmem:[%s3 + $0x1b0] sm:$0xff]
      %v3969 = vld [vmem:[%s3 + $0x1b8] sm:$0xff]
      %v3970 = vld [vmem:[%s3 + $0x1c0] sm:$0xff]
      %v3971 = vld [vmem:[%s3 + $0x1c8] sm:$0xff]
      %v3972 = vld [vmem:[%s3 + $0x1d0] sm:$0xff]
      %v3973 = vld [vmem:[%s3 + $0x1d8] sm:$0xff]
      %v3974 = vld [vmem:[%s3 + $0x1e0] sm:$0xff]
      %v3975 = vld [vmem:[%s3 + $0x1e8] sm:$0xff]
      %v3976 = vld [vmem:[%s3 + $0x1f0] sm:$0xff]
      %v3977 = vld [vmem:[%s3 + $0x1f8] sm:$0xff]
      %v3978 = vld [vmem:[%s3 + $0x200] sm:$0xff]
      %v3979 = vld [vmem:[%s3 + $0x208] sm:$0xff]
      %v3980 = vld [vmem:[%s3 + $0x210] sm:$0xff]
      %v3981 = vld [vmem:[%s3 + $0x218] sm:$0xff]
      %v3982 = vld [vmem:[%s3 + $0x220] sm:$0xff]
      %v3983 = vld [vmem:[%s3 + $0x228] sm:$0xff]
      %v3984 = vld [vmem:[%s3 + $0x230] sm:$0xff]
      %v3985 = vld [vmem:[%s3 + $0x238] sm:$0xff]
      %v3986 = vld [vmem:[%s3 + $0x240] sm:$0xff]
      %v3987 = vld [vmem:[%s3 + $0x248] sm:$0xff]
      %v3988 = vld [vmem:[%s3 + $0x250] sm:$0xff]
      %v3989 = vld [vmem:[%s3 + $0x258] sm:$0xff]
      %v3990 = vld [vmem:[%s3 + $0x260] sm:$0xff]
      %v3991 = vld [vmem:[%s3 + $0x268] sm:$0xff]
      %v3992 = vld [vmem:[%s3 + $0x270] sm:$0xff]
      %v3993 = vld [vmem:[%s3 + $0x278] sm:$0xff]
      %v3994 = vld [vmem:[%s3 + $0x280] sm:$0xff]
      %v3995 = vld [vmem:[%s3 + $0x288] sm:$0xff]
      %v3996 = vld [vmem:[%s3 + $0x290] sm:$0xff]
      %v3997 = vld [vmem:[%s3 + $0x298] sm:$0xff]
      %v3998 = vld [vmem:[%s3 + $0x2a0] sm:$0xff]
      %v3999 = vld [vmem:[%s3 + $0x2a8] sm:$0xff]
      %v4000 = vld [vmem:[%s3 + $0x2b0] sm:$0xff]
      %v4001 = vld [vmem:[%s3 + $0x2b8] sm:$0xff]
      %v4002 = vld [vmem:[%s3 + $0x2c0] sm:$0xff]
      %v4003 = vld [vmem:[%s3 + $0x2c8] sm:$0xff]
      %v4004 = vld [vmem:[%s3 + $0x2d0] sm:$0xff]
      %v4005 = vld [vmem:[%s3 + $0x2d8] sm:$0xff]
      %v4006 = vld [vmem:[%s3 + $0x2e0] sm:$0xff]
      %v4007 = vld [vmem:[%s3 + $0x2e8] sm:$0xff]
      %v4008 = vld [vmem:[%s3 + $0x2f0] sm:$0xff]
      %v4009 = vld [vmem:[%s3 + $0x2f8] sm:$0xff]
      %v4010 = vld [vmem:[%s3 + $0x300] sm:$0xff]
      %v4011 = vld [vmem:[%s3 + $0x308] sm:$0xff]
      %v4012 = vld [vmem:[%s3 + $0x310] sm:$0xff]
      %v4013 = vld [vmem:[%s3 + $0x318] sm:$0xff]
      %v4014 = vld [vmem:[%s3 + $0x320] sm:$0xff]
      %v4015 = vld [vmem:[%s3 + $0x328] sm:$0xff]
      %v4016 = vld [vmem:[%s3 + $0x330] sm:$0xff]
      %v4017 = vld [vmem:[%s3 + $0x338] sm:$0xff]
      %v4018 = vld [vmem:[%s3 + $0x340] sm:$0xff]
      %v4019 = vld [vmem:[%s3 + $0x348] sm:$0xff]
      %v4020 = vld [vmem:[%s3 + $0x350] sm:$0xff]
      %v4021 = vld [vmem:[%s3 + $0x358] sm:$0xff]
      %v4022 = vld [vmem:[%s3 + $0x360] sm:$0xff]
      %v4023 = vld [vmem:[%s3 + $0x368] sm:$0xff]
      %v4024 = vld [vmem:[%s3 + $0x370] sm:$0xff]
      %v4025 = vld [vmem:[%s3 + $0x378] sm:$0xff]
      %v4026 = vld [vmem:[%s3 + $0x380] sm:$0xff]
      %v4027 = vld [vmem:[%s3 + $0x388] sm:$0xff]
      %v4028 = vld [vmem:[%s3 + $0x390] sm:$0xff]
      %v4029 = vld [vmem:[%s3 + $0x398] sm:$0xff]
      %v4030 = vld [vmem:[%s3 + $0x3a0] sm:$0xff]
      %v4031 = vld [vmem:[%s3 + $0x3a8] sm:$0xff]
      %v4032 = vld [vmem:[%s3 + $0x3b0] sm:$0xff]
      %v4033 = vld [vmem:[%s3 + $0x3b8] sm:$0xff]
      %v4034 = vld [vmem:[%s3 + $0x3c0] sm:$0xff]
      %v4035 = vld [vmem:[%s3 + $0x3c8] sm:$0xff]
      %v4036 = vld [vmem:[%s3 + $0x3d0] sm:$0xff]
      %v4037 = vld [vmem:[%s3 + $0x3d8] sm:$0xff]
      %v4038 = vld [vmem:[%s3 + $0x3e0] sm:$0xff]
      %v4039 = vld [vmem:[%s3 + $0x3e8] sm:$0xff]
      %v4040 = vld [vmem:[%s3 + $0x3f0] sm:$0xff]
      %v4041 = vld [vmem:[%s3 + $0x3f8] sm:$0xff]
      %v4042 = vld [vmem:[#allocation7] sm:$0x1]
      %v4044 = vlaneseq
      %v4045 = vshrl.u32 %v4044, 7
      %v4046 = vsub.s32 0, %v4045
      %v4047 = vrot.slane %v4042, %v4046
      %4049 = vmatprep.subr.mxu0 0.0
      %4050 = vmatpush1.msra.mxu0 %v3914
      %4051 = vmatprep.subr.mxu0 0.0
      %4052 = vmatpush1.msra.mxu0 %v3915
      %4053 = vmatprep.subr.mxu0 0.0
      %4054 = vmatpush1.msra.mxu0 %v3916
      %4055 = vmatprep.subr.mxu0 0.0
      %4056 = vmatpush1.msra.mxu0 %v3917
      %4057 = vmatprep.subr.mxu0 0.0
      %4058 = vmatpush1.msra.mxu0 %v3918
      %4059 = vmatprep.subr.mxu0 0.0
      %4060 = vmatpush1.msra.mxu0 %v3919
      %4061 = vmatprep.subr.mxu0 0.0
      %4062 = vmatpush1.msra.mxu0 %v3920
      %4063 = vmatprep.subr.mxu0 0.0
      %4064 = vmatpush1.msra.mxu0 %v3921
      %4065 = vmatprep.subr.mxu0 0.0
      %4066 = vmatpush1.msra.mxu0 %v3922
      %4067 = vmatprep.subr.mxu0 0.0
      %4068 = vmatpush1.msra.mxu0 %v3923
      %4069 = vmatprep.subr.mxu0 0.0
      %4070 = vmatpush1.msra.mxu0 %v3924
      %4071 = vmatprep.subr.mxu0 0.0
      %4072 = vmatpush1.msra.mxu0 %v3925
      %4073 = vmatprep.subr.mxu0 0.0
      %4074 = vmatpush1.msra.mxu0 %v3926
      %4075 = vmatprep.subr.mxu0 0.0
      %4076 = vmatpush1.msra.mxu0 %v3927
      %4077 = vmatprep.subr.mxu0 0.0
      %4078 = vmatpush1.msra.mxu0 %v3928
      %4079 = vmatprep.subr.mxu0 0.0
      %4080 = vmatpush1.msra.mxu0 %v3929
      %4081 = vmatprep.subr.mxu0 0.0
      %4082 = vmatpush1.msra.mxu0 %v3930
      %4083 = vmatprep.subr.mxu0 0.0
      %4084 = vmatpush1.msra.mxu0 %v3931
      %4085 = vmatprep.subr.mxu0 0.0
      %4086 = vmatpush1.msra.mxu0 %v3932
      %4087 = vmatprep.subr.mxu0 0.0
      %4088 = vmatpush1.msra.mxu0 %v3933
      %4089 = vmatprep.subr.mxu0 0.0
      %4090 = vmatpush1.msra.mxu0 %v3934
      %4091 = vmatprep.subr.mxu0 0.0
      %4092 = vmatpush1.msra.mxu0 %v3935
      %4093 = vmatprep.subr.mxu0 0.0
      %4094 = vmatpush1.msra.mxu0 %v3936
      %4095 = vmatprep.subr.mxu0 0.0
      %4096 = vmatpush1.msra.mxu0 %v3937
      %4097 = vmatprep.subr.mxu0 0.0
      %4098 = vmatpush1.msra.mxu0 %v3938
      %4099 = vmatprep.subr.mxu0 0.0
      %4100 = vmatpush1.msra.mxu0 %v3939
      %4101 = vmatprep.subr.mxu0 0.0
      %4102 = vmatpush1.msra.mxu0 %v3940
      %4103 = vmatprep.subr.mxu0 0.0
      %4104 = vmatpush1.msra.mxu0 %v3941
      %4105 = vmatprep.subr.mxu0 0.0
      %4106 = vmatpush1.msra.mxu0 %v3942
      %4107 = vmatprep.subr.mxu0 0.0
      %4108 = vmatpush1.msra.mxu0 %v3943
      %4109 = vmatprep.subr.mxu0 0.0
      %4110 = vmatpush1.msra.mxu0 %v3944
      %4111 = vmatprep.subr.mxu0 0.0
      %4112 = vmatpush1.msra.mxu0 %v3945
      %4113 = vmatprep.mubr.f32.mxu0 %v3907
      %4114 = vmatmul.mubr.f32.gmra.mrb[0].mxu0 %v3906
      %v4115 = vpop.f32.mrb[0].mxu0
      %v4116 = vadd.f32 %v4047, %v4115
      %v4117 = vpop.f32.mrb[0].mxu0
      %4118 = vdwg.mxu0
      %4119 = vmatprep.subr.mxu0 0.0
      %4120 = vmatpush1.msra.mxu0 %v3946
      %4121 = vmatprep.subr.mxu0 0.0
      %4122 = vmatpush1.msra.mxu0 %v3947
      %4123 = vmatprep.subr.mxu0 0.0
      %4124 = vmatpush1.msra.mxu0 %v3948
      %4125 = vmatprep.subr.mxu0 0.0
      %4126 = vmatpush1.msra.mxu0 %v3949
      %4127 = vmatprep.subr.mxu0 0.0
      %4128 = vmatpush1.msra.mxu0 %v3950
      %4129 = vmatprep.subr.mxu0 0.0
      %4130 = vmatpush1.msra.mxu0 %v3951
      %4131 = vmatprep.subr.mxu0 0.0
      %4132 = vmatpush1.msra.mxu0 %v3952
      %4133 = vmatprep.subr.mxu0 0.0
      %4134 = vmatpush1.msra.mxu0 %v3953
      %4135 = vmatprep.subr.mxu0 0.0
      %4136 = vmatpush1.msra.mxu0 %v3954
      %4137 = vmatprep.subr.mxu0 0.0
      %4138 = vmatpush1.msra.mxu0 %v3955
      %4139 = vmatprep.subr.mxu0 0.0
      %4140 = vmatpush1.msra.mxu0 %v3956
      %4141 = vmatprep.subr.mxu0 0.0
      %4142 = vmatpush1.msra.mxu0 %v3957
      %4143 = vmatprep.subr.mxu0 0.0
      %4144 = vmatpush1.msra.mxu0 %v3958
      %4145 = vmatprep.subr.mxu0 0.0
      %4146 = vmatpush1.msra.mxu0 %v3959
      %4147 = vmatprep.subr.mxu0 0.0
      %4148 = vmatpush1.msra.mxu0 %v3960
      %4149 = vmatprep.subr.mxu0 0.0
      %4150 = vmatpush1.msra.mxu0 %v3961
      %4151 = vmatprep.subr.mxu0 0.0
      %4152 = vmatpush1.msra.mxu0 %v3962
      %4153 = vmatprep.subr.mxu0 0.0
      %4154 = vmatpush1.msra.mxu0 %v3963
      %4155 = vmatprep.subr.mxu0 0.0
      %4156 = vmatpush1.msra.mxu0 %v3964
      %4157 = vmatprep.subr.mxu0 0.0
      %4158 = vmatpush1.msra.mxu0 %v3965
      %4159 = vmatprep.subr.mxu0 0.0
      %4160 = vmatpush1.msra.mxu0 %v3966
      %4161 = vmatprep.subr.mxu0 0.0
      %4162 = vmatpush1.msra.mxu0 %v3967
      %4163 = vmatprep.subr.mxu0 0.0
      %4164 = vmatpush1.msra.mxu0 %v3968
      %4165 = vmatprep.subr.mxu0 0.0
      %4166 = vmatpush1.msra.mxu0 %v3969
      %4167 = vmatprep.subr.mxu0 0.0
      %4168 = vmatpush1.msra.mxu0 %v3970
      %4169 = vmatprep.subr.mxu0 0.0
      %4170 = vmatpush1.msra.mxu0 %v3971
      %4171 = vmatprep.subr.mxu0 0.0
      %4172 = vmatpush1.msra.mxu0 %v3972
      %4173 = vmatprep.subr.mxu0 0.0
      %4174 = vmatpush1.msra.mxu0 %v3973
      %4175 = vmatprep.subr.mxu0 0.0
      %4176 = vmatpush1.msra.mxu0 %v3974
      %4177 = vmatprep.subr.mxu0 0.0
      %4178 = vmatpush1.msra.mxu0 %v3975
      %4179 = vmatprep.subr.mxu0 0.0
      %4180 = vmatpush1.msra.mxu0 %v3976
      %4181 = vmatprep.subr.mxu0 0.0
      %4182 = vmatpush1.msra.mxu0 %v3977
      %4183 = vmatprep.mubr.f32.mxu0 %v3909
      %4184 = vmatmul.mubr.f32.gmra.mrb[0].mxu0 %v3908
      %v4185 = vpop.f32.mrb[0].mxu0
      %v4186 = vadd.f32 %v4116, %v4185
      %v4187 = vpop.f32.mrb[0].mxu0
      %4188 = vdwg.mxu0
      %4189 = vmatprep.subr.mxu0 0.0
      %4190 = vmatpush1.msra.mxu0 %v3978
      %4191 = vmatprep.subr.mxu0 0.0
      %4192 = vmatpush1.msra.mxu0 %v3979
      %4193 = vmatprep.subr.mxu0 0.0
      %4194 = vmatpush1.msra.mxu0 %v3980
      %4195 = vmatprep.subr.mxu0 0.0
      %4196 = vmatpush1.msra.mxu0 %v3981
      %4197 = vmatprep.subr.mxu0 0.0
      %4198 = vmatpush1.msra.mxu0 %v3982
      %4199 = vmatprep.subr.mxu0 0.0
      %4200 = vmatpush1.msra.mxu0 %v3983
      %4201 = vmatprep.subr.mxu0 0.0
      %4202 = vmatpush1.msra.mxu0 %v3984
      %4203 = vmatprep.subr.mxu0 0.0
      %4204 = vmatpush1.msra.mxu0 %v3985
      %4205 = vmatprep.subr.mxu0 0.0
      %4206 = vmatpush1.msra.mxu0 %v3986
      %4207 = vmatprep.subr.mxu0 0.0
      %4208 = vmatpush1.msra.mxu0 %v3987
      %4209 = vmatprep.subr.mxu0 0.0
      %4210 = vmatpush1.msra.mxu0 %v3988
      %4211 = vmatprep.subr.mxu0 0.0
      %4212 = vmatpush1.msra.mxu0 %v3989
      %4213 = vmatprep.subr.mxu0 0.0
      %4214 = vmatpush1.msra.mxu0 %v3990
      %4215 = vmatprep.subr.mxu0 0.0
      %4216 = vmatpush1.msra.mxu0 %v3991
      %4217 = vmatprep.subr.mxu0 0.0
      %4218 = vmatpush1.msra.mxu0 %v3992
      %4219 = vmatprep.subr.mxu0 0.0
      %4220 = vmatpush1.msra.mxu0 %v3993
      %4221 = vmatprep.subr.mxu0 0.0
      %4222 = vmatpush1.msra.mxu0 %v3994
      %4223 = vmatprep.subr.mxu0 0.0
      %4224 = vmatpush1.msra.mxu0 %v3995
      %4225 = vmatprep.subr.mxu0 0.0
      %4226 = vmatpush1.msra.mxu0 %v3996
      %4227 = vmatprep.subr.mxu0 0.0
      %4228 = vmatpush1.msra.mxu0 %v3997
      %4229 = vmatprep.subr.mxu0 0.0
      %4230 = vmatpush1.msra.mxu0 %v3998
      %4231 = vmatprep.subr.mxu0 0.0
      %4232 = vmatpush1.msra.mxu0 %v3999
      %4233 = vmatprep.subr.mxu0 0.0
      %4234 = vmatpush1.msra.mxu0 %v4000
      %4235 = vmatprep.subr.mxu0 0.0
      %4236 = vmatpush1.msra.mxu0 %v4001
      %4237 = vmatprep.subr.mxu0 0.0
      %4238 = vmatpush1.msra.mxu0 %v4002
      %4239 = vmatprep.subr.mxu0 0.0
      %4240 = vmatpush1.msra.mxu0 %v4003
      %4241 = vmatprep.subr.mxu0 0.0
      %4242 = vmatpush1.msra.mxu0 %v4004
      %4243 = vmatprep.subr.mxu0 0.0
      %4244 = vmatpush1.msra.mxu0 %v4005
      %4245 = vmatprep.subr.mxu0 0.0
      %4246 = vmatpush1.msra.mxu0 %v4006
      %4247 = vmatprep.subr.mxu0 0.0
      %4248 = vmatpush1.msra.mxu0 %v4007
      %4249 = vmatprep.subr.mxu0 0.0
      %4250 = vmatpush1.msra.mxu0 %v4008
      %4251 = vmatprep.subr.mxu0 0.0
      %4252 = vmatpush1.msra.mxu0 %v4009
      %4253 = vmatprep.mubr.f32.mxu0 %v3911
      %4254 = vmatmul.mubr.f32.gmra.mrb[0].mxu0 %v3910
      %v4255 = vpop.f32.mrb[0].mxu0
      %v4256 = vadd.f32 %v4186, %v4255
      %v4257 = vpop.f32.mrb[0].mxu0
      %4258 = vdwg.mxu0
      %4259 = vmatprep.subr.mxu0 0.0
      %4260 = vmatpush1.msra.mxu0 %v4010
      %4261 = vmatprep.subr.mxu0 0.0
      %4262 = vmatpush1.msra.mxu0 %v4011
      %4263 = vmatprep.subr.mxu0 0.0
      %4264 = vmatpush1.msra.mxu0 %v4012
      %4265 = vmatprep.subr.mxu0 0.0
      %4266 = vmatpush1.msra.mxu0 %v4013
      %4267 = vmatprep.subr.mxu0 0.0
      %4268 = vmatpush1.msra.mxu0 %v4014
      %4269 = vmatprep.subr.mxu0 0.0
      %4270 = vmatpush1.msra.mxu0 %v4015
      %4271 = vmatprep.subr.mxu0 0.0
      %4272 = vmatpush1.msra.mxu0 %v4016
      %4273 = vmatprep.subr.mxu0 0.0
      %4274 = vmatpush1.msra.mxu0 %v4017
      %4275 = vmatprep.subr.mxu0 0.0
      %4276 = vmatpush1.msra.mxu0 %v4018
      %4277 = vmatprep.subr.mxu0 0.0
      %4278 = vmatpush1.msra.mxu0 %v4019
      %4279 = vmatprep.subr.mxu0 0.0
      %4280 = vmatpush1.msra.mxu0 %v4020
      %4281 = vmatprep.subr.mxu0 0.0
      %4282 = vmatpush1.msra.mxu0 %v4021
      %4283 = vmatprep.subr.mxu0 0.0
      %4284 = vmatpush1.msra.mxu0 %v4022
      %4285 = vmatprep.subr.mxu0 0.0
      %4286 = vmatpush1.msra.mxu0 %v4023
      %4287 = vmatprep.subr.mxu0 0.0
      %4288 = vmatpush1.msra.mxu0 %v4024
      %4289 = vmatprep.subr.mxu0 0.0
      %4290 = vmatpush1.msra.mxu0 %v4025
      %4291 = vmatprep.subr.mxu0 0.0
      %4292 = vmatpush1.msra.mxu0 %v4026
      %4293 = vmatprep.subr.mxu0 0.0
      %4294 = vmatpush1.msra.mxu0 %v4027
      %4295 = vmatprep.subr.mxu0 0.0
      %4296 = vmatpush1.msra.mxu0 %v4028
      %4297 = vmatprep.subr.mxu0 0.0
      %4298 = vmatpush1.msra.mxu0 %v4029
      %4299 = vmatprep.subr.mxu0 0.0
      %4300 = vmatpush1.msra.mxu0 %v4030
      %4301 = vmatprep.subr.mxu0 0.0
      %4302 = vmatpush1.msra.mxu0 %v4031
      %4303 = vmatprep.subr.mxu0 0.0
      %4304 = vmatpush1.msra.mxu0 %v4032
      %4305 = vmatprep.subr.mxu0 0.0
      %4306 = vmatpush1.msra.mxu0 %v4033
      %4307 = vmatprep.subr.mxu0 0.0
      %4308 = vmatpush1.msra.mxu0 %v4034
      %4309 = vmatprep.subr.mxu0 0.0
      %4310 = vmatpush1.msra.mxu0 %v4035
      %4311 = vmatprep.subr.mxu0 0.0
      %4312 = vmatpush1.msra.mxu0 %v4036
      %4313 = vmatprep.subr.mxu0 0.0
      %4314 = vmatpush1.msra.mxu0 %v4037
      %4315 = vmatprep.subr.mxu0 0.0
      %4316 = vmatpush1.msra.mxu0 %v4038
      %4317 = vmatprep.subr.mxu0 0.0
      %4318 = vmatpush1.msra.mxu0 %v4039
      %4319 = vmatprep.subr.mxu0 0.0
      %4320 = vmatpush1.msra.mxu0 %v4040
      %4321 = vmatprep.subr.mxu0 0.0
      %4322 = vmatpush1.msra.mxu0 %v4041
      %4323 = vmatprep.mubr.f32.mxu0 %v3913
      %4324 = vmatmul.mubr.f32.gmra.mrb[0].mxu0 %v3912
      %v4325 = vpop.f32.mrb[0].mxu0
      %v4326 = vadd.f32 %v4256, %v4325
      %v4327 = vpop.f32.mrb[0].mxu0
      %4328 = vdwg.mxu0
      %vm4329 = vcmask 80896
      %v4330 = vsel %vm4329, %v4326, -inf
      %4331 = vmax.xlane.f32.xlu0 %v4330
      %v4332 = vpop.xlane.xlu0 %4331
      %v4333 = vsub.f32 %v4326, %v4332
      %v4334 = vmul.f32 %v4333, 1.442695
      %v4335 = vpow.pop %v4334
      %v4336 = vsel %vm4329, %v4335, 0.0
      %4337 = vadd.xlane.f32.xlu0 %v4336
      %v4338 = vpop.xlane.xlu0 %4337
      %v4339 = vrcp.pop %v4338
      %v4340 = vmul.f32 %v4335, %v4339
      %4341 = vst.msk [vmem:[%s5] sm:$0xff] %vm4329, %v4340
    $region41: #{nima_forward.1} parent=1 // pred_fallthru
      _
    // Predicated region
    $region42: #{nima_forward.1} parent=1 // pred_check
      _
    $region43: #{nima_forward.1} parent=1 // pred_check_branch
      %4343 = sbr.rel (0) target = $region45
    $region44: #{nima_forward.1} parent=1 // pred_region
      _
    $region45: #{nima_forward.1} parent=1 // pred_fallthru
      _
    // Predicated region
    $region46: #{nima_forward.1} parent=1 // pred_check
      _
    $region47: #{nima_forward.1} parent=1 // pred_check_branch
      %4345 = sbr.rel (0) target = $region49
    $region48: #{nima_forward.1} parent=1 // pred_region
      _
    $region49: #{nima_forward.1} parent=1 // pred_fallthru
      _
    %4346 = vsyncpa [#allocation4], 1
    %4347 = vsyncpa [#allocation6], 1

</llo_original>
